<compile_context>
chip_gen: v7x
topology: tpu7x:2x2x1
jax: 0.10.0
libtpu: 0.0.40
codegen_flags: <defaults>
</compile_context>

<pallas_src>
import functools
import math

import jax
import jax.numpy as jnp
from jax import lax
from jax.experimental import pallas as pl
from jax.experimental.pallas import tpu as pltpu

# ----- model hyper-parameters (the `opt.*` fields the forward pass needs) -----
HIDDEN = 32          # opt.hiddenSize == opt.position_embeddingSize
NHEAD = 2            # opt.nhead
FEEDFORWARD = 4      # opt.feedforward -> dim_feedforward = 128
N_LAYERS = 2         # opt.layer
NORM = True          # opt.norm
N_NODE = 100         # n_node
LEN_MAX = 16         # len_max
SEQ_LEN = 8
BATCH = 2
DFF = HIDDEN * FEEDFORWARD       # 128

assert 4 * HIDDEN == 128, "slab packing assumes 4*H == 128 lanes"
assert DFF <= 128, "ff1 bias / weight rows assume dim_feedforward <= 128"
assert SEQ_LEN & (SEQ_LEN - 1) == 0, "block-diagonal mask uses shifts (L power of 2)"

TSLAB_ROWS = 2 * HIDDEN + 8      # 72
PSLAB_ROWS = 4 * HIDDEN + 8      # 136


# ------------------------------ kernel helpers --------------------------------
def _layer_norm(x, gamma, beta, eps=1e-5):
    mu = jnp.mean(x, axis=-1, keepdims=True)
    var = jnp.mean((x - mu) ** 2, axis=-1, keepdims=True)
    return (x - mu) * lax.rsqrt(var + eps) * gamma + beta


# --------------------------- fused forward kernel ------------------------------
def _fused_forward_kernel(lens_ref,                       # SMEM prefetch (B,)
                          x_ref,                          # (B*L, H)
                          tslab_ref,                      # (NL, 72, 128)
                          wff2_ref,                       # (DFF, NL*H)
                          pslab_ref,                      # (136, 128)
                          o_ref,                          # (out_rows, H)
                          *, batch, seq_len, nhead, n_layers, l2norm, dff):
    B, L = batch, seq_len
    BL = B * L
    H = x_ref.shape[-1]
    dh = H // nhead
    log2l = int(math.log2(L))

    x = x_ref[...].astype(jnp.float32)                               # (BL, H)

    # static block-diagonal mask: row i may attend col j iff same batch element
    rb = jnp.right_shift(lax.broadcasted_iota(jnp.int32, (BL, BL), 0), log2l)
    cb = jnp.right_shift(lax.broadcasted_iota(jnp.int32, (BL, BL), 1), log2l)
    blk = rb == cb

    wff2_all = wff2_ref[...]                                         # (DFF, NL*H)

    # ------------------ TransformerEncoder (post-norm, ReLU FFN) ---------------
    # TODO(synk): dropout layers are evaluated in eval mode (identity).
    h = x
    for l in range(n_layers):
        slab = tslab_ref[l]                                          # (72, 128)
        wqkv_o = slab[0:H, :]            # [Wq*scale | Wk | Wv | Wout], (H, 4H)
        w_ff1 = slab[H:2 * H, 0:dff]                                 # (H, dff)
        vec = slab[2 * H:2 * H + 4, :]                               # (4, 128)
        b_qkvo = vec[0:1, :]             # [bq*scale | bk | bv | b_out]
        ln_row = vec[1:2, :]             # [ln1_w | ln1_b | ln2_w | ln2_b]
        ff1_b = vec[2:3, 0:dff]
        ff2_b = vec[3:4, 0:H]

        # one MXU push produces q, k, v (and an unused 4th column block)
        qkv = jnp.dot(h, wqkv_o, preferred_element_type=jnp.float32) + b_qkvo
        q = qkv[:, 0:H]
        k = qkv[:, H:2 * H]
        v = qkv[:, 2 * H:3 * H]
        w_out = wqkv_o[:, 3 * H:4 * H]                               # (H, H)
        out_b = b_qkvo[:, 3 * H:4 * H]                               # (1, H)

        # per-head attention; out_proj applied per head slice and summed
        # (identical to concat(heads) @ Wout^T, no lane concatenate).
        attn = jnp.zeros((BL, H), jnp.float32)
        for hd in range(nhead):
            sl = slice(hd * dh, (hd + 1) * dh)
            s = lax.dot_general(q[:, sl], k[:, sl], (((1,), (1,)), ((), ())),
                                preferred_element_type=jnp.float32)  # (BL, BL)
            s = jnp.where(blk, s, jnp.float32(-1e30))                # block-diag
            s = s - jnp.max(s, axis=-1, keepdims=True)
            p = jnp.exp(s)
            p = p * pl.reciprocal(jnp.sum(p, axis=-1, keepdims=True), approx=True)
            ho = jnp.dot(p, v[:, sl], preferred_element_type=jnp.float32)
            attn = attn + jnp.dot(ho, w_out[sl, :],
                                  preferred_element_type=jnp.float32)
        attn = attn + out_b

        ln1_w = ln_row[:, 0:H]
        ln1_b = ln_row[:, H:2 * H]
        ln2_w = ln_row[:, 2 * H:3 * H]
        ln2_b = ln_row[:, 3 * H:4 * H]

        h1 = _layer_norm(h + attn, ln1_w, ln1_b)                     # norm1
        f = jnp.maximum(jnp.dot(h1, w_ff1, preferred_element_type=jnp.float32)
                        + ff1_b, 0.0)                                # ReLU FFN
        w_ff2 = wff2_all[:, l * H:(l + 1) * H]                       # (dff, H)
        f = jnp.dot(f, w_ff2, preferred_element_type=jnp.float32) + ff2_b
        h = _layer_norm(h1 + f, ln2_w, ln2_b)                        # norm2

    if l2norm:  # opt.norm: row-wise L2 normalisation of seq_hidden
        # eps guards the all-zero-row NaN (PyTorch divides without eps).
        h = h * lax.rsqrt(jnp.sum(h * h, axis=-1, keepdims=True) + 1e-12)

    # ------------- fused SR-GNN attention pooling (mode / r / e) ---------------
    pos = lax.broadcasted_iota(jnp.int32, (BL, H), 0)
    pos_in_b = jnp.bitwise_and(pos, L - 1)                           # position in session
    batch_of = jnp.right_shift(pos, log2l)                           # batch index per row
    lens_b = jnp.zeros((BL, H), jnp.int32)
    for b in range(B):                                               # static, B small
        lens_b = jnp.where(batch_of == b, lens_ref[b], lens_b)
    rowmask = (pos_in_b < lens_b).astype(jnp.float32)                # (BL, H)
    # PyTorch `hidden[:, sum(mask)-1]` wraps index -1 to the last position.
    last_pos = jnp.where(lens_b > 0, lens_b - 1, L - 1)
    islast = (pos_in_b == last_pos).astype(jnp.float32)              # (BL, H)

    # static batch-membership selection matrix (B, BL): sums rows per batch
    sel = (lax.broadcasted_iota(jnp.int32, (B, BL), 0) ==
           jnp.right_shift(lax.broadcasted_iota(jnp.int32, (B, BL), 1), log2l)
           ).astype(jnp.float32)

    # ht extracted from the LIVE value h (no VMEM round-trip)
    ht = jnp.dot(sel, islast * h, preferred_element_type=jnp.float32)     # (B, H)

    # packed pooling params
    r0 = pslab_ref[0:H, :]                 # [W1cat (H,3H) | w_re (H,2) | pad]
    r1 = pslab_ref[H:2 * H, :]             # [W2cat | pad]
    r2 = pslab_ref[2 * H:3 * H, :]         # [Wt_a per head | pad]
    r3 = pslab_ref[3 * H:4 * H, :]         # [Wt_ht per head | pad]
    rv = pslab_ref[4 * H:4 * H + 4, :]     # bias / linear_three rows
    w1cat = r0[:, 0:3 * H]
    w_re = r0[:, 3 * H:3 * H + 2]
    w2cat = r1[:, 0:3 * H]
    wta_all = r2[:, 0:3 * H]
    wth_all = r3[:, 0:3 * H]
    b1cat = rv[0:1, 0:3 * H]
    b2cat = rv[1:2, 0:3 * H]
    w3cat = rv[2:3, 0:3 * H]
    btcat = rv[3:4, 0:3 * H]

    # fused linear_one / linear_two across the three heads (2 pushes, 96 lanes)
    q1_all = jnp.dot(ht, w1cat, preferred_element_type=jnp.float32) + b1cat   # (B, 3H)
    q2_all = jnp.dot(h, w2cat, preferred_element_type=jnp.float32) + b2cat    # (BL, 3H)
    hthalf = jnp.dot(ht, wth_all, preferred_element_type=jnp.float32)         # (B, 3H)

    # broadcast q1 per batch element to all of its rows (select, no matmul)
    batch_of3 = jnp.right_shift(lax.broadcasted_iota(jnp.int32, (BL, 3 * H), 0), log2l)
    q1_rows = jnp.zeros((BL, 3 * H), jnp.float32)
    for b in range(B):
        q1_rows = jnp.where(batch_of3 == b, q1_all[b:b + 1, :], q1_rows)

    pooled = []
    for p_i in range(3):                                             # 0=mode, 1=r, 2=e
        hs = slice(p_i * H, (p_i + 1) * H)
        sig = jax.nn.sigmoid(q1_rows[:, hs] + q2_all[:, hs])          # (BL, H)
        alpha = jnp.sum(sig * w3cat[:, hs], axis=-1, keepdims=True)   # (BL, 1)
        a = jnp.dot(sel, alpha * rowmask * h,
                    preferred_element_type=jnp.float32)               # (B, H)
        # linear_transform(cat([a, ht])) == a @ Wt[:H] + ht @ Wt[H:] + bt
        res = (jnp.dot(a, wta_all[:, hs], preferred_element_type=jnp.float32)
               + hthalf[:, hs] + btcat[:, hs])
        pooled.append(res)

    s_mode, s_r, s_e = pooled
    logits = jnp.dot(s_mode, w_re, preferred_element_type=jnp.float32)        # (B, 2)
    logits = logits - jnp.max(logits, axis=-1, keepdims=True)
    e = jnp.exp(logits)
    p_re = e * pl.reciprocal(jnp.sum(e, axis=-1, keepdims=True), approx=True)
    pre_rows = jnp.concatenate([p_re, jnp.zeros((B, H - 2), jnp.float32)], axis=1)

    # ---------------------------- single merged output --------------------------
    o_ref[0:BL, :] = h.astype(o_ref.dtype)
    o_ref[BL:BL + B, :] = s_r.astype(o_ref.dtype)
    o_ref[BL + B:BL + 2 * B, :] = s_e.astype(o_ref.dtype)
    o_ref[BL + 2 * B:BL + 3 * B, :] = pre_rows.astype(o_ref.dtype)
    pad = o_ref.shape[0] - (BL + 3 * B)
    if pad:
        o_ref[BL + 3 * B:, :] = jnp.zeros((pad, H), o_ref.dtype)


def fused_forward(x2, lens, pk):
    """x2: (B*L, H) f32, lens: (B,) i32, pk: packed/pre-transposed params."""
    BL, H = x2.shape
    B = lens.shape[0]
    L = BL // B
    out_rows = ((BL + 3 * B + 7) // 8) * 8
    nl = pk["tslab"].shape[0]
    kernel = functools.partial(_fused_forward_kernel, batch=B, seq_len=L,
                               nhead=NHEAD, n_layers=nl, l2norm=NORM, dff=DFF)
    grid_spec = pltpu.PrefetchScalarGridSpec(
        num_scalar_prefetch=1,
        grid=(1,),                                                   # single step
        in_specs=[
            pl.BlockSpec((BL, H), lambda i, lens: (0, 0)),           # folded x
            pl.BlockSpec(pk["tslab"].shape, lambda i, lens: (0, 0, 0)),
            pl.BlockSpec(pk["wff2"].shape, lambda i, lens: (0, 0)),
            pl.BlockSpec(pk["pslab"].shape, lambda i, lens: (0, 0)),
        ],
        out_specs=pl.BlockSpec((out_rows, H), lambda i, lens: (0, 0)),
    )
    return pl.pallas_call(
        kernel,
        grid_spec=grid_spec,
        out_shape=jax.ShapeDtypeStruct((out_rows, H), jnp.float32),
        compiler_params=pltpu.CompilerParams(dimension_semantics=("arbitrary",)),
    )(lens, x2, pk["tslab"], pk["wff2"], pk["pslab"])


# ------------------------------ parameter init ---------------------------------
def init_params(key):
    # reset_parameters(): every parameter ~ U(-1/sqrt(H), 1/sqrt(H)).
    stdv = 1.0 / math.sqrt(HIDDEN)

    def u(k, shape):
        return jax.random.uniform(k, shape, jnp.float32, -stdv, stdv)

    keys = iter(jax.random.split(key, 64))
    params = {
        "embedding": u(next(keys), (N_NODE, HIDDEN)),
        "pos_emb": u(next(keys), (LEN_MAX, HIDDEN)),   # PositionEmbedding (MODE_ADD)
        "w_re": u(next(keys), (HIDDEN, 2)),
        "layers": [],
    }
    for _ in range(N_LAYERS):
        params["layers"].append((
            u(next(keys), (3 * HIDDEN, HIDDEN)),  # self_attn.in_proj_weight
            u(next(keys), (1, 3 * HIDDEN)),       # self_attn.in_proj_bias
            u(next(keys), (HIDDEN, HIDDEN)),      # self_attn.out_proj.weight
            u(next(keys), (1, HIDDEN)),           # self_attn.out_proj.bias
            u(next(keys), (1, HIDDEN)),           # norm1.weight
            u(next(keys), (1, HIDDEN)),           # norm1.bias
            u(next(keys), (DFF, HIDDEN)),         # linear1.weight
            u(next(keys), (1, DFF)),              # linear1.bias
            u(next(keys), (HIDDEN, DFF)),         # linear2.weight
            u(next(keys), (1, HIDDEN)),           # linear2.bias
            u(next(keys), (1, HIDDEN)),           # norm2.weight
            u(next(keys), (1, HIDDEN)),           # norm2.bias
        ))

    def attn_params():
        return (
            u(next(keys), (HIDDEN, HIDDEN)),      # linear_one.weight
            u(next(keys), (1, HIDDEN)),           # linear_one.bias
            u(next(keys), (HIDDEN, HIDDEN)),      # linear_two.weight
            u(next(keys), (1, HIDDEN)),           # linear_two.bias
            u(next(keys), (1, HIDDEN)),           # linear_three.weight (no bias)
            u(next(keys), (HIDDEN, 2 * HIDDEN)),  # linear_transform.weight
            u(next(keys), (1, HIDDEN)),           # linear_transform.bias
        )

    params["attn_mode"] = attn_params()
    params["attn_r"] = attn_params()
    params["attn_e"] = attn_params()
    return params


def pack_params(params):
    """Pre-transpose weights to (K, N) and pack everything into 3 lane-dense slabs."""
    H = HIDDEN
    scale = 1.0 / math.sqrt(H // NHEAD)

    def padv(v):
        v = jnp.asarray(v, jnp.float32).reshape(-1)
        return jnp.pad(v, (0, 128 - v.shape[0]))

    def padw(a):
        a = jnp.asarray(a, jnp.float32)
        return jnp.pad(a, ((0, 0), (0, 128 - a.shape[1])))

    zeros_row = jnp.zeros((128,), jnp.float32)

    tslab, wff2_cols = [], []
    for (inw, inb, ow, ob, l1w, l1b, f1w, f1b, f2w, f2b, l2w, l2b) in params["layers"]:
        wq = inw[0:H].T * scale               # scale folded into Wq (and bq below)
        wk = inw[H:2 * H].T
        wv = inw[2 * H:3 * H].T
        wo = ow.T
        wrow = jnp.concatenate([wq, wk, wv, wo], axis=1)              # (H, 128)
        ffrow = padw(f1w.T)                                           # (H, 128)
        inb1 = inb.reshape(-1)
        vec0 = jnp.concatenate([inb1[0:H] * scale, inb1[H:2 * H],
                                inb1[2 * H:3 * H], ob.reshape(-1)])   # (128,)
        vec1 = jnp.concatenate([l1w.reshape(-1), l1b.reshape(-1),
                                l2w.reshape(-1), l2b.reshape(-1)])    # (128,)
        vec2 = padv(f1b)                                              # ff1 bias
        vec3 = padv(f2b)                                              # ff2 bias
        vecs = jnp.stack([padv(vec0), padv(vec1), vec2, vec3,
                          zeros_row, zeros_row, zeros_row, zeros_row])  # (8, 128)
        tslab.append(jnp.concatenate([wrow, ffrow, vecs], axis=0))    # (72, 128)
        wff2_cols.append(f2w.T)                                        # (DFF, H)

    tslab = jnp.stack(tslab)                                           # (NL, 72, 128)
    wff2 = jnp.concatenate(wff2_cols, axis=1)                          # (DFF, NL*H)

    heads = [params["attn_mode"], params["attn_r"], params["attn_e"]]
    w1cat = jnp.concatenate([hd[0].T for hd in heads], axis=1)         # (H, 3H)
    w2cat = jnp.concatenate([hd[2].T for hd in heads], axis=1)         # (H, 3H)
    wta = jnp.concatenate([hd[5].T[0:H, :] for hd in heads], axis=1)   # a-half
    wth = jnp.concatenate([hd[5].T[H:2 * H, :] for hd in heads], axis=1)  # ht-half
    b1cat = jnp.concatenate([hd[1].reshape(-1) for hd in heads])
    b2cat = jnp.concatenate([hd[3].reshape(-1) for hd in heads])
    w3cat = jnp.concatenate([hd[4].reshape(-1) for hd in heads])
    btcat = jnp.concatenate([hd[6].reshape(-1) for hd in heads])

    r0 = padw(jnp.concatenate([w1cat, params["w_re"]], axis=1))        # W1cat | w_re
    r1 = padw(w2cat)
    r2 = padw(wta)
    r3 = padw(wth)
    rv = jnp.stack([padv(b1cat), padv(b2cat), padv(w3cat), padv(btcat),
                    zeros_row, zeros_row, zeros_row, zeros_row])       # (8, 128)
    pslab = jnp.concatenate([r0, r1, r2, r3, rv], axis=0)              # (136, 128)

    return {
        "embedding": params["embedding"],
        "pos_emb": params["pos_emb"],
        "tslab": tslab,
        "wff2": wff2,
        "pslab": pslab,
    }


# --------------------------------- forward -------------------------------------
@jax.jit
def tar_gnn_forward(inputs, mask, pk):
    # TODO(synk): head-item dataset file, mod_mat, FocalLoss, optimizer/scheduler,
    # compute_scores and the is_comp Attention heads are training/scoring-only
    # state and are not part of forward().
    emb = pk["embedding"]
    if NORM:  # norm and not is_cl: L2-normalize embedding rows
        norms = jnp.sqrt(jnp.sum(emb * emb, axis=1, keepdims=True))
        emb = emb / jnp.maximum(norms, 1e-12)

    B, L = inputs.shape
    seq_hidden = jnp.take(emb, inputs, axis=0)                  # (B, L, H)
    seq_hidden = seq_hidden + pk["pos_emb"][:L][None]           # PositionEmbedding MODE_ADD

    lens = jnp.sum(mask, axis=1).astype(jnp.int32)              # scalar-prefetched
    x2 = seq_hidden.reshape(B * L, HIDDEN).astype(jnp.float32)  # fold batch into rows

    out = fused_forward(x2, lens, pk)                           # (rows, H)
    BL = B * L
    seq_out = out[0:BL].reshape(B, L, HIDDEN)
    s_r = out[BL:BL + B]
    s_e = out[BL + B:BL + 2 * B]
    pr = out[BL + 2 * B:BL + 3 * B, 0:1]
    pe = out[BL + 2 * B:BL + 3 * B, 1:2]
    return seq_out, pr, pe, s_r, s_e


# ----------------------------------- main ---------------------------------------
if __name__ == "__main__":
    key = jax.random.PRNGKey(0)
    pkey, ikey = jax.random.split(key)
    params = init_params(pkey)
    packed = pack_params(params)

    # variable-length sessions: lens = [8, 5]; pad item id 0 outside the mask.
    lens = jnp.array([SEQ_LEN, 5], dtype=jnp.int32)
    pos = jnp.arange(SEQ_LEN)[None, :]
    mask = (pos < lens[:, None]).astype(jnp.int32)                        # (B, L)
    items = jax.random.randint(ikey, (BATCH, SEQ_LEN), 1, N_NODE) * mask  # (B, L)

    seq_hidden, pr, pe, s_r, s_e = tar_gnn_forward(items, mask, packed)
    jax.block_until_ready((seq_hidden, pr, pe, s_r, s_e))

    assert seq_hidden.shape == (BATCH, SEQ_LEN, HIDDEN)
    assert pr.shape == (BATCH, 1) and pe.shape == (BATCH, 1)
    assert s_r.shape == (BATCH, HIDDEN) and s_e.shape == (BATCH, HIDDEN)
    assert bool(jnp.all(jnp.isfinite(seq_hidden)))
    assert bool(jnp.all(jnp.isfinite(s_r))) and bool(jnp.all(jnp.isfinite(s_e)))
    assert bool(jnp.all(jnp.isfinite(pr))) and bool(jnp.all(jnp.isfinite(pe)))
    print("KERNEL_OK")
</pallas_src>

<mosaic_0001>
module attributes {stable_mosaic.version = 11 : i64} {
  func.func @_fused_forward_kernel(%arg0: i32, %arg1: memref<2xi32, #tpu.memory_space<smem>>, %arg2: memref<16x32xf32, #tpu.memory_space<vmem>>, %arg3: memref<2x72x128xf32, #tpu.memory_space<vmem>>, %arg4: memref<128x64xf32, #tpu.memory_space<vmem>>, %arg5: memref<136x128xf32, #tpu.memory_space<vmem>>, %arg6: memref<24x32xf32, #tpu.memory_space<vmem>>) attributes {dimension_semantics = [#tpu.dimension_semantics<arbitrary>], iteration_bounds = array<i64: 1>, scalar_prefetch = 1 : i64, scratch_operands = 0 : i64, tpu.core_type = #tpu.core_type<tc>, window_params = [{pipeline_mode = #tpu.pipeline_mode<synchronous>, transform_indices = @transform_0, window_bounds = array<i64: 16, 32>}, {pipeline_mode = #tpu.pipeline_mode<synchronous>, transform_indices = @transform_1, window_bounds = array<i64: 2, 72, 128>}, {pipeline_mode = #tpu.pipeline_mode<synchronous>, transform_indices = @transform_2, window_bounds = array<i64: 128, 64>}, {pipeline_mode = #tpu.pipeline_mode<synchronous>, transform_indices = @transform_3, window_bounds = array<i64: 136, 128>}, {pipeline_mode = #tpu.pipeline_mode<synchronous>, transform_indices = @transform_4, window_bounds = array<i64: 24, 32>}]} {
    %c0 = arith.constant 0 : index
    %c0_0 = arith.constant 0 : index
    %0 = vector.load %arg2[%c0, %c0_0] : memref<16x32xf32, #tpu.memory_space<vmem>>, vector<16x32xf32>
    %1 = tpu.iota {dimensions = array<i32: 0>} : vector<16x16xi32>
    %c3_i32 = arith.constant 3 : i32
    %2 = vector.broadcast %c3_i32 : i32 to vector<16x16xi32>
    %3 = arith.shrsi %1, %2 : vector<16x16xi32>
    %4 = tpu.iota {dimensions = array<i32: 1>} : vector<16x16xi32>
    %c3_i32_1 = arith.constant 3 : i32
    %5 = vector.broadcast %c3_i32_1 : i32 to vector<16x16xi32>
    %6 = arith.shrsi %4, %5 : vector<16x16xi32>
    %7 = arith.cmpi eq, %3, %6 : vector<16x16xi32>
    %c0_2 = arith.constant 0 : index
    %c0_3 = arith.constant 0 : index
    %8 = vector.load %arg4[%c0_2, %c0_3] : memref<128x64xf32, #tpu.memory_space<vmem>>, vector<128x64xf32>
    %c0_4 = arith.constant 0 : index
    %c0_5 = arith.constant 0 : index
    %c0_6 = arith.constant 0 : index
    %9 = vector.load %arg3[%c0_4, %c0_5, %c0_6] : memref<2x72x128xf32, #tpu.memory_space<vmem>>, vector<1x72x128xf32>
    %10 = vector.shape_cast %9 : vector<1x72x128xf32> to vector<72x128xf32>
    %11 = vector.extract_strided_slice %10 {offsets = [0, 0], sizes = [32, 128], strides = [1, 1]} : vector<72x128xf32> to vector<32x128xf32>
    %12 = vector.extract_strided_slice %10 {offsets = [32, 0], sizes = [32, 128], strides = [1, 1]} : vector<72x128xf32> to vector<32x128xf32>
    %13 = vector.extract_strided_slice %10 {offsets = [64, 0], sizes = [4, 128], strides = [1, 1]} : vector<72x128xf32> to vector<4x128xf32>
    %14 = vector.extract_strided_slice %13 {offsets = [0, 0], sizes = [1, 128], strides = [1, 1]} : vector<4x128xf32> to vector<1x128xf32>
    %15 = vector.extract_strided_slice %13 {offsets = [1, 0], sizes = [1, 128], strides = [1, 1]} : vector<4x128xf32> to vector<1x128xf32>
    %16 = vector.extract_strided_slice %13 {offsets = [2, 0], sizes = [1, 128], strides = [1, 1]} : vector<4x128xf32> to vector<1x128xf32>
    %17 = vector.extract_strided_slice %13 {offsets = [3, 0], sizes = [1, 32], strides = [1, 1]} : vector<4x128xf32> to vector<1x32xf32>
    %cst = arith.constant dense<0.000000e+00> : vector<16x128xf32>
    %18 = tpu.matmul %0, %11, %cst {dimension_numbers = #tpu.dot_dimension_numbers<[1], [0], [0], [1], [0, 0, 1, 1], [], []>} : vector<16x32xf32>, vector<32x128xf32>, vector<16x128xf32> -> vector<16x128xf32>
    %19 = vector.broadcast %14 : vector<1x128xf32> to vector<16x128xf32>
    %20 = arith.addf %18, %19 : vector<16x128xf32>
    %21 = vector.extract_strided_slice %20 {offsets = [0, 0], sizes = [16, 32], strides = [1, 1]} : vector<16x128xf32> to vector<16x32xf32>
    %22 = vector.extract_strided_slice %20 {offsets = [0, 32], sizes = [16, 32], strides = [1, 1]} : vector<16x128xf32> to vector<16x32xf32>
    %23 = vector.extract_strided_slice %20 {offsets = [0, 64], sizes = [16, 32], strides = [1, 1]} : vector<16x128xf32> to vector<16x32xf32>
    %24 = vector.extract_strided_slice %11 {offsets = [0, 96], sizes = [32, 32], strides = [1, 1]} : vector<32x128xf32> to vector<32x32xf32>
    %25 = vector.extract_strided_slice %14 {offsets = [0, 96], sizes = [1, 32], strides = [1, 1]} : vector<1x128xf32> to vector<1x32xf32>
    %cst_7 = arith.constant 0.000000e+00 : f32
    %26 = vector.broadcast %cst_7 : f32 to vector<16x32xf32>
    %27 = vector.extract_strided_slice %21 {offsets = [0, 0], sizes = [16, 16], strides = [1, 1]} : vector<16x32xf32> to vector<16x16xf32>
    %28 = vector.extract_strided_slice %22 {offsets = [0, 0], sizes = [16, 16], strides = [1, 1]} : vector<16x32xf32> to vector<16x16xf32>
    %cst_8 = arith.constant dense<0.000000e+00> : vector<16x16xf32>
    %29 = tpu.matmul %27, %28, %cst_8 {dimension_numbers = #tpu.dot_dimension_numbers<[1], [1], [0], [0], [0, 0, 1, 0], [], []>} : vector<16x16xf32>, vector<16x16xf32>, vector<16x16xf32> -> vector<16x16xf32>
    %cst_9 = arith.constant -1.000000e+30 : f32
    %30 = vector.broadcast %cst_9 : f32 to vector<16x16xf32>
    %31 = arith.select %7, %29, %30 : vector<16x16xi1>, vector<16x16xf32>
    %cst_10 = arith.constant dense<0xFF800000> : vector<16xf32>
    %32 = vector.multi_reduction <maximumf>, %31, %cst_10 [1] : vector<16x16xf32> to vector<16xf32>
    %33 = vector.shape_cast %32 : vector<16xf32> to vector<16x1xf32>
    %34 = vector.broadcast %33 : vector<16x1xf32> to vector<16x16xf32>
    %35 = arith.subf %31, %34 : vector<16x16xf32>
    %36 = math.exp %35 : vector<16x16xf32>
    %cst_11 = arith.constant dense<0.000000e+00> : vector<16xf32>
    %37 = vector.multi_reduction <add>, %36, %cst_11 [1] : vector<16x16xf32> to vector<16xf32>
    %38 = vector.shape_cast %37 : vector<16xf32> to vector<16x1xf32>
    %39 = tpu.reciprocal %38 {approx = true} : vector<16x1xf32> -> vector<16x1xf32>
    %40 = vector.broadcast %39 : vector<16x1xf32> to vector<16x16xf32>
    %41 = arith.mulf %36, %40 : vector<16x16xf32>
    %42 = vector.extract_strided_slice %23 {offsets = [0, 0], sizes = [16, 16], strides = [1, 1]} : vector<16x32xf32> to vector<16x16xf32>
    %cst_12 = arith.constant dense<0.000000e+00> : vector<16x16xf32>
    %43 = tpu.matmul %41, %42, %cst_12 {dimension_numbers = #tpu.dot_dimension_numbers<[1], [0], [0], [1], [0, 0, 1, 1], [], []>} : vector<16x16xf32>, vector<16x16xf32>, vector<16x16xf32> -> vector<16x16xf32>
    %44 = vector.extract_strided_slice %24 {offsets = [0, 0], sizes = [16, 32], strides = [1, 1]} : vector<32x32xf32> to vector<16x32xf32>
    %cst_13 = arith.constant dense<0.000000e+00> : vector<16x32xf32>
    %45 = tpu.matmul %43, %44, %cst_13 {dimension_numbers = #tpu.dot_dimension_numbers<[1], [0], [0], [1], [0, 0, 1, 1], [], []>} : vector<16x16xf32>, vector<16x32xf32>, vector<16x32xf32> -> vector<16x32xf32>
    %46 = arith.addf %26, %45 : vector<16x32xf32>
    %47 = vector.extract_strided_slice %21 {offsets = [0, 16], sizes = [16, 16], strides = [1, 1]} : vector<16x32xf32> to vector<16x16xf32>
    %48 = vector.extract_strided_slice %22 {offsets = [0, 16], sizes = [16, 16], strides = [1, 1]} : vector<16x32xf32> to vector<16x16xf32>
    %cst_14 = arith.constant dense<0.000000e+00> : vector<16x16xf32>
    %49 = tpu.matmul %47, %48, %cst_14 {dimension_numbers = #tpu.dot_dimension_numbers<[1], [1], [0], [0], [0, 0, 1, 0], [], []>} : vector<16x16xf32>, vector<16x16xf32>, vector<16x16xf32> -> vector<16x16xf32>
    %cst_15 = arith.constant -1.000000e+30 : f32
    %50 = vector.broadcast %cst_15 : f32 to vector<16x16xf32>
    %51 = arith.select %7, %49, %50 : vector<16x16xi1>, vector<16x16xf32>
    %cst_16 = arith.constant dense<0xFF800000> : vector<16xf32>
    %52 = vector.multi_reduction <maximumf>, %51, %cst_16 [1] : vector<16x16xf32> to vector<16xf32>
    %53 = vector.shape_cast %52 : vector<16xf32> to vector<16x1xf32>
    %54 = vector.broadcast %53 : vector<16x1xf32> to vector<16x16xf32>
    %55 = arith.subf %51, %54 : vector<16x16xf32>
    %56 = math.exp %55 : vector<16x16xf32>
    %cst_17 = arith.constant dense<0.000000e+00> : vector<16xf32>
    %57 = vector.multi_reduction <add>, %56, %cst_17 [1] : vector<16x16xf32> to vector<16xf32>
    %58 = vector.shape_cast %57 : vector<16xf32> to vector<16x1xf32>
    %59 = tpu.reciprocal %58 {approx = true} : vector<16x1xf32> -> vector<16x1xf32>
    %60 = vector.broadcast %59 : vector<16x1xf32> to vector<16x16xf32>
    %61 = arith.mulf %56, %60 : vector<16x16xf32>
    %62 = vector.extract_strided_slice %23 {offsets = [0, 16], sizes = [16, 16], strides = [1, 1]} : vector<16x32xf32> to vector<16x16xf32>
    %cst_18 = arith.constant dense<0.000000e+00> : vector<16x16xf32>
    %63 = tpu.matmul %61, %62, %cst_18 {dimension_numbers = #tpu.dot_dimension_numbers<[1], [0], [0], [1], [0, 0, 1, 1], [], []>} : vector<16x16xf32>, vector<16x16xf32>, vector<16x16xf32> -> vector<16x16xf32>
    %64 = vector.extract_strided_slice %24 {offsets = [16, 0], sizes = [16, 32], strides = [1, 1]} : vector<32x32xf32> to vector<16x32xf32>
    %cst_19 = arith.constant dense<0.000000e+00> : vector<16x32xf32>
    %65 = tpu.matmul %63, %64, %cst_19 {dimension_numbers = #tpu.dot_dimension_numbers<[1], [0], [0], [1], [0, 0, 1, 1], [], []>} : vector<16x16xf32>, vector<16x32xf32>, vector<16x32xf32> -> vector<16x32xf32>
    %66 = arith.addf %46, %65 : vector<16x32xf32>
    %67 = vector.broadcast %25 : vector<1x32xf32> to vector<16x32xf32>
    %68 = arith.addf %66, %67 : vector<16x32xf32>
    %69 = vector.extract_strided_slice %15 {offsets = [0, 0], sizes = [1, 32], strides = [1, 1]} : vector<1x128xf32> to vector<1x32xf32>
    %70 = vector.extract_strided_slice %15 {offsets = [0, 32], sizes = [1, 32], strides = [1, 1]} : vector<1x128xf32> to vector<1x32xf32>
    %71 = vector.extract_strided_slice %15 {offsets = [0, 64], sizes = [1, 32], strides = [1, 1]} : vector<1x128xf32> to vector<1x32xf32>
    %72 = vector.extract_strided_slice %15 {offsets = [0, 96], sizes = [1, 32], strides = [1, 1]} : vector<1x128xf32> to vector<1x32xf32>
    %73 = arith.addf %0, %68 : vector<16x32xf32>
    %cst_20 = arith.constant dense<0.000000e+00> : vector<16xf32>
    %74 = vector.multi_reduction <add>, %73, %cst_20 [1] : vector<16x32xf32> to vector<16xf32>
    %75 = vector.shape_cast %74 : vector<16xf32> to vector<16x1xf32>
    %cst_21 = arith.constant 3.200000e+01 : f32
    %76 = vector.broadcast %cst_21 : f32 to vector<16x1xf32>
    %77 = arith.divf %75, %76 : vector<16x1xf32>
    %78 = vector.broadcast %77 : vector<16x1xf32> to vector<16x32xf32>
    %79 = arith.subf %73, %78 : vector<16x32xf32>
    %80 = arith.mulf %79, %79 : vector<16x32xf32>
    %cst_22 = arith.constant dense<0.000000e+00> : vector<16xf32>
    %81 = vector.multi_reduction <add>, %80, %cst_22 [1] : vector<16x32xf32> to vector<16xf32>
    %82 = vector.shape_cast %81 : vector<16xf32> to vector<16x1xf32>
    %cst_23 = arith.constant 3.200000e+01 : f32
    %83 = vector.broadcast %cst_23 : f32 to vector<16x1xf32>
    %84 = arith.divf %82, %83 : vector<16x1xf32>
    %85 = vector.broadcast %77 : vector<16x1xf32> to vector<16x32xf32>
    %86 = arith.subf %73, %85 : vector<16x32xf32>
    %cst_24 = arith.constant 9.99999974E-6 : f32
    %87 = vector.broadcast %cst_24 : f32 to vector<16x1xf32>
    %88 = arith.addf %84, %87 : vector<16x1xf32>
    %89 = math.rsqrt %88 : vector<16x1xf32>
    %90 = vector.broadcast %89 : vector<16x1xf32> to vector<16x32xf32>
    %91 = arith.mulf %86, %90 : vector<16x32xf32>
    %92 = vector.broadcast %69 : vector<1x32xf32> to vector<16x32xf32>
    %93 = arith.mulf %91, %92 : vector<16x32xf32>
    %94 = vector.broadcast %70 : vector<1x32xf32> to vector<16x32xf32>
    %95 = arith.addf %93, %94 : vector<16x32xf32>
    %cst_25 = arith.constant dense<0.000000e+00> : vector<16x128xf32>
    %96 = tpu.matmul %95, %12, %cst_25 {dimension_numbers = #tpu.dot_dimension_numbers<[1], [0], [0], [1], [0, 0, 1, 1], [], []>} : vector<16x32xf32>, vector<32x128xf32>, vector<16x128xf32> -> vector<16x128xf32>
    %97 = vector.broadcast %16 : vector<1x128xf32> to vector<16x128xf32>
    %98 = arith.addf %96, %97 : vector<16x128xf32>
    %cst_26 = arith.constant 0.000000e+00 : f32
    %99 = vector.broadcast %cst_26 : f32 to vector<16x128xf32>
    %100 = arith.maximumf %98, %99 : vector<16x128xf32>
    %101 = vector.extract_strided_slice %8 {offsets = [0, 0], sizes = [128, 32], strides = [1, 1]} : vector<128x64xf32> to vector<128x32xf32>
    %cst_27 = arith.constant dense<0.000000e+00> : vector<16x32xf32>
    %102 = tpu.matmul %100, %101, %cst_27 {dimension_numbers = #tpu.dot_dimension_numbers<[1], [0], [0], [1], [0, 0, 1, 1], [], []>} : vector<16x128xf32>, vector<128x32xf32>, vector<16x32xf32> -> vector<16x32xf32>
    %103 = vector.broadcast %17 : vector<1x32xf32> to vector<16x32xf32>
    %104 = arith.addf %102, %103 : vector<16x32xf32>
    %105 = arith.addf %95, %104 : vector<16x32xf32>
    %cst_28 = arith.constant dense<0.000000e+00> : vector<16xf32>
    %106 = vector.multi_reduction <add>, %105, %cst_28 [1] : vector<16x32xf32> to vector<16xf32>
    %107 = vector.shape_cast %106 : vector<16xf32> to vector<16x1xf32>
    %cst_29 = arith.constant 3.200000e+01 : f32
    %108 = vector.broadcast %cst_29 : f32 to vector<16x1xf32>
    %109 = arith.divf %107, %108 : vector<16x1xf32>
    %110 = vector.broadcast %109 : vector<16x1xf32> to vector<16x32xf32>
    %111 = arith.subf %105, %110 : vector<16x32xf32>
    %112 = arith.mulf %111, %111 : vector<16x32xf32>
    %cst_30 = arith.constant dense<0.000000e+00> : vector<16xf32>
    %113 = vector.multi_reduction <add>, %112, %cst_30 [1] : vector<16x32xf32> to vector<16xf32>
    %114 = vector.shape_cast %113 : vector<16xf32> to vector<16x1xf32>
    %cst_31 = arith.constant 3.200000e+01 : f32
    %115 = vector.broadcast %cst_31 : f32 to vector<16x1xf32>
    %116 = arith.divf %114, %115 : vector<16x1xf32>
    %117 = vector.broadcast %109 : vector<16x1xf32> to vector<16x32xf32>
    %118 = arith.subf %105, %117 : vector<16x32xf32>
    %cst_32 = arith.constant 9.99999974E-6 : f32
    %119 = vector.broadcast %cst_32 : f32 to vector<16x1xf32>
    %120 = arith.addf %116, %119 : vector<16x1xf32>
    %121 = math.rsqrt %120 : vector<16x1xf32>
    %122 = vector.broadcast %121 : vector<16x1xf32> to vector<16x32xf32>
    %123 = arith.mulf %118, %122 : vector<16x32xf32>
    %124 = vector.broadcast %71 : vector<1x32xf32> to vector<16x32xf32>
    %125 = arith.mulf %123, %124 : vector<16x32xf32>
    %126 = vector.broadcast %72 : vector<1x32xf32> to vector<16x32xf32>
    %127 = arith.addf %125, %126 : vector<16x32xf32>
    %c1 = arith.constant 1 : index
    %c0_33 = arith.constant 0 : index
    %c0_34 = arith.constant 0 : index
    %128 = vector.load %arg3[%c1, %c0_33, %c0_34] : memref<2x72x128xf32, #tpu.memory_space<vmem>>, vector<1x72x128xf32>
    %129 = vector.shape_cast %128 : vector<1x72x128xf32> to vector<72x128xf32>
    %130 = vector.extract_strided_slice %129 {offsets = [0, 0], sizes = [32, 128], strides = [1, 1]} : vector<72x128xf32> to vector<32x128xf32>
    %131 = vector.extract_strided_slice %129 {offsets = [32, 0], sizes = [32, 128], strides = [1, 1]} : vector<72x128xf32> to vector<32x128xf32>
    %132 = vector.extract_strided_slice %129 {offsets = [64, 0], sizes = [4, 128], strides = [1, 1]} : vector<72x128xf32> to vector<4x128xf32>
    %133 = vector.extract_strided_slice %132 {offsets = [0, 0], sizes = [1, 128], strides = [1, 1]} : vector<4x128xf32> to vector<1x128xf32>
    %134 = vector.extract_strided_slice %132 {offsets = [1, 0], sizes = [1, 128], strides = [1, 1]} : vector<4x128xf32> to vector<1x128xf32>
    %135 = vector.extract_strided_slice %132 {offsets = [2, 0], sizes = [1, 128], strides = [1, 1]} : vector<4x128xf32> to vector<1x128xf32>
    %136 = vector.extract_strided_slice %132 {offsets = [3, 0], sizes = [1, 32], strides = [1, 1]} : vector<4x128xf32> to vector<1x32xf32>
    %cst_35 = arith.constant dense<0.000000e+00> : vector<16x128xf32>
    %137 = tpu.matmul %127, %130, %cst_35 {dimension_numbers = #tpu.dot_dimension_numbers<[1], [0], [0], [1], [0, 0, 1, 1], [], []>} : vector<16x32xf32>, vector<32x128xf32>, vector<16x128xf32> -> vector<16x128xf32>
    %138 = vector.broadcast %133 : vector<1x128xf32> to vector<16x128xf32>
    %139 = arith.addf %137, %138 : vector<16x128xf32>
    %140 = vector.extract_strided_slice %139 {offsets = [0, 0], sizes = [16, 32], strides = [1, 1]} : vector<16x128xf32> to vector<16x32xf32>
    %141 = vector.extract_strided_slice %139 {offsets = [0, 32], sizes = [16, 32], strides = [1, 1]} : vector<16x128xf32> to vector<16x32xf32>
    %142 = vector.extract_strided_slice %139 {offsets = [0, 64], sizes = [16, 32], strides = [1, 1]} : vector<16x128xf32> to vector<16x32xf32>
    %143 = vector.extract_strided_slice %130 {offsets = [0, 96], sizes = [32, 32], strides = [1, 1]} : vector<32x128xf32> to vector<32x32xf32>
    %144 = vector.extract_strided_slice %133 {offsets = [0, 96], sizes = [1, 32], strides = [1, 1]} : vector<1x128xf32> to vector<1x32xf32>
    %cst_36 = arith.constant 0.000000e+00 : f32
    %145 = vector.broadcast %cst_36 : f32 to vector<16x32xf32>
    %146 = vector.extract_strided_slice %140 {offsets = [0, 0], sizes = [16, 16], strides = [1, 1]} : vector<16x32xf32> to vector<16x16xf32>
    %147 = vector.extract_strided_slice %141 {offsets = [0, 0], sizes = [16, 16], strides = [1, 1]} : vector<16x32xf32> to vector<16x16xf32>
    %cst_37 = arith.constant dense<0.000000e+00> : vector<16x16xf32>
    %148 = tpu.matmul %146, %147, %cst_37 {dimension_numbers = #tpu.dot_dimension_numbers<[1], [1], [0], [0], [0, 0, 1, 0], [], []>} : vector<16x16xf32>, vector<16x16xf32>, vector<16x16xf32> -> vector<16x16xf32>
    %cst_38 = arith.constant -1.000000e+30 : f32
    %149 = vector.broadcast %cst_38 : f32 to vector<16x16xf32>
    %150 = arith.select %7, %148, %149 : vector<16x16xi1>, vector<16x16xf32>
    %cst_39 = arith.constant dense<0xFF800000> : vector<16xf32>
    %151 = vector.multi_reduction <maximumf>, %150, %cst_39 [1] : vector<16x16xf32> to vector<16xf32>
    %152 = vector.shape_cast %151 : vector<16xf32> to vector<16x1xf32>
    %153 = vector.broadcast %152 : vector<16x1xf32> to vector<16x16xf32>
    %154 = arith.subf %150, %153 : vector<16x16xf32>
    %155 = math.exp %154 : vector<16x16xf32>
    %cst_40 = arith.constant dense<0.000000e+00> : vector<16xf32>
    %156 = vector.multi_reduction <add>, %155, %cst_40 [1] : vector<16x16xf32> to vector<16xf32>
    %157 = vector.shape_cast %156 : vector<16xf32> to vector<16x1xf32>
    %158 = tpu.reciprocal %157 {approx = true} : vector<16x1xf32> -> vector<16x1xf32>
    %159 = vector.broadcast %158 : vector<16x1xf32> to vector<16x16xf32>
    %160 = arith.mulf %155, %159 : vector<16x16xf32>
    %161 = vector.extract_strided_slice %142 {offsets = [0, 0], sizes = [16, 16], strides = [1, 1]} : vector<16x32xf32> to vector<16x16xf32>
    %cst_41 = arith.constant dense<0.000000e+00> : vector<16x16xf32>
    %162 = tpu.matmul %160, %161, %cst_41 {dimension_numbers = #tpu.dot_dimension_numbers<[1], [0], [0], [1], [0, 0, 1, 1], [], []>} : vector<16x16xf32>, vector<16x16xf32>, vector<16x16xf32> -> vector<16x16xf32>
    %163 = vector.extract_strided_slice %143 {offsets = [0, 0], sizes = [16, 32], strides = [1, 1]} : vector<32x32xf32> to vector<16x32xf32>
    %cst_42 = arith.constant dense<0.000000e+00> : vector<16x32xf32>
    %164 = tpu.matmul %162, %163, %cst_42 {dimension_numbers = #tpu.dot_dimension_numbers<[1], [0], [0], [1], [0, 0, 1, 1], [], []>} : vector<16x16xf32>, vector<16x32xf32>, vector<16x32xf32> -> vector<16x32xf32>
    %165 = arith.addf %145, %164 : vector<16x32xf32>
    %166 = vector.extract_strided_slice %140 {offsets = [0, 16], sizes = [16, 16], strides = [1, 1]} : vector<16x32xf32> to vector<16x16xf32>
    %167 = vector.extract_strided_slice %141 {offsets = [0, 16], sizes = [16, 16], strides = [1, 1]} : vector<16x32xf32> to vector<16x16xf32>
    %cst_43 = arith.constant dense<0.000000e+00> : vector<16x16xf32>
    %168 = tpu.matmul %166, %167, %cst_43 {dimension_numbers = #tpu.dot_dimension_numbers<[1], [1], [0], [0], [0, 0, 1, 0], [], []>} : vector<16x16xf32>, vector<16x16xf32>, vector<16x16xf32> -> vector<16x16xf32>
    %cst_44 = arith.constant -1.000000e+30 : f32
    %169 = vector.broadcast %cst_44 : f32 to vector<16x16xf32>
    %170 = arith.select %7, %168, %169 : vector<16x16xi1>, vector<16x16xf32>
    %cst_45 = arith.constant dense<0xFF800000> : vector<16xf32>
    %171 = vector.multi_reduction <maximumf>, %170, %cst_45 [1] : vector<16x16xf32> to vector<16xf32>
    %172 = vector.shape_cast %171 : vector<16xf32> to vector<16x1xf32>
    %173 = vector.broadcast %172 : vector<16x1xf32> to vector<16x16xf32>
    %174 = arith.subf %170, %173 : vector<16x16xf32>
    %175 = math.exp %174 : vector<16x16xf32>
    %cst_46 = arith.constant dense<0.000000e+00> : vector<16xf32>
    %176 = vector.multi_reduction <add>, %175, %cst_46 [1] : vector<16x16xf32> to vector<16xf32>
    %177 = vector.shape_cast %176 : vector<16xf32> to vector<16x1xf32>
    %178 = tpu.reciprocal %177 {approx = true} : vector<16x1xf32> -> vector<16x1xf32>
    %179 = vector.broadcast %178 : vector<16x1xf32> to vector<16x16xf32>
    %180 = arith.mulf %175, %179 : vector<16x16xf32>
    %181 = vector.extract_strided_slice %142 {offsets = [0, 16], sizes = [16, 16], strides = [1, 1]} : vector<16x32xf32> to vector<16x16xf32>
    %cst_47 = arith.constant dense<0.000000e+00> : vector<16x16xf32>
    %182 = tpu.matmul %180, %181, %cst_47 {dimension_numbers = #tpu.dot_dimension_numbers<[1], [0], [0], [1], [0, 0, 1, 1], [], []>} : vector<16x16xf32>, vector<16x16xf32>, vector<16x16xf32> -> vector<16x16xf32>
    %183 = vector.extract_strided_slice %143 {offsets = [16, 0], sizes = [16, 32], strides = [1, 1]} : vector<32x32xf32> to vector<16x32xf32>
    %cst_48 = arith.constant dense<0.000000e+00> : vector<16x32xf32>
    %184 = tpu.matmul %182, %183, %cst_48 {dimension_numbers = #tpu.dot_dimension_numbers<[1], [0], [0], [1], [0, 0, 1, 1], [], []>} : vector<16x16xf32>, vector<16x32xf32>, vector<16x32xf32> -> vector<16x32xf32>
    %185 = arith.addf %165, %184 : vector<16x32xf32>
    %186 = vector.broadcast %144 : vector<1x32xf32> to vector<16x32xf32>
    %187 = arith.addf %185, %186 : vector<16x32xf32>
    %188 = vector.extract_strided_slice %134 {offsets = [0, 0], sizes = [1, 32], strides = [1, 1]} : vector<1x128xf32> to vector<1x32xf32>
    %189 = vector.extract_strided_slice %134 {offsets = [0, 32], sizes = [1, 32], strides = [1, 1]} : vector<1x128xf32> to vector<1x32xf32>
    %190 = vector.extract_strided_slice %134 {offsets = [0, 64], sizes = [1, 32], strides = [1, 1]} : vector<1x128xf32> to vector<1x32xf32>
    %191 = vector.extract_strided_slice %134 {offsets = [0, 96], sizes = [1, 32], strides = [1, 1]} : vector<1x128xf32> to vector<1x32xf32>
    %192 = arith.addf %127, %187 : vector<16x32xf32>
    %cst_49 = arith.constant dense<0.000000e+00> : vector<16xf32>
    %193 = vector.multi_reduction <add>, %192, %cst_49 [1] : vector<16x32xf32> to vector<16xf32>
    %194 = vector.shape_cast %193 : vector<16xf32> to vector<16x1xf32>
    %cst_50 = arith.constant 3.200000e+01 : f32
    %195 = vector.broadcast %cst_50 : f32 to vector<16x1xf32>
    %196 = arith.divf %194, %195 : vector<16x1xf32>
    %197 = vector.broadcast %196 : vector<16x1xf32> to vector<16x32xf32>
    %198 = arith.subf %192, %197 : vector<16x32xf32>
    %199 = arith.mulf %198, %198 : vector<16x32xf32>
    %cst_51 = arith.constant dense<0.000000e+00> : vector<16xf32>
    %200 = vector.multi_reduction <add>, %199, %cst_51 [1] : vector<16x32xf32> to vector<16xf32>
    %201 = vector.shape_cast %200 : vector<16xf32> to vector<16x1xf32>
    %cst_52 = arith.constant 3.200000e+01 : f32
    %202 = vector.broadcast %cst_52 : f32 to vector<16x1xf32>
    %203 = arith.divf %201, %202 : vector<16x1xf32>
    %204 = vector.broadcast %196 : vector<16x1xf32> to vector<16x32xf32>
    %205 = arith.subf %192, %204 : vector<16x32xf32>
    %cst_53 = arith.constant 9.99999974E-6 : f32
    %206 = vector.broadcast %cst_53 : f32 to vector<16x1xf32>
    %207 = arith.addf %203, %206 : vector<16x1xf32>
    %208 = math.rsqrt %207 : vector<16x1xf32>
    %209 = vector.broadcast %208 : vector<16x1xf32> to vector<16x32xf32>
    %210 = arith.mulf %205, %209 : vector<16x32xf32>
    %211 = vector.broadcast %188 : vector<1x32xf32> to vector<16x32xf32>
    %212 = arith.mulf %210, %211 : vector<16x32xf32>
    %213 = vector.broadcast %189 : vector<1x32xf32> to vector<16x32xf32>
    %214 = arith.addf %212, %213 : vector<16x32xf32>
    %cst_54 = arith.constant dense<0.000000e+00> : vector<16x128xf32>
    %215 = tpu.matmul %214, %131, %cst_54 {dimension_numbers = #tpu.dot_dimension_numbers<[1], [0], [0], [1], [0, 0, 1, 1], [], []>} : vector<16x32xf32>, vector<32x128xf32>, vector<16x128xf32> -> vector<16x128xf32>
    %216 = vector.broadcast %135 : vector<1x128xf32> to vector<16x128xf32>
    %217 = arith.addf %215, %216 : vector<16x128xf32>
    %cst_55 = arith.constant 0.000000e+00 : f32
    %218 = vector.broadcast %cst_55 : f32 to vector<16x128xf32>
    %219 = arith.maximumf %217, %218 : vector<16x128xf32>
    %220 = vector.extract_strided_slice %8 {offsets = [0, 32], sizes = [128, 32], strides = [1, 1]} : vector<128x64xf32> to vector<128x32xf32>
    %cst_56 = arith.constant dense<0.000000e+00> : vector<16x32xf32>
    %221 = tpu.matmul %219, %220, %cst_56 {dimension_numbers = #tpu.dot_dimension_numbers<[1], [0], [0], [1], [0, 0, 1, 1], [], []>} : vector<16x128xf32>, vector<128x32xf32>, vector<16x32xf32> -> vector<16x32xf32>
    %222 = vector.broadcast %136 : vector<1x32xf32> to vector<16x32xf32>
    %223 = arith.addf %221, %222 : vector<16x32xf32>
    %224 = arith.addf %214, %223 : vector<16x32xf32>
    %cst_57 = arith.constant dense<0.000000e+00> : vector<16xf32>
    %225 = vector.multi_reduction <add>, %224, %cst_57 [1] : vector<16x32xf32> to vector<16xf32>
    %226 = vector.shape_cast %225 : vector<16xf32> to vector<16x1xf32>
    %cst_58 = arith.constant 3.200000e+01 : f32
    %227 = vector.broadcast %cst_58 : f32 to vector<16x1xf32>
    %228 = arith.divf %226, %227 : vector<16x1xf32>
    %229 = vector.broadcast %228 : vector<16x1xf32> to vector<16x32xf32>
    %230 = arith.subf %224, %229 : vector<16x32xf32>
    %231 = arith.mulf %230, %230 : vector<16x32xf32>
    %cst_59 = arith.constant dense<0.000000e+00> : vector<16xf32>
    %232 = vector.multi_reduction <add>, %231, %cst_59 [1] : vector<16x32xf32> to vector<16xf32>
    %233 = vector.shape_cast %232 : vector<16xf32> to vector<16x1xf32>
    %cst_60 = arith.constant 3.200000e+01 : f32
    %234 = vector.broadcast %cst_60 : f32 to vector<16x1xf32>
    %235 = arith.divf %233, %234 : vector<16x1xf32>
    %236 = vector.broadcast %228 : vector<16x1xf32> to vector<16x32xf32>
    %237 = arith.subf %224, %236 : vector<16x32xf32>
    %cst_61 = arith.constant 9.99999974E-6 : f32
    %238 = vector.broadcast %cst_61 : f32 to vector<16x1xf32>
    %239 = arith.addf %235, %238 : vector<16x1xf32>
    %240 = math.rsqrt %239 : vector<16x1xf32>
    %241 = vector.broadcast %240 : vector<16x1xf32> to vector<16x32xf32>
    %242 = arith.mulf %237, %241 : vector<16x32xf32>
    %243 = vector.broadcast %190 : vector<1x32xf32> to vector<16x32xf32>
    %244 = arith.mulf %242, %243 : vector<16x32xf32>
    %245 = vector.broadcast %191 : vector<1x32xf32> to vector<16x32xf32>
    %246 = arith.addf %244, %245 : vector<16x32xf32>
    %247 = arith.mulf %246, %246 : vector<16x32xf32>
    %cst_62 = arith.constant dense<0.000000e+00> : vector<16xf32>
    %248 = vector.multi_reduction <add>, %247, %cst_62 [1] : vector<16x32xf32> to vector<16xf32>
    %249 = vector.shape_cast %248 : vector<16xf32> to vector<16x1xf32>
    %cst_63 = arith.constant 9.99999996E-13 : f32
    %250 = vector.broadcast %cst_63 : f32 to vector<16x1xf32>
    %251 = arith.addf %249, %250 : vector<16x1xf32>
    %252 = math.rsqrt %251 : vector<16x1xf32>
    %253 = vector.broadcast %252 : vector<16x1xf32> to vector<16x32xf32>
    %254 = arith.mulf %246, %253 : vector<16x32xf32>
    %255 = tpu.iota {dimensions = array<i32: 0>} : vector<16x32xi32>
    %c7_i32 = arith.constant 7 : i32
    %256 = vector.broadcast %c7_i32 : i32 to vector<16x32xi32>
    %257 = arith.andi %255, %256 : vector<16x32xi32>
    %c3_i32_64 = arith.constant 3 : i32
    %258 = vector.broadcast %c3_i32_64 : i32 to vector<16x32xi32>
    %259 = arith.shrsi %255, %258 : vector<16x32xi32>
    %c0_i32 = arith.constant 0 : i32
    %260 = vector.broadcast %c0_i32 : i32 to vector<16x32xi32>
    %c0_i32_65 = arith.constant 0 : i32
    %261 = vector.broadcast %c0_i32_65 : i32 to vector<16x32xi32>
    %262 = arith.cmpi eq, %259, %261 : vector<16x32xi32>
    %c0_66 = arith.constant 0 : index
    %263 = memref.load %arg1[%c0_66] : memref<2xi32, #tpu.memory_space<smem>>
    %264 = vector.broadcast %263 : i32 to vector<16x32xi32>
    %265 = arith.select %262, %264, %260 : vector<16x32xi1>, vector<16x32xi32>
    %c1_i32 = arith.constant 1 : i32
    %266 = vector.broadcast %c1_i32 : i32 to vector<16x32xi32>
    %267 = arith.cmpi eq, %259, %266 : vector<16x32xi32>
    %c1_67 = arith.constant 1 : index
    %268 = memref.load %arg1[%c1_67] : memref<2xi32, #tpu.memory_space<smem>>
    %269 = vector.broadcast %268 : i32 to vector<16x32xi32>
    %270 = arith.select %267, %269, %265 : vector<16x32xi1>, vector<16x32xi32>
    %271 = arith.cmpi slt, %257, %270 : vector<16x32xi32>
    %272 = arith.extui %271 : vector<16x32xi1> to vector<16x32xi32>
    %273 = arith.sitofp %272 : vector<16x32xi32> to vector<16x32xf32>
    %c0_i32_68 = arith.constant 0 : i32
    %274 = vector.broadcast %c0_i32_68 : i32 to vector<16x32xi32>
    %275 = arith.cmpi sgt, %270, %274 : vector<16x32xi32>
    %c1_i32_69 = arith.constant 1 : i32
    %276 = vector.broadcast %c1_i32_69 : i32 to vector<16x32xi32>
    %277 = arith.subi %270, %276 : vector<16x32xi32>
    %c7_i32_70 = arith.constant 7 : i32
    %278 = vector.broadcast %c7_i32_70 : i32 to vector<16x32xi32>
    %279 = arith.select %275, %277, %278 : vector<16x32xi1>, vector<16x32xi32>
    %280 = arith.cmpi eq, %257, %279 : vector<16x32xi32>
    %281 = arith.extui %280 : vector<16x32xi1> to vector<16x32xi32>
    %282 = arith.sitofp %281 : vector<16x32xi32> to vector<16x32xf32>
    %283 = tpu.iota {dimensions = array<i32: 0>} : vector<2x16xi32>
    %284 = tpu.iota {dimensions = array<i32: 1>} : vector<2x16xi32>
    %c3_i32_71 = arith.constant 3 : i32
    %285 = vector.broadcast %c3_i32_71 : i32 to vector<2x16xi32>
    %286 = arith.shrsi %284, %285 : vector<2x16xi32>
    %287 = arith.cmpi eq, %283, %286 : vector<2x16xi32>
    %288 = arith.extui %287 : vector<2x16xi1> to vector<2x16xi32>
    %289 = arith.sitofp %288 : vector<2x16xi32> to vector<2x16xf32>
    %290 = arith.mulf %282, %254 : vector<16x32xf32>
    %cst_72 = arith.constant dense<0.000000e+00> : vector<2x32xf32>
    %291 = tpu.matmul %289, %290, %cst_72 {dimension_numbers = #tpu.dot_dimension_numbers<[1], [0], [0], [1], [0, 0, 1, 1], [], []>} : vector<2x16xf32>, vector<16x32xf32>, vector<2x32xf32> -> vector<2x32xf32>
    %c0_73 = arith.constant 0 : index
    %c0_74 = arith.constant 0 : index
    %292 = vector.load %arg5[%c0_73, %c0_74] : memref<136x128xf32, #tpu.memory_space<vmem>>, vector<32x128xf32>
    %c32 = arith.constant 32 : index
    %c0_75 = arith.constant 0 : index
    %293 = vector.load %arg5[%c32, %c0_75] : memref<136x128xf32, #tpu.memory_space<vmem>>, vector<32x128xf32>
    %c64 = arith.constant 64 : index
    %c0_76 = arith.constant 0 : index
    %294 = vector.load %arg5[%c64, %c0_76] : memref<136x128xf32, #tpu.memory_space<vmem>>, vector<32x128xf32>
    %c96 = arith.constant 96 : index
    %c0_77 = arith.constant 0 : index
    %295 = vector.load %arg5[%c96, %c0_77] : memref<136x128xf32, #tpu.memory_space<vmem>>, vector<32x128xf32>
    %c128 = arith.constant 128 : index
    %c0_78 = arith.constant 0 : index
    %296 = vector.load %arg5[%c128, %c0_78] : memref<136x128xf32, #tpu.memory_space<vmem>>, vector<4x128xf32>
    %297 = vector.extract_strided_slice %292 {offsets = [0, 0], sizes = [32, 96], strides = [1, 1]} : vector<32x128xf32> to vector<32x96xf32>
    %298 = vector.extract_strided_slice %292 {offsets = [0, 96], sizes = [32, 2], strides = [1, 1]} : vector<32x128xf32> to vector<32x2xf32>
    %299 = vector.extract_strided_slice %293 {offsets = [0, 0], sizes = [32, 96], strides = [1, 1]} : vector<32x128xf32> to vector<32x96xf32>
    %300 = vector.extract_strided_slice %294 {offsets = [0, 0], sizes = [32, 96], strides = [1, 1]} : vector<32x128xf32> to vector<32x96xf32>
    %301 = vector.extract_strided_slice %295 {offsets = [0, 0], sizes = [32, 96], strides = [1, 1]} : vector<32x128xf32> to vector<32x96xf32>
    %302 = vector.extract_strided_slice %296 {offsets = [0, 0], sizes = [1, 96], strides = [1, 1]} : vector<4x128xf32> to vector<1x96xf32>
    %303 = vector.extract_strided_slice %296 {offsets = [1, 0], sizes = [1, 96], strides = [1, 1]} : vector<4x128xf32> to vector<1x96xf32>
    %304 = vector.extract_strided_slice %296 {offsets = [2, 0], sizes = [1, 96], strides = [1, 1]} : vector<4x128xf32> to vector<1x96xf32>
    %305 = vector.extract_strided_slice %296 {offsets = [3, 0], sizes = [1, 96], strides = [1, 1]} : vector<4x128xf32> to vector<1x96xf32>
    %cst_79 = arith.constant dense<0.000000e+00> : vector<2x96xf32>
    %306 = tpu.matmul %291, %297, %cst_79 {dimension_numbers = #tpu.dot_dimension_numbers<[1], [0], [0], [1], [0, 0, 1, 1], [], []>} : vector<2x32xf32>, vector<32x96xf32>, vector<2x96xf32> -> vector<2x96xf32>
    %307 = vector.broadcast %302 : vector<1x96xf32> to vector<2x96xf32>
    %308 = arith.addf %306, %307 : vector<2x96xf32>
    %cst_80 = arith.constant dense<0.000000e+00> : vector<16x96xf32>
    %309 = tpu.matmul %254, %299, %cst_80 {dimension_numbers = #tpu.dot_dimension_numbers<[1], [0], [0], [1], [0, 0, 1, 1], [], []>} : vector<16x32xf32>, vector<32x96xf32>, vector<16x96xf32> -> vector<16x96xf32>
    %310 = vector.broadcast %303 : vector<1x96xf32> to vector<16x96xf32>
    %311 = arith.addf %309, %310 : vector<16x96xf32>
    %cst_81 = arith.constant dense<0.000000e+00> : vector<2x96xf32>
    %312 = tpu.matmul %291, %301, %cst_81 {dimension_numbers = #tpu.dot_dimension_numbers<[1], [0], [0], [1], [0, 0, 1, 1], [], []>} : vector<2x32xf32>, vector<32x96xf32>, vector<2x96xf32> -> vector<2x96xf32>
    %313 = tpu.iota {dimensions = array<i32: 0>} : vector<16x96xi32>
    %c3_i32_82 = arith.constant 3 : i32
    %314 = vector.broadcast %c3_i32_82 : i32 to vector<16x96xi32>
    %315 = arith.shrsi %313, %314 : vector<16x96xi32>
    %cst_83 = arith.constant 0.000000e+00 : f32
    %316 = vector.broadcast %cst_83 : f32 to vector<16x96xf32>
    %c0_i32_84 = arith.constant 0 : i32
    %317 = vector.broadcast %c0_i32_84 : i32 to vector<16x96xi32>
    %318 = arith.cmpi eq, %315, %317 : vector<16x96xi32>
    %319 = vector.extract_strided_slice %308 {offsets = [0, 0], sizes = [1, 96], strides = [1, 1]} : vector<2x96xf32> to vector<1x96xf32>
    %320 = vector.shape_cast %319 : vector<1x96xf32> to vector<1x96xf32>
    %321 = vector.broadcast %320 : vector<1x96xf32> to vector<16x96xf32>
    %322 = arith.select %318, %321, %316 : vector<16x96xi1>, vector<16x96xf32>
    %c1_i32_85 = arith.constant 1 : i32
    %323 = vector.broadcast %c1_i32_85 : i32 to vector<16x96xi32>
    %324 = arith.cmpi eq, %315, %323 : vector<16x96xi32>
    %325 = vector.extract_strided_slice %308 {offsets = [1, 0], sizes = [1, 96], strides = [1, 1]} : vector<2x96xf32> to vector<1x96xf32>
    %326 = vector.shape_cast %325 : vector<1x96xf32> to vector<1x96xf32>
    %327 = vector.broadcast %326 : vector<1x96xf32> to vector<16x96xf32>
    %328 = arith.select %324, %327, %322 : vector<16x96xi1>, vector<16x96xf32>
    %329 = vector.extract_strided_slice %328 {offsets = [0, 0], sizes = [16, 32], strides = [1, 1]} : vector<16x96xf32> to vector<16x32xf32>
    %330 = vector.extract_strided_slice %311 {offsets = [0, 0], sizes = [16, 32], strides = [1, 1]} : vector<16x96xf32> to vector<16x32xf32>
    %331 = arith.addf %329, %330 : vector<16x32xf32>
    %332 = arith.negf %331 : vector<16x32xf32>
    %333 = math.exp %332 : vector<16x32xf32>
    %cst_86 = arith.constant 1.000000e+00 : f32
    %334 = vector.broadcast %cst_86 : f32 to vector<16x32xf32>
    %335 = arith.addf %334, %333 : vector<16x32xf32>
    %336 = arith.divf %334, %335 : vector<16x32xf32>
    %337 = vector.extract_strided_slice %304 {offsets = [0, 0], sizes = [1, 32], strides = [1, 1]} : vector<1x96xf32> to vector<1x32xf32>
    %338 = vector.broadcast %337 : vector<1x32xf32> to vector<16x32xf32>
    %339 = arith.mulf %336, %338 : vector<16x32xf32>
    %cst_87 = arith.constant dense<0.000000e+00> : vector<16xf32>
    %340 = vector.multi_reduction <add>, %339, %cst_87 [1] : vector<16x32xf32> to vector<16xf32>
    %341 = vector.shape_cast %340 : vector<16xf32> to vector<16x1xf32>
    %342 = vector.broadcast %341 : vector<16x1xf32> to vector<16x32xf32>
    %343 = arith.mulf %342, %273 : vector<16x32xf32>
    %344 = arith.mulf %343, %254 : vector<16x32xf32>
    %cst_88 = arith.constant dense<0.000000e+00> : vector<2x32xf32>
    %345 = tpu.matmul %289, %344, %cst_88 {dimension_numbers = #tpu.dot_dimension_numbers<[1], [0], [0], [1], [0, 0, 1, 1], [], []>} : vector<2x16xf32>, vector<16x32xf32>, vector<2x32xf32> -> vector<2x32xf32>
    %346 = vector.extract_strided_slice %300 {offsets = [0, 0], sizes = [32, 32], strides = [1, 1]} : vector<32x96xf32> to vector<32x32xf32>
    %cst_89 = arith.constant dense<0.000000e+00> : vector<2x32xf32>
    %347 = tpu.matmul %345, %346, %cst_89 {dimension_numbers = #tpu.dot_dimension_numbers<[1], [0], [0], [1], [0, 0, 1, 1], [], []>} : vector<2x32xf32>, vector<32x32xf32>, vector<2x32xf32> -> vector<2x32xf32>
    %348 = vector.extract_strided_slice %312 {offsets = [0, 0], sizes = [2, 32], strides = [1, 1]} : vector<2x96xf32> to vector<2x32xf32>
    %349 = arith.addf %347, %348 : vector<2x32xf32>
    %350 = vector.extract_strided_slice %305 {offsets = [0, 0], sizes = [1, 32], strides = [1, 1]} : vector<1x96xf32> to vector<1x32xf32>
    %351 = vector.broadcast %350 : vector<1x32xf32> to vector<2x32xf32>
    %352 = arith.addf %349, %351 : vector<2x32xf32>
    %353 = vector.extract_strided_slice %328 {offsets = [0, 32], sizes = [16, 32], strides = [1, 1]} : vector<16x96xf32> to vector<16x32xf32>
    %354 = vector.extract_strided_slice %311 {offsets = [0, 32], sizes = [16, 32], strides = [1, 1]} : vector<16x96xf32> to vector<16x32xf32>
    %355 = arith.addf %353, %354 : vector<16x32xf32>
    %356 = arith.negf %355 : vector<16x32xf32>
    %357 = math.exp %356 : vector<16x32xf32>
    %cst_90 = arith.constant 1.000000e+00 : f32
    %358 = vector.broadcast %cst_90 : f32 to vector<16x32xf32>
    %359 = arith.addf %358, %357 : vector<16x32xf32>
    %360 = arith.divf %358, %359 : vector<16x32xf32>
    %361 = vector.extract_strided_slice %304 {offsets = [0, 32], sizes = [1, 32], strides = [1, 1]} : vector<1x96xf32> to vector<1x32xf32>
    %362 = vector.broadcast %361 : vector<1x32xf32> to vector<16x32xf32>
    %363 = arith.mulf %360, %362 : vector<16x32xf32>
    %cst_91 = arith.constant dense<0.000000e+00> : vector<16xf32>
    %364 = vector.multi_reduction <add>, %363, %cst_91 [1] : vector<16x32xf32> to vector<16xf32>
    %365 = vector.shape_cast %364 : vector<16xf32> to vector<16x1xf32>
    %366 = vector.broadcast %365 : vector<16x1xf32> to vector<16x32xf32>
    %367 = arith.mulf %366, %273 : vector<16x32xf32>
    %368 = arith.mulf %367, %254 : vector<16x32xf32>
    %cst_92 = arith.constant dense<0.000000e+00> : vector<2x32xf32>
    %369 = tpu.matmul %289, %368, %cst_92 {dimension_numbers = #tpu.dot_dimension_numbers<[1], [0], [0], [1], [0, 0, 1, 1], [], []>} : vector<2x16xf32>, vector<16x32xf32>, vector<2x32xf32> -> vector<2x32xf32>
    %370 = vector.extract_strided_slice %300 {offsets = [0, 32], sizes = [32, 32], strides = [1, 1]} : vector<32x96xf32> to vector<32x32xf32>
    %cst_93 = arith.constant dense<0.000000e+00> : vector<2x32xf32>
    %371 = tpu.matmul %369, %370, %cst_93 {dimension_numbers = #tpu.dot_dimension_numbers<[1], [0], [0], [1], [0, 0, 1, 1], [], []>} : vector<2x32xf32>, vector<32x32xf32>, vector<2x32xf32> -> vector<2x32xf32>
    %372 = vector.extract_strided_slice %312 {offsets = [0, 32], sizes = [2, 32], strides = [1, 1]} : vector<2x96xf32> to vector<2x32xf32>
    %373 = arith.addf %371, %372 : vector<2x32xf32>
    %374 = vector.extract_strided_slice %305 {offsets = [0, 32], sizes = [1, 32], strides = [1, 1]} : vector<1x96xf32> to vector<1x32xf32>
    %375 = vector.broadcast %374 : vector<1x32xf32> to vector<2x32xf32>
    %376 = arith.addf %373, %375 : vector<2x32xf32>
    %377 = vector.extract_strided_slice %328 {offsets = [0, 64], sizes = [16, 32], strides = [1, 1]} : vector<16x96xf32> to vector<16x32xf32>
    %378 = vector.extract_strided_slice %311 {offsets = [0, 64], sizes = [16, 32], strides = [1, 1]} : vector<16x96xf32> to vector<16x32xf32>
    %379 = arith.addf %377, %378 : vector<16x32xf32>
    %380 = arith.negf %379 : vector<16x32xf32>
    %381 = math.exp %380 : vector<16x32xf32>
    %cst_94 = arith.constant 1.000000e+00 : f32
    %382 = vector.broadcast %cst_94 : f32 to vector<16x32xf32>
    %383 = arith.addf %382, %381 : vector<16x32xf32>
    %384 = arith.divf %382, %383 : vector<16x32xf32>
    %385 = vector.extract_strided_slice %304 {offsets = [0, 64], sizes = [1, 32], strides = [1, 1]} : vector<1x96xf32> to vector<1x32xf32>
    %386 = vector.broadcast %385 : vector<1x32xf32> to vector<16x32xf32>
    %387 = arith.mulf %384, %386 : vector<16x32xf32>
    %cst_95 = arith.constant dense<0.000000e+00> : vector<16xf32>
    %388 = vector.multi_reduction <add>, %387, %cst_95 [1] : vector<16x32xf32> to vector<16xf32>
    %389 = vector.shape_cast %388 : vector<16xf32> to vector<16x1xf32>
    %390 = vector.broadcast %389 : vector<16x1xf32> to vector<16x32xf32>
    %391 = arith.mulf %390, %273 : vector<16x32xf32>
    %392 = arith.mulf %391, %254 : vector<16x32xf32>
    %cst_96 = arith.constant dense<0.000000e+00> : vector<2x32xf32>
    %393 = tpu.matmul %289, %392, %cst_96 {dimension_numbers = #tpu.dot_dimension_numbers<[1], [0], [0], [1], [0, 0, 1, 1], [], []>} : vector<2x16xf32>, vector<16x32xf32>, vector<2x32xf32> -> vector<2x32xf32>
    %394 = vector.extract_strided_slice %300 {offsets = [0, 64], sizes = [32, 32], strides = [1, 1]} : vector<32x96xf32> to vector<32x32xf32>
    %cst_97 = arith.constant dense<0.000000e+00> : vector<2x32xf32>
    %395 = tpu.matmul %393, %394, %cst_97 {dimension_numbers = #tpu.dot_dimension_numbers<[1], [0], [0], [1], [0, 0, 1, 1], [], []>} : vector<2x32xf32>, vector<32x32xf32>, vector<2x32xf32> -> vector<2x32xf32>
    %396 = vector.extract_strided_slice %312 {offsets = [0, 64], sizes = [2, 32], strides = [1, 1]} : vector<2x96xf32> to vector<2x32xf32>
    %397 = arith.addf %395, %396 : vector<2x32xf32>
    %398 = vector.extract_strided_slice %305 {offsets = [0, 64], sizes = [1, 32], strides = [1, 1]} : vector<1x96xf32> to vector<1x32xf32>
    %399 = vector.broadcast %398 : vector<1x32xf32> to vector<2x32xf32>
    %400 = arith.addf %397, %399 : vector<2x32xf32>
    %cst_98 = arith.constant dense<0.000000e+00> : vector<2x2xf32>
    %401 = tpu.matmul %352, %298, %cst_98 {dimension_numbers = #tpu.dot_dimension_numbers<[1], [0], [0], [1], [0, 0, 1, 1], [], []>} : vector<2x32xf32>, vector<32x2xf32>, vector<2x2xf32> -> vector<2x2xf32>
    %cst_99 = arith.constant dense<0xFF800000> : vector<2xf32>
    %402 = vector.multi_reduction <maximumf>, %401, %cst_99 [1] : vector<2x2xf32> to vector<2xf32>
    %403 = vector.shape_cast %402 : vector<2xf32> to vector<2x1xf32>
    %404 = vector.broadcast %403 : vector<2x1xf32> to vector<2x2xf32>
    %405 = arith.subf %401, %404 : vector<2x2xf32>
    %406 = math.exp %405 : vector<2x2xf32>
    %cst_100 = arith.constant dense<0.000000e+00> : vector<2xf32>
    %407 = vector.multi_reduction <add>, %406, %cst_100 [1] : vector<2x2xf32> to vector<2xf32>
    %408 = vector.shape_cast %407 : vector<2xf32> to vector<2x1xf32>
    %409 = tpu.reciprocal %408 {approx = true} : vector<2x1xf32> -> vector<2x1xf32>
    %410 = vector.broadcast %409 : vector<2x1xf32> to vector<2x2xf32>
    %411 = arith.mulf %406, %410 : vector<2x2xf32>
    %cst_101 = arith.constant 0.000000e+00 : f32
    %412 = vector.broadcast %cst_101 : f32 to vector<2x30xf32>
    %413 = tpu.concatenate %411, %412 in 1 : vector<2x2xf32>, vector<2x30xf32> -> vector<2x32xf32>
    %c0_102 = arith.constant 0 : index
    %c0_103 = arith.constant 0 : index
    %414 = vector.load %arg6[%c0_102, %c0_103] : memref<24x32xf32, #tpu.memory_space<vmem>>, vector<16x32xf32>
    tpu.vector_store %arg6[%c0_102, %c0_103], %254 {strides = array<i32>} : memref<24x32xf32, #tpu.memory_space<vmem>>, vector<16x32xf32>,
    %c16 = arith.constant 16 : index
    %c0_104 = arith.constant 0 : index
    %415 = vector.load %arg6[%c16, %c0_104] : memref<24x32xf32, #tpu.memory_space<vmem>>, vector<2x32xf32>
    tpu.vector_store %arg6[%c16, %c0_104], %376 {strides = array<i32>} : memref<24x32xf32, #tpu.memory_space<vmem>>, vector<2x32xf32>,
    %c18 = arith.constant 18 : index
    %c0_105 = arith.constant 0 : index
    %416 = vector.load %arg6[%c18, %c0_105] : memref<24x32xf32, #tpu.memory_space<vmem>>, vector<2x32xf32>
    tpu.vector_store %arg6[%c18, %c0_105], %400 {strides = array<i32>} : memref<24x32xf32, #tpu.memory_space<vmem>>, vector<2x32xf32>,
    %c20 = arith.constant 20 : index
    %c0_106 = arith.constant 0 : index
    %417 = vector.load %arg6[%c20, %c0_106] : memref<24x32xf32, #tpu.memory_space<vmem>>, vector<2x32xf32>
    tpu.vector_store %arg6[%c20, %c0_106], %413 {strides = array<i32>} : memref<24x32xf32, #tpu.memory_space<vmem>>, vector<2x32xf32>,
    %cst_107 = arith.constant 0.000000e+00 : f32
    %418 = vector.broadcast %cst_107 : f32 to vector<2x32xf32>
    %c22 = arith.constant 22 : index
    %c0_108 = arith.constant 0 : index
    %419 = vector.load %arg6[%c22, %c0_108] : memref<24x32xf32, #tpu.memory_space<vmem>>, vector<2x32xf32>
    tpu.vector_store %arg6[%c22, %c0_108], %418 {strides = array<i32>} : memref<24x32xf32, #tpu.memory_space<vmem>>, vector<2x32xf32>,
    return
  }
  func.func @transform_0(%arg0: i32, %arg1: memref<2xi32, #tpu.memory_space<smem>>) -> (i32, i32) {
    %c0_i32 = arith.constant 0 : i32
    %c0_i32_0 = arith.constant 0 : i32
    %c0_i32_1 = arith.constant 0 : i32
    return %c0_i32, %c0_i32_0 : i32, i32
  }
  func.func @transform_1(%arg0: i32, %arg1: memref<2xi32, #tpu.memory_space<smem>>) -> (i32, i32, i32) {
    %c0_i32 = arith.constant 0 : i32
    %c0_i32_0 = arith.constant 0 : i32
    %c0_i32_1 = arith.constant 0 : i32
    %c0_i32_2 = arith.constant 0 : i32
    return %c0_i32, %c0_i32_0, %c0_i32_1 : i32, i32, i32
  }
  func.func @transform_2(%arg0: i32, %arg1: memref<2xi32, #tpu.memory_space<smem>>) -> (i32, i32) {
    %c0_i32 = arith.constant 0 : i32
    %c0_i32_0 = arith.constant 0 : i32
    %c0_i32_1 = arith.constant 0 : i32
    return %c0_i32, %c0_i32_0 : i32, i32
  }
  func.func @transform_3(%arg0: i32, %arg1: memref<2xi32, #tpu.memory_space<smem>>) -> (i32, i32) {
    %c0_i32 = arith.constant 0 : i32
    %c0_i32_0 = arith.constant 0 : i32
    %c0_i32_1 = arith.constant 0 : i32
    return %c0_i32, %c0_i32_0 : i32, i32
  }
  func.func @transform_4(%arg0: i32, %arg1: memref<2xi32, #tpu.memory_space<smem>>) -> (i32, i32) {
    %c0_i32 = arith.constant 0 : i32
    %c0_i32_0 = arith.constant 0 : i32
    %c0_i32_1 = arith.constant 0 : i32
    return %c0_i32, %c0_i32_0 : i32, i32
  }
}

</mosaic_0001>

<llo_original>
// kernel: tar_gnn_forward.1
$region0: #{tar_gnn_forward.1}
  #allocation0 [shape = 'u32[]', space=smem, size = 0x4, offset = 0x4, fixed_abs, tag = 'smem constant byte address 0x4 - core index']
  #allocation1 [shape = 'u32[144,128]{1,0:T(1,128)}', space=vmem, size = 0x12000, scoped, tag = 'internal scratch']
  #allocation2 [shape = 's32[1]{0}', space=sflag, size = 0x4, scoped, tag = 'scoped memory for tar_gnn_forward.1']
  #allocation3 [shape = 'u8[512]{0}', space=smem, size = 0x200, scoped, tag = 'prefetched SMEM operand 0']
  %s0 = inlined_call_operand.vmem [shape: s32[2], index: 0, kind: input, shape index: {}]
  %s1 = inlined_call_operand.vmem [shape: f32[16,32], index: 1, kind: input, shape index: {}]
  %s2 = inlined_call_operand.vmem [shape: f32[2,72,128], index: 2, kind: input, shape index: {}]
  %s3 = inlined_call_operand.vmem [shape: f32[128,64], index: 3, kind: input, shape index: {}]
  %s4 = inlined_call_operand.vmem [shape: f32[136,128], index: 4, kind: input, shape index: {}]
  %s5 = inlined_call_operand.vmem [shape: f32[24,32], index: 5, kind: output, shape index: {}]
  %s6 = sld [smem:[#allocation0]]
  $region26: #{tar_gnn_forward.1} parent=0
    _
  %s8 = ssub.s32 1, %s6
  %s9 = scalar_select 0, %s8, %s6
  %s10 = sshll.u32 %s0, 4
  %s11 = int_to_ptr.vmem [resolvable:$true] %s10
  %13 = dma.vmem_to_smem %s11, 16, [#allocation3], [#allocation2]
  %14 = dma.done [#allocation2], 16
  %15 = sfence
  // Predicated region
  $region2: #{tar_gnn_forward.1} parent=0 // pred_check
    _
  $region3: #{tar_gnn_forward.1} parent=0 // pred_check_branch
    %17 = sbr.rel (0) target = $region5
  $region4: #{tar_gnn_forward.1} parent=0 // pred_region
    _
  $region5: #{tar_gnn_forward.1} parent=0 // pred_fallthru
    _
  // Predicated region
  $region6: #{tar_gnn_forward.1} parent=0 // pred_check
    _
  $region7: #{tar_gnn_forward.1} parent=0 // pred_check_branch
    %19 = sbr.rel (0) target = $region9
  $region8: #{tar_gnn_forward.1} parent=0 // pred_region
    _
  $region9: #{tar_gnn_forward.1} parent=0 // pred_fallthru
    _
  // Predicated region
  $region10: #{tar_gnn_forward.1} parent=0 // pred_check
    _
  $region11: #{tar_gnn_forward.1} parent=0 // pred_check_branch
    %21 = sbr.rel (0) target = $region13
  $region12: #{tar_gnn_forward.1} parent=0 // pred_region
    _
  $region13: #{tar_gnn_forward.1} parent=0 // pred_fallthru
    _
  // Predicated region
  $region14: #{tar_gnn_forward.1} parent=0 // pred_check
    _
  $region15: #{tar_gnn_forward.1} parent=0 // pred_check_branch
    %23 = sbr.rel (0) target = $region17
  $region16: #{tar_gnn_forward.1} parent=0 // pred_region
    _
  $region17: #{tar_gnn_forward.1} parent=0 // pred_fallthru
    _
  %v24 = vld [vmem:[%s1] sm:$0xff]
  %v25 = vld [vmem:[%s1 + $0x8] sm:$0xff]
  %v26 = vlaneseq
  %v27 = vshrl.u32 %v26, 7
  %v28 = vadd.s32 %v27, 8
  %v29 = vshra.s32 %v27, 3
  %v30 = vshra.s32 %v28, 3
  %v31 = vlaneseq
  %v32 = vand.u32 %v31, 127
  %v33 = vshra.s32 %v32, 3
  %vm34 = vcmp.eq.s32.totalorder %v29, %v33
  %vm35 = vcmp.eq.s32.totalorder %v30, %v33
  %v36 = vld [vmem:[%s3] sm:$0xff]
  %v37 = vld [vmem:[%s3 + $0x8] sm:$0xff]
  %v38 = vld [vmem:[%s3 + $0x10] sm:$0xff]
  %v39 = vld [vmem:[%s3 + $0x18] sm:$0xff]
  %v40 = vld [vmem:[%s3 + $0x20] sm:$0xff]
  %v41 = vld [vmem:[%s3 + $0x28] sm:$0xff]
  %v42 = vld [vmem:[%s3 + $0x30] sm:$0xff]
  %v43 = vld [vmem:[%s3 + $0x38] sm:$0xff]
  %v44 = vld [vmem:[%s3 + $0x40] sm:$0xff]
  %v45 = vld [vmem:[%s3 + $0x48] sm:$0xff]
  %v46 = vld [vmem:[%s3 + $0x50] sm:$0xff]
  %v47 = vld [vmem:[%s3 + $0x58] sm:$0xff]
  %v48 = vld [vmem:[%s3 + $0x60] sm:$0xff]
  %v49 = vld [vmem:[%s3 + $0x68] sm:$0xff]
  %v50 = vld [vmem:[%s3 + $0x70] sm:$0xff]
  %v51 = vld [vmem:[%s3 + $0x78] sm:$0xff]
  %v52 = vld [vmem:[%s2] sm:$0xff]
  %v53 = vld [vmem:[%s2 + $0x8] sm:$0xff]
  %v54 = vld [vmem:[%s2 + $0x10] sm:$0xff]
  %v55 = vld [vmem:[%s2 + $0x18] sm:$0xff]
  %v56 = vld [vmem:[%s2 + $0x20] sm:$0xff]
  %v57 = vld [vmem:[%s2 + $0x28] sm:$0xff]
  %v58 = vld [vmem:[%s2 + $0x30] sm:$0xff]
  %v59 = vld [vmem:[%s2 + $0x38] sm:$0xff]
  %v60 = vld [vmem:[%s2 + $0x40] sm:$0xff]
  %v61 = vlaneseq
  %v62 = vshrl.u32 %v61, 7
  %v63 = vsub.s32 0, %v62
  %v64 = vrot.slane %v60, %v63
  %vm65 = vcmask 261120
  %v67 = vsel %vm65, %v24, 0
  %v70 = vsel %vm65, %v25, 0
  %72 = vmatprep.subr.mxu0 0.0
  %73 = vmatpush1.msra.mxu0 %v52
  %74 = vmatprep.subr.mxu0 0.0
  %75 = vmatpush1.msra.mxu0 %v53
  %76 = vmatprep.subr.mxu0 0.0
  %77 = vmatpush1.msra.mxu0 %v54
  %78 = vmatprep.subr.mxu0 0.0
  %79 = vmatpush1.msra.mxu0 %v55
  %80 = vmatprep.subr.mxu0 0.0
  %81 = vmatpush1.msra.mxu0 0.0
  %82 = vmatprep.subr.mxu0 0.0
  %83 = vmatpush1.msra.mxu0 0.0
  %84 = vmatprep.subr.mxu0 0.0
  %85 = vmatpush1.msra.mxu0 0.0
  %86 = vmatprep.subr.mxu0 0.0
  %87 = vmatpush1.msra.mxu0 0.0
  %88 = vmatprep.subr.mxu0 0.0
  %89 = vmatpush1.msra.mxu0 0.0
  %90 = vmatprep.subr.mxu0 0.0
  %91 = vmatpush1.msra.mxu0 0.0
  %92 = vmatprep.subr.mxu0 0.0
  %93 = vmatpush1.msra.mxu0 0.0
  %94 = vmatprep.subr.mxu0 0.0
  %95 = vmatpush1.msra.mxu0 0.0
  %96 = vmatprep.subr.mxu0 0.0
  %97 = vmatpush1.msra.mxu0 0.0
  %98 = vmatprep.subr.mxu0 0.0
  %99 = vmatpush1.msra.mxu0 0.0
  %100 = vmatprep.subr.mxu0 0.0
  %101 = vmatpush1.msra.mxu0 0.0
  %102 = vmatprep.subr.mxu0 0.0
  %103 = vmatpush1.msra.mxu0 0.0
  %104 = vmatprep.subr.mxu0 0.0
  %105 = vmatpush1.msra.mxu0 0.0
  %106 = vmatprep.subr.mxu0 0.0
  %107 = vmatpush1.msra.mxu0 0.0
  %108 = vmatprep.subr.mxu0 0.0
  %109 = vmatpush1.msra.mxu0 0.0
  %110 = vmatprep.subr.mxu0 0.0
  %111 = vmatpush1.msra.mxu0 0.0
  %112 = vmatprep.subr.mxu0 0.0
  %113 = vmatpush1.msra.mxu0 0.0
  %114 = vmatprep.subr.mxu0 0.0
  %115 = vmatpush1.msra.mxu0 0.0
  %116 = vmatprep.subr.mxu0 0.0
  %117 = vmatpush1.msra.mxu0 0.0
  %118 = vmatprep.subr.mxu0 0.0
  %119 = vmatpush1.msra.mxu0 0.0
  %120 = vmatprep.subr.mxu0 0.0
  %121 = vmatpush1.msra.mxu0 0.0
  %122 = vmatprep.subr.mxu0 0.0
  %123 = vmatpush1.msra.mxu0 0.0
  %124 = vmatprep.subr.mxu0 0.0
  %125 = vmatpush1.msra.mxu0 0.0
  %126 = vmatprep.subr.mxu0 0.0
  %127 = vmatpush1.msra.mxu0 0.0
  %128 = vmatprep.subr.mxu0 0.0
  %129 = vmatpush1.msra.mxu0 0.0
  %130 = vmatprep.subr.mxu0 0.0
  %131 = vmatpush1.msra.mxu0 0.0
  %132 = vmatprep.subr.mxu0 0.0
  %133 = vmatpush1.msra.mxu0 0.0
  %134 = vmatprep.subr.mxu0 0.0
  %135 = vmatpush1.msra.mxu0 0.0
  %136 = vmatprep.mubr.f32.mxu0 0.0
  %137 = vmatmul.mubr.f32.gmra.mrb[0].mxu0 %v67
  %v138 = vpop.f32.mrb[0].mxu0
  %v139 = vadd.f32 %v64, %v138
  %v140 = vpop.f32.mrb[0].mxu0
  %141 = vmatprep.mubr.f32.mxu0 0.0
  %142 = vmatmul.mubr.f32.gmra.mrb[0].mxu0 %v70
  %v143 = vpop.f32.mrb[0].mxu0
  %v144 = vadd.f32 %v64, %v143
  %v145 = vpop.f32.mrb[0].mxu0
  %146 = vdwg.mxu0
  %149 = vrot.lane.b32.xlu0 %v139, 96
  %v150 = vpop.permute.xlu0 %149
  %151 = vrot.lane.b32.xlu0 %v144, 96
  %v152 = vpop.permute.xlu0 %151
  %vm153 = vcmask 130048
  %v154 = vsel %vm153, %v139, 0
  %v156 = vsel %vm153, %v144, 0
  %v158 = vsel %vm153, %v150, 0
  %v160 = vsel %vm153, %v152, 0
  %162 = vmatprep.subr.mxu0 0.0
  %163 = vmatpush1.xpose.msra.mxu0 %v158
  %164 = vmatprep.subr.mxu0 0.0
  %165 = vmatpush1.xpose.msra.mxu0 %v160
  %166 = vmatprep.subr.mxu0 0.0
  %167 = vmatpush1.xpose.msra.mxu0 0.0
  %168 = vmatprep.subr.mxu0 0.0
  %169 = vmatpush1.xpose.msra.mxu0 0.0
  %170 = vmatprep.subr.mxu0 0.0
  %171 = vmatpush1.xpose.msra.mxu0 0.0
  %172 = vmatprep.subr.mxu0 0.0
  %173 = vmatpush1.xpose.msra.mxu0 0.0
  %174 = vmatprep.subr.mxu0 0.0
  %175 = vmatpush1.xpose.msra.mxu0 0.0
  %176 = vmatprep.subr.mxu0 0.0
  %177 = vmatpush1.xpose.msra.mxu0 0.0
  %178 = vmatprep.subr.mxu0 0.0
  %179 = vmatpush1.xpose.msra.mxu0 0.0
  %180 = vmatprep.subr.mxu0 0.0
  %181 = vmatpush1.xpose.msra.mxu0 0.0
  %182 = vmatprep.subr.mxu0 0.0
  %183 = vmatpush1.xpose.msra.mxu0 0.0
  %184 = vmatprep.subr.mxu0 0.0
  %185 = vmatpush1.xpose.msra.mxu0 0.0
  %186 = vmatprep.subr.mxu0 0.0
  %187 = vmatpush1.xpose.msra.mxu0 0.0
  %188 = vmatprep.subr.mxu0 0.0
  %189 = vmatpush1.xpose.msra.mxu0 0.0
  %190 = vmatprep.subr.mxu0 0.0
  %191 = vmatpush1.xpose.msra.mxu0 0.0
  %192 = vmatprep.subr.mxu0 0.0
  %193 = vmatpush1.xpose.msra.mxu0 0.0
  %194 = vmatprep.subr.mxu0 0.0
  %195 = vmatpush1.xpose.msra.mxu0 0.0
  %196 = vmatprep.subr.mxu0 0.0
  %197 = vmatpush1.xpose.msra.mxu0 0.0
  %198 = vmatprep.subr.mxu0 0.0
  %199 = vmatpush1.xpose.msra.mxu0 0.0
  %200 = vmatprep.subr.mxu0 0.0
  %201 = vmatpush1.xpose.msra.mxu0 0.0
  %202 = vmatprep.subr.mxu0 0.0
  %203 = vmatpush1.xpose.msra.mxu0 0.0
  %204 = vmatprep.subr.mxu0 0.0
  %205 = vmatpush1.xpose.msra.mxu0 0.0
  %206 = vmatprep.subr.mxu0 0.0
  %207 = vmatpush1.xpose.msra.mxu0 0.0
  %208 = vmatprep.subr.mxu0 0.0
  %209 = vmatpush1.xpose.msra.mxu0 0.0
  %210 = vmatprep.subr.mxu0 0.0
  %211 = vmatpush1.xpose.msra.mxu0 0.0
  %212 = vmatprep.subr.mxu0 0.0
  %213 = vmatpush1.xpose.msra.mxu0 0.0
  %214 = vmatprep.subr.mxu0 0.0
  %215 = vmatpush1.xpose.msra.mxu0 0.0
  %216 = vmatprep.subr.mxu0 0.0
  %217 = vmatpush1.xpose.msra.mxu0 0.0
  %218 = vmatprep.subr.mxu0 0.0
  %219 = vmatpush1.xpose.msra.mxu0 0.0
  %220 = vmatprep.subr.mxu0 0.0
  %221 = vmatpush1.xpose.msra.mxu0 0.0
  %222 = vmatprep.subr.mxu0 0.0
  %223 = vmatpush1.xpose.msra.mxu0 0.0
  %224 = vmatprep.subr.mxu0 0.0
  %225 = vmatpush1.xpose.msra.mxu0 0.0
  %226 = vmatprep.mubr.f32.mxu0 0.0
  %227 = vmatmul.mubr.f32.gmra.mrb[0].mxu0 %v154
  %v228 = vpop.f32.mrb[0].mxu0
  %v229 = vadd.f32 0.0, %v228
  %v230 = vpop.f32.mrb[0].mxu0
  %231 = vmatprep.mubr.f32.mxu0 0.0
  %232 = vmatmul.mubr.f32.gmra.mrb[0].mxu0 %v156
  %v233 = vpop.f32.mrb[0].mxu0
  %v234 = vadd.f32 0.0, %v233
  %v235 = vpop.f32.mrb[0].mxu0
  %236 = vdwg.mxu0
  %v237 = vsel %vm34, %v229, -1e+30
  %v238 = vsel %vm35, %v234, -1e+30
  %v239 = vsel %vm153, %v237, -inf
  %240 = vmax.xlane.f32.xlu0 %v239
  %v241 = vpop.xlane.xlu0 %240
  %v242 = vsel %vm153, %v238, -inf
  %243 = vmax.xlane.f32.xlu0 %v242
  %v244 = vpop.xlane.xlu0 %243
  %v245 = vsub.f32 %v237, %v241
  %v246 = vsub.f32 %v238, %v244
  %v247 = vmul.f32 %v245, 1.442695
  %v248 = vpow.pop %v247
  %v249 = vmul.f32 %v246, 1.442695
  %v250 = vpow.pop %v249
  %v251 = vsel %vm153, %v248, 0.0
  %252 = vadd.xlane.f32.xlu0 %v251
  %v253 = vpop.xlane.xlu0 %252
  %v254 = vsel %vm153, %v250, 0.0
  %255 = vadd.xlane.f32.xlu0 %v254
  %v256 = vpop.xlane.xlu0 %255
  %v257 = vrcp.pop %v253
  %v258 = vrcp.pop %v256
  %v259 = vmul.f32 %v248, %v257
  %v260 = vmul.f32 %v250, %v258
  %261 = vrot.lane.b32.xlu0 %v139, 64
  %v262 = vpop.permute.xlu0 %261
  %263 = vrot.lane.b32.xlu0 %v144, 64
  %v264 = vpop.permute.xlu0 %263
  %v268 = vsel %vm153, %v259, 0
  %v271 = vsel %vm153, %v260, 0
  %273 = vmatprep.subr.mxu0 0.0
  %274 = vmatpush1.msra.mxu0 %v262
  %275 = vmatprep.subr.mxu0 0.0
  %276 = vmatpush1.msra.mxu0 %v264
  %277 = vmatprep.subr.mxu0 0.0
  %278 = vmatpush1.msra.mxu0 0.0
  %279 = vmatprep.subr.mxu0 0.0
  %280 = vmatpush1.msra.mxu0 0.0
  %281 = vmatprep.subr.mxu0 0.0
  %282 = vmatpush1.msra.mxu0 0.0
  %283 = vmatprep.subr.mxu0 0.0
  %284 = vmatpush1.msra.mxu0 0.0
  %285 = vmatprep.subr.mxu0 0.0
  %286 = vmatpush1.msra.mxu0 0.0
  %287 = vmatprep.subr.mxu0 0.0
  %288 = vmatpush1.msra.mxu0 0.0
  %289 = vmatprep.subr.mxu0 0.0
  %290 = vmatpush1.msra.mxu0 0.0
  %291 = vmatprep.subr.mxu0 0.0
  %292 = vmatpush1.msra.mxu0 0.0
  %293 = vmatprep.subr.mxu0 0.0
  %294 = vmatpush1.msra.mxu0 0.0
  %295 = vmatprep.subr.mxu0 0.0
  %296 = vmatpush1.msra.mxu0 0.0
  %297 = vmatprep.subr.mxu0 0.0
  %298 = vmatpush1.msra.mxu0 0.0
  %299 = vmatprep.subr.mxu0 0.0
  %300 = vmatpush1.msra.mxu0 0.0
  %301 = vmatprep.subr.mxu0 0.0
  %302 = vmatpush1.msra.mxu0 0.0
  %303 = vmatprep.subr.mxu0 0.0
  %304 = vmatpush1.msra.mxu0 0.0
  %305 = vmatprep.subr.mxu0 0.0
  %306 = vmatpush1.msra.mxu0 0.0
  %307 = vmatprep.subr.mxu0 0.0
  %308 = vmatpush1.msra.mxu0 0.0
  %309 = vmatprep.subr.mxu0 0.0
  %310 = vmatpush1.msra.mxu0 0.0
  %311 = vmatprep.subr.mxu0 0.0
  %312 = vmatpush1.msra.mxu0 0.0
  %313 = vmatprep.subr.mxu0 0.0
  %314 = vmatpush1.msra.mxu0 0.0
  %315 = vmatprep.subr.mxu0 0.0
  %316 = vmatpush1.msra.mxu0 0.0
  %317 = vmatprep.subr.mxu0 0.0
  %318 = vmatpush1.msra.mxu0 0.0
  %319 = vmatprep.subr.mxu0 0.0
  %320 = vmatpush1.msra.mxu0 0.0
  %321 = vmatprep.subr.mxu0 0.0
  %322 = vmatpush1.msra.mxu0 0.0
  %323 = vmatprep.subr.mxu0 0.0
  %324 = vmatpush1.msra.mxu0 0.0
  %325 = vmatprep.subr.mxu0 0.0
  %326 = vmatpush1.msra.mxu0 0.0
  %327 = vmatprep.subr.mxu0 0.0
  %328 = vmatpush1.msra.mxu0 0.0
  %329 = vmatprep.subr.mxu0 0.0
  %330 = vmatpush1.msra.mxu0 0.0
  %331 = vmatprep.subr.mxu0 0.0
  %332 = vmatpush1.msra.mxu0 0.0
  %333 = vmatprep.subr.mxu0 0.0
  %334 = vmatpush1.msra.mxu0 0.0
  %335 = vmatprep.subr.mxu0 0.0
  %336 = vmatpush1.msra.mxu0 0.0
  %337 = vmatprep.mubr.f32.mxu0 0.0
  %338 = vmatmul.mubr.f32.gmra.mrb[0].mxu0 %v268
  %v339 = vpop.f32.mrb[0].mxu0
  %v340 = vadd.f32 0.0, %v339
  %v341 = vpop.f32.mrb[0].mxu0
  %342 = vmatprep.mubr.f32.mxu0 0.0
  %343 = vmatmul.mubr.f32.gmra.mrb[0].mxu0 %v271
  %v344 = vpop.f32.mrb[0].mxu0
  %v345 = vadd.f32 0.0, %v344
  %v346 = vpop.f32.mrb[0].mxu0
  %347 = vdwg.mxu0
  %348 = vrot.lane.b32.xlu0 %v139, 112
  %v349 = vpop.permute.xlu0 %348
  %350 = vrot.lane.b32.xlu0 %v144, 112
  %v351 = vpop.permute.xlu0 %350
  %352 = vrot.lane.b32.xlu0 %v139, 80
  %v353 = vpop.permute.xlu0 %352
  %354 = vrot.lane.b32.xlu0 %v144, 80
  %v355 = vpop.permute.xlu0 %354
  %v356 = vsel %vm153, %v349, 0
  %v358 = vsel %vm153, %v351, 0
  %v360 = vsel %vm153, %v353, 0
  %v362 = vsel %vm153, %v355, 0
  %364 = vmatprep.subr.mxu0 0.0
  %365 = vmatpush1.xpose.msra.mxu0 %v360
  %366 = vmatprep.subr.mxu0 0.0
  %367 = vmatpush1.xpose.msra.mxu0 %v362
  %368 = vmatprep.subr.mxu0 0.0
  %369 = vmatpush1.xpose.msra.mxu0 0.0
  %370 = vmatprep.subr.mxu0 0.0
  %371 = vmatpush1.xpose.msra.mxu0 0.0
  %372 = vmatprep.subr.mxu0 0.0
  %373 = vmatpush1.xpose.msra.mxu0 0.0
  %374 = vmatprep.subr.mxu0 0.0
  %375 = vmatpush1.xpose.msra.mxu0 0.0
  %376 = vmatprep.subr.mxu0 0.0
  %377 = vmatpush1.xpose.msra.mxu0 0.0
  %378 = vmatprep.subr.mxu0 0.0
  %379 = vmatpush1.xpose.msra.mxu0 0.0
  %380 = vmatprep.subr.mxu0 0.0
  %381 = vmatpush1.xpose.msra.mxu0 0.0
  %382 = vmatprep.subr.mxu0 0.0
  %383 = vmatpush1.xpose.msra.mxu0 0.0
  %384 = vmatprep.subr.mxu0 0.0
  %385 = vmatpush1.xpose.msra.mxu0 0.0
  %386 = vmatprep.subr.mxu0 0.0
  %387 = vmatpush1.xpose.msra.mxu0 0.0
  %388 = vmatprep.subr.mxu0 0.0
  %389 = vmatpush1.xpose.msra.mxu0 0.0
  %390 = vmatprep.subr.mxu0 0.0
  %391 = vmatpush1.xpose.msra.mxu0 0.0
  %392 = vmatprep.subr.mxu0 0.0
  %393 = vmatpush1.xpose.msra.mxu0 0.0
  %394 = vmatprep.subr.mxu0 0.0
  %395 = vmatpush1.xpose.msra.mxu0 0.0
  %396 = vmatprep.subr.mxu0 0.0
  %397 = vmatpush1.xpose.msra.mxu0 0.0
  %398 = vmatprep.subr.mxu0 0.0
  %399 = vmatpush1.xpose.msra.mxu0 0.0
  %400 = vmatprep.subr.mxu0 0.0
  %401 = vmatpush1.xpose.msra.mxu0 0.0
  %402 = vmatprep.subr.mxu0 0.0
  %403 = vmatpush1.xpose.msra.mxu0 0.0
  %404 = vmatprep.subr.mxu0 0.0
  %405 = vmatpush1.xpose.msra.mxu0 0.0
  %406 = vmatprep.subr.mxu0 0.0
  %407 = vmatpush1.xpose.msra.mxu0 0.0
  %408 = vmatprep.subr.mxu0 0.0
  %409 = vmatpush1.xpose.msra.mxu0 0.0
  %410 = vmatprep.subr.mxu0 0.0
  %411 = vmatpush1.xpose.msra.mxu0 0.0
  %412 = vmatprep.subr.mxu0 0.0
  %413 = vmatpush1.xpose.msra.mxu0 0.0
  %414 = vmatprep.subr.mxu0 0.0
  %415 = vmatpush1.xpose.msra.mxu0 0.0
  %416 = vmatprep.subr.mxu0 0.0
  %417 = vmatpush1.xpose.msra.mxu0 0.0
  %418 = vmatprep.subr.mxu0 0.0
  %419 = vmatpush1.xpose.msra.mxu0 0.0
  %420 = vmatprep.subr.mxu0 0.0
  %421 = vmatpush1.xpose.msra.mxu0 0.0
  %422 = vmatprep.subr.mxu0 0.0
  %423 = vmatpush1.xpose.msra.mxu0 0.0
  %424 = vmatprep.subr.mxu0 0.0
  %425 = vmatpush1.xpose.msra.mxu0 0.0
  %426 = vmatprep.subr.mxu0 0.0
  %427 = vmatpush1.xpose.msra.mxu0 0.0
  %428 = vmatprep.mubr.f32.mxu0 0.0
  %429 = vmatmul.mubr.f32.gmra.mrb[0].mxu0 %v356
  %v430 = vpop.f32.mrb[0].mxu0
  %v431 = vadd.f32 0.0, %v430
  %v432 = vpop.f32.mrb[0].mxu0
  %433 = vmatprep.mubr.f32.mxu0 0.0
  %434 = vmatmul.mubr.f32.gmra.mrb[0].mxu0 %v358
  %v435 = vpop.f32.mrb[0].mxu0
  %v436 = vadd.f32 0.0, %v435
  %v437 = vpop.f32.mrb[0].mxu0
  %438 = vdwg.mxu0
  %v439 = vsel %vm34, %v431, -1e+30
  %v440 = vsel %vm35, %v436, -1e+30
  %v441 = vsel %vm153, %v439, -inf
  %442 = vmax.xlane.f32.xlu0 %v441
  %v443 = vpop.xlane.xlu0 %442
  %v444 = vsel %vm153, %v440, -inf
  %445 = vmax.xlane.f32.xlu0 %v444
  %v446 = vpop.xlane.xlu0 %445
  %v447 = vsub.f32 %v439, %v443
  %v448 = vsub.f32 %v440, %v446
  %v449 = vmul.f32 %v447, 1.442695
  %v450 = vpow.pop %v449
  %v451 = vmul.f32 %v448, 1.442695
  %v452 = vpow.pop %v451
  %v453 = vsel %vm153, %v450, 0.0
  %454 = vadd.xlane.f32.xlu0 %v453
  %v455 = vpop.xlane.xlu0 %454
  %v456 = vsel %vm153, %v452, 0.0
  %457 = vadd.xlane.f32.xlu0 %v456
  %v458 = vpop.xlane.xlu0 %457
  %v459 = vrcp.pop %v455
  %v460 = vrcp.pop %v458
  %v461 = vmul.f32 %v450, %v459
  %v462 = vmul.f32 %v452, %v460
  %463 = vrot.lane.b32.xlu0 %v139, 48
  %v464 = vpop.permute.xlu0 %463
  %465 = vrot.lane.b32.xlu0 %v144, 48
  %v466 = vpop.permute.xlu0 %465
  %v470 = vsel %vm153, %v461, 0
  %v473 = vsel %vm153, %v462, 0
  %475 = vmatprep.subr.mxu0 0.0
  %476 = vmatpush1.msra.mxu0 %v464
  %477 = vmatprep.subr.mxu0 0.0
  %478 = vmatpush1.msra.mxu0 %v466
  %479 = vmatprep.subr.mxu0 0.0
  %480 = vmatpush1.msra.mxu0 0.0
  %481 = vmatprep.subr.mxu0 0.0
  %482 = vmatpush1.msra.mxu0 0.0
  %483 = vmatprep.subr.mxu0 0.0
  %484 = vmatpush1.msra.mxu0 0.0
  %485 = vmatprep.subr.mxu0 0.0
  %486 = vmatpush1.msra.mxu0 0.0
  %487 = vmatprep.subr.mxu0 0.0
  %488 = vmatpush1.msra.mxu0 0.0
  %489 = vmatprep.subr.mxu0 0.0
  %490 = vmatpush1.msra.mxu0 0.0
  %491 = vmatprep.subr.mxu0 0.0
  %492 = vmatpush1.msra.mxu0 0.0
  %493 = vmatprep.subr.mxu0 0.0
  %494 = vmatpush1.msra.mxu0 0.0
  %495 = vmatprep.subr.mxu0 0.0
  %496 = vmatpush1.msra.mxu0 0.0
  %497 = vmatprep.subr.mxu0 0.0
  %498 = vmatpush1.msra.mxu0 0.0
  %499 = vmatprep.subr.mxu0 0.0
  %500 = vmatpush1.msra.mxu0 0.0
  %501 = vmatprep.subr.mxu0 0.0
  %502 = vmatpush1.msra.mxu0 0.0
  %503 = vmatprep.subr.mxu0 0.0
  %504 = vmatpush1.msra.mxu0 0.0
  %505 = vmatprep.subr.mxu0 0.0
  %506 = vmatpush1.msra.mxu0 0.0
  %507 = vmatprep.subr.mxu0 0.0
  %508 = vmatpush1.msra.mxu0 0.0
  %509 = vmatprep.subr.mxu0 0.0
  %510 = vmatpush1.msra.mxu0 0.0
  %511 = vmatprep.subr.mxu0 0.0
  %512 = vmatpush1.msra.mxu0 0.0
  %513 = vmatprep.subr.mxu0 0.0
  %514 = vmatpush1.msra.mxu0 0.0
  %515 = vmatprep.subr.mxu0 0.0
  %516 = vmatpush1.msra.mxu0 0.0
  %517 = vmatprep.subr.mxu0 0.0
  %518 = vmatpush1.msra.mxu0 0.0
  %519 = vmatprep.subr.mxu0 0.0
  %520 = vmatpush1.msra.mxu0 0.0
  %521 = vmatprep.subr.mxu0 0.0
  %522 = vmatpush1.msra.mxu0 0.0
  %523 = vmatprep.subr.mxu0 0.0
  %524 = vmatpush1.msra.mxu0 0.0
  %525 = vmatprep.subr.mxu0 0.0
  %526 = vmatpush1.msra.mxu0 0.0
  %527 = vmatprep.subr.mxu0 0.0
  %528 = vmatpush1.msra.mxu0 0.0
  %529 = vmatprep.subr.mxu0 0.0
  %530 = vmatpush1.msra.mxu0 0.0
  %531 = vmatprep.subr.mxu0 0.0
  %532 = vmatpush1.msra.mxu0 0.0
  %533 = vmatprep.subr.mxu0 0.0
  %534 = vmatpush1.msra.mxu0 0.0
  %535 = vmatprep.subr.mxu0 0.0
  %536 = vmatpush1.msra.mxu0 0.0
  %537 = vmatprep.subr.mxu0 0.0
  %538 = vmatpush1.msra.mxu0 0.0
  %539 = vmatprep.mubr.f32.mxu0 0.0
  %540 = vmatmul.mubr.f32.gmra.mrb[0].mxu0 %v470
  %v541 = vpop.f32.mrb[0].mxu0
  %v542 = vadd.f32 0.0, %v541
  %v543 = vpop.f32.mrb[0].mxu0
  %544 = vmatprep.mubr.f32.mxu0 0.0
  %545 = vmatmul.mubr.f32.gmra.mrb[0].mxu0 %v473
  %v546 = vpop.f32.mrb[0].mxu0
  %v547 = vadd.f32 0.0, %v546
  %v548 = vpop.f32.mrb[0].mxu0
  %549 = vdwg.mxu0
  %552 = vrot.lane.b32.xlu0 %v54, 32
  %v553 = vpop.permute.xlu0 %552
  %554 = vrot.lane.b32.xlu0 %v55, 32
  %v555 = vpop.permute.xlu0 %554
  %v559 = vsel %vm153, %v542, 0
  %v562 = vsel %vm153, %v547, 0
  %564 = vmatprep.subr.mxu0 0.0
  %565 = vmatpush1.msra.mxu0 %v553
  %566 = vmatprep.subr.mxu0 0.0
  %567 = vmatpush1.msra.mxu0 %v555
  %568 = vmatprep.subr.mxu0 0.0
  %569 = vmatpush1.msra.mxu0 0.0
  %570 = vmatprep.subr.mxu0 0.0
  %571 = vmatpush1.msra.mxu0 0.0
  %572 = vmatprep.subr.mxu0 0.0
  %573 = vmatpush1.msra.mxu0 0.0
  %574 = vmatprep.subr.mxu0 0.0
  %575 = vmatpush1.msra.mxu0 0.0
  %576 = vmatprep.subr.mxu0 0.0
  %577 = vmatpush1.msra.mxu0 0.0
  %578 = vmatprep.subr.mxu0 0.0
  %579 = vmatpush1.msra.mxu0 0.0
  %580 = vmatprep.subr.mxu0 0.0
  %581 = vmatpush1.msra.mxu0 0.0
  %582 = vmatprep.subr.mxu0 0.0
  %583 = vmatpush1.msra.mxu0 0.0
  %584 = vmatprep.subr.mxu0 0.0
  %585 = vmatpush1.msra.mxu0 0.0
  %586 = vmatprep.subr.mxu0 0.0
  %587 = vmatpush1.msra.mxu0 0.0
  %588 = vmatprep.subr.mxu0 0.0
  %589 = vmatpush1.msra.mxu0 0.0
  %590 = vmatprep.subr.mxu0 0.0
  %591 = vmatpush1.msra.mxu0 0.0
  %592 = vmatprep.subr.mxu0 0.0
  %593 = vmatpush1.msra.mxu0 0.0
  %594 = vmatprep.subr.mxu0 0.0
  %595 = vmatpush1.msra.mxu0 0.0
  %596 = vmatprep.subr.mxu0 0.0
  %597 = vmatpush1.msra.mxu0 0.0
  %598 = vmatprep.subr.mxu0 0.0
  %599 = vmatpush1.msra.mxu0 0.0
  %600 = vmatprep.subr.mxu0 0.0
  %601 = vmatpush1.msra.mxu0 0.0
  %602 = vmatprep.subr.mxu0 0.0
  %603 = vmatpush1.msra.mxu0 0.0
  %604 = vmatprep.subr.mxu0 0.0
  %605 = vmatpush1.msra.mxu0 0.0
  %606 = vmatprep.subr.mxu0 0.0
  %607 = vmatpush1.msra.mxu0 0.0
  %608 = vmatprep.subr.mxu0 0.0
  %609 = vmatpush1.msra.mxu0 0.0
  %610 = vmatprep.subr.mxu0 0.0
  %611 = vmatpush1.msra.mxu0 0.0
  %612 = vmatprep.subr.mxu0 0.0
  %613 = vmatpush1.msra.mxu0 0.0
  %614 = vmatprep.subr.mxu0 0.0
  %615 = vmatpush1.msra.mxu0 0.0
  %616 = vmatprep.subr.mxu0 0.0
  %617 = vmatpush1.msra.mxu0 0.0
  %618 = vmatprep.subr.mxu0 0.0
  %619 = vmatpush1.msra.mxu0 0.0
  %620 = vmatprep.subr.mxu0 0.0
  %621 = vmatpush1.msra.mxu0 0.0
  %622 = vmatprep.subr.mxu0 0.0
  %623 = vmatpush1.msra.mxu0 0.0
  %624 = vmatprep.subr.mxu0 0.0
  %625 = vmatpush1.msra.mxu0 0.0
  %626 = vmatprep.subr.mxu0 0.0
  %627 = vmatpush1.msra.mxu0 0.0
  %628 = vmatprep.mubr.f32.mxu0 0.0
  %629 = vmatmul.mubr.f32.gmra.mrb[0].mxu0 %v559
  %v630 = vpop.f32.mrb[0].mxu0
  %v631 = vadd.f32 0.0, %v630
  %v632 = vpop.f32.mrb[0].mxu0
  %633 = vmatprep.mubr.f32.mxu0 0.0
  %634 = vmatmul.mubr.f32.gmra.mrb[0].mxu0 %v562
  %v635 = vpop.f32.mrb[0].mxu0
  %v636 = vadd.f32 0.0, %v635
  %v637 = vpop.f32.mrb[0].mxu0
  %638 = vdwg.mxu0
  %641 = vrot.lane.b32.xlu0 %v52, 32
  %v642 = vpop.permute.xlu0 %641
  %643 = vrot.lane.b32.xlu0 %v53, 32
  %v644 = vpop.permute.xlu0 %643
  %v648 = vsel %vm153, %v340, 0
  %v651 = vsel %vm153, %v345, 0
  %653 = vmatprep.subr.mxu0 0.0
  %654 = vmatpush1.msra.mxu0 %v642
  %655 = vmatprep.subr.mxu0 0.0
  %656 = vmatpush1.msra.mxu0 %v644
  %657 = vmatprep.subr.mxu0 0.0
  %658 = vmatpush1.msra.mxu0 0.0
  %659 = vmatprep.subr.mxu0 0.0
  %660 = vmatpush1.msra.mxu0 0.0
  %661 = vmatprep.subr.mxu0 0.0
  %662 = vmatpush1.msra.mxu0 0.0
  %663 = vmatprep.subr.mxu0 0.0
  %664 = vmatpush1.msra.mxu0 0.0
  %665 = vmatprep.subr.mxu0 0.0
  %666 = vmatpush1.msra.mxu0 0.0
  %667 = vmatprep.subr.mxu0 0.0
  %668 = vmatpush1.msra.mxu0 0.0
  %669 = vmatprep.subr.mxu0 0.0
  %670 = vmatpush1.msra.mxu0 0.0
  %671 = vmatprep.subr.mxu0 0.0
  %672 = vmatpush1.msra.mxu0 0.0
  %673 = vmatprep.subr.mxu0 0.0
  %674 = vmatpush1.msra.mxu0 0.0
  %675 = vmatprep.subr.mxu0 0.0
  %676 = vmatpush1.msra.mxu0 0.0
  %677 = vmatprep.subr.mxu0 0.0
  %678 = vmatpush1.msra.mxu0 0.0
  %679 = vmatprep.subr.mxu0 0.0
  %680 = vmatpush1.msra.mxu0 0.0
  %681 = vmatprep.subr.mxu0 0.0
  %682 = vmatpush1.msra.mxu0 0.0
  %683 = vmatprep.subr.mxu0 0.0
  %684 = vmatpush1.msra.mxu0 0.0
  %685 = vmatprep.subr.mxu0 0.0
  %686 = vmatpush1.msra.mxu0 0.0
  %687 = vmatprep.subr.mxu0 0.0
  %688 = vmatpush1.msra.mxu0 0.0
  %689 = vmatprep.subr.mxu0 0.0
  %690 = vmatpush1.msra.mxu0 0.0
  %691 = vmatprep.subr.mxu0 0.0
  %692 = vmatpush1.msra.mxu0 0.0
  %693 = vmatprep.subr.mxu0 0.0
  %694 = vmatpush1.msra.mxu0 0.0
  %695 = vmatprep.subr.mxu0 0.0
  %696 = vmatpush1.msra.mxu0 0.0
  %697 = vmatprep.subr.mxu0 0.0
  %698 = vmatpush1.msra.mxu0 0.0
  %699 = vmatprep.subr.mxu0 0.0
  %700 = vmatpush1.msra.mxu0 0.0
  %701 = vmatprep.subr.mxu0 0.0
  %702 = vmatpush1.msra.mxu0 0.0
  %703 = vmatprep.subr.mxu0 0.0
  %704 = vmatpush1.msra.mxu0 0.0
  %705 = vmatprep.subr.mxu0 0.0
  %706 = vmatpush1.msra.mxu0 0.0
  %707 = vmatprep.subr.mxu0 0.0
  %708 = vmatpush1.msra.mxu0 0.0
  %709 = vmatprep.subr.mxu0 0.0
  %710 = vmatpush1.msra.mxu0 0.0
  %711 = vmatprep.subr.mxu0 0.0
  %712 = vmatpush1.msra.mxu0 0.0
  %713 = vmatprep.subr.mxu0 0.0
  %714 = vmatpush1.msra.mxu0 0.0
  %715 = vmatprep.subr.mxu0 0.0
  %716 = vmatpush1.msra.mxu0 0.0
  %717 = vmatprep.mubr.f32.mxu0 0.0
  %718 = vmatmul.mubr.f32.gmra.mrb[0].mxu0 %v648
  %v719 = vpop.f32.mrb[0].mxu0
  %v720 = vadd.f32 %v631, %v719
  %v721 = vpop.f32.mrb[0].mxu0
  %722 = vmatprep.mubr.f32.mxu0 0.0
  %723 = vmatmul.mubr.f32.gmra.mrb[0].mxu0 %v651
  %v724 = vpop.f32.mrb[0].mxu0
  %v725 = vadd.f32 %v636, %v724
  %v726 = vpop.f32.mrb[0].mxu0
  %727 = vdwg.mxu0
  %729 = vrot.lane.b32.xlu0 %v64, 32
  %v730 = vpop.permute.xlu0 %729
  %v732 = vadd.f32 %v720, %v730
  %v733 = vadd.f32 %v725, %v730
  %v734 = vadd.f32 %v24, %v732
  %v735 = vadd.f32 %v25, %v733
  %v736 = vsel %vm65, %v734, 0.0
  %737 = vadd.xlane.f32.xlu0 %v736
  %v738 = vpop.xlane.xlu0 %737
  %v739 = vsel %vm65, %v735, 0.0
  %740 = vadd.xlane.f32.xlu0 %v739
  %v741 = vpop.xlane.xlu0 %740
  %v742 = vrcp.pop 32.0
  %v743 = vmul.f32 %v738, %v742
  %v744 = vmul.f32 %v741, %v742
  %v745 = vsub.f32 %v734, %v743
  %v746 = vsub.f32 %v735, %v744
  %v747 = vmul.f32 %v745, %v745
  %v748 = vmul.f32 %v746, %v746
  %v749 = vsel %vm65, %v747, 0.0
  %750 = vadd.xlane.f32.xlu0 %v749
  %v751 = vpop.xlane.xlu0 %750
  %v752 = vsel %vm65, %v748, 0.0
  %753 = vadd.xlane.f32.xlu0 %v752
  %v754 = vpop.xlane.xlu0 %753
  %v755 = vmul.f32 %v751, %v742
  %v756 = vmul.f32 %v754, %v742
  %v757 = vadd.f32 %v755, 1e-05
  %v758 = vadd.f32 %v756, 1e-05
  %v759 = vrsqrt.pop %v757
  %v760 = vrsqrt.pop %v758
  %v761 = vmul.f32 %v745, %v759
  %v762 = vmul.f32 %v746, %v760
  %v763 = vlaneseq
  %v764 = vshrl.u32 %v763, 7
  %v765 = vsub.s32 1, %v764
  %v766 = vrot.slane %v60, %v765
  %v767 = vmul.f32 %v761, %v766
  %v768 = vmul.f32 %v762, %v766
  %770 = vrot.lane.b32.xlu0 %v766, 96
  %v771 = vpop.permute.xlu0 %770
  %v773 = vadd.f32 %v767, %v771
  %v774 = vadd.f32 %v768, %v771
  %v775 = vlaneseq
  %v776 = vshrl.u32 %v775, 7
  %v777 = vsub.s32 2, %v776
  %v778 = vrot.slane %v60, %v777
  %v780 = vsel %vm65, %v773, 0
  %v783 = vsel %vm65, %v774, 0
  %785 = vmatprep.subr.mxu0 0.0
  %786 = vmatpush1.msra.mxu0 %v56
  %787 = vmatprep.subr.mxu0 0.0
  %788 = vmatpush1.msra.mxu0 %v57
  %789 = vmatprep.subr.mxu0 0.0
  %790 = vmatpush1.msra.mxu0 %v58
  %791 = vmatprep.subr.mxu0 0.0
  %792 = vmatpush1.msra.mxu0 %v59
  %793 = vmatprep.subr.mxu0 0.0
  %794 = vmatpush1.msra.mxu0 0.0
  %795 = vmatprep.subr.mxu0 0.0
  %796 = vmatpush1.msra.mxu0 0.0
  %797 = vmatprep.subr.mxu0 0.0
  %798 = vmatpush1.msra.mxu0 0.0
  %799 = vmatprep.subr.mxu0 0.0
  %800 = vmatpush1.msra.mxu0 0.0
  %801 = vmatprep.subr.mxu0 0.0
  %802 = vmatpush1.msra.mxu0 0.0
  %803 = vmatprep.subr.mxu0 0.0
  %804 = vmatpush1.msra.mxu0 0.0
  %805 = vmatprep.subr.mxu0 0.0
  %806 = vmatpush1.msra.mxu0 0.0
  %807 = vmatprep.subr.mxu0 0.0
  %808 = vmatpush1.msra.mxu0 0.0
  %809 = vmatprep.subr.mxu0 0.0
  %810 = vmatpush1.msra.mxu0 0.0
  %811 = vmatprep.subr.mxu0 0.0
  %812 = vmatpush1.msra.mxu0 0.0
  %813 = vmatprep.subr.mxu0 0.0
  %814 = vmatpush1.msra.mxu0 0.0
  %815 = vmatprep.subr.mxu0 0.0
  %816 = vmatpush1.msra.mxu0 0.0
  %817 = vmatprep.subr.mxu0 0.0
  %818 = vmatpush1.msra.mxu0 0.0
  %819 = vmatprep.subr.mxu0 0.0
  %820 = vmatpush1.msra.mxu0 0.0
  %821 = vmatprep.subr.mxu0 0.0
  %822 = vmatpush1.msra.mxu0 0.0
  %823 = vmatprep.subr.mxu0 0.0
  %824 = vmatpush1.msra.mxu0 0.0
  %825 = vmatprep.subr.mxu0 0.0
  %826 = vmatpush1.msra.mxu0 0.0
  %827 = vmatprep.subr.mxu0 0.0
  %828 = vmatpush1.msra.mxu0 0.0
  %829 = vmatprep.subr.mxu0 0.0
  %830 = vmatpush1.msra.mxu0 0.0
  %831 = vmatprep.subr.mxu0 0.0
  %832 = vmatpush1.msra.mxu0 0.0
  %833 = vmatprep.subr.mxu0 0.0
  %834 = vmatpush1.msra.mxu0 0.0
  %835 = vmatprep.subr.mxu0 0.0
  %836 = vmatpush1.msra.mxu0 0.0
  %837 = vmatprep.subr.mxu0 0.0
  %838 = vmatpush1.msra.mxu0 0.0
  %839 = vmatprep.subr.mxu0 0.0
  %840 = vmatpush1.msra.mxu0 0.0
  %841 = vmatprep.subr.mxu0 0.0
  %842 = vmatpush1.msra.mxu0 0.0
  %843 = vmatprep.subr.mxu0 0.0
  %844 = vmatpush1.msra.mxu0 0.0
  %845 = vmatprep.subr.mxu0 0.0
  %846 = vmatpush1.msra.mxu0 0.0
  %847 = vmatprep.subr.mxu0 0.0
  %848 = vmatpush1.msra.mxu0 0.0
  %849 = vmatprep.mubr.f32.mxu0 0.0
  %850 = vmatmul.mubr.f32.gmra.mrb[0].mxu0 %v780
  %v851 = vpop.f32.mrb[0].mxu0
  %v852 = vadd.f32 %v778, %v851
  %v853 = vpop.f32.mrb[0].mxu0
  %854 = vmatprep.mubr.f32.mxu0 0.0
  %855 = vmatmul.mubr.f32.gmra.mrb[0].mxu0 %v783
  %v856 = vpop.f32.mrb[0].mxu0
  %v857 = vadd.f32 %v778, %v856
  %v858 = vpop.f32.mrb[0].mxu0
  %859 = vdwg.mxu0
  %v860 = vmax.f32 %v852, 0.0
  %v861 = vmax.f32 %v857, 0.0
  %v862 = vlaneseq
  %v863 = vshrl.u32 %v862, 7
  %v864 = vsub.s32 3, %v863
  %v865 = vrot.slane %v60, %v864
  %866 = vmatprep.subr.mxu0 0.0
  %867 = vmatpush1.msra.mxu0 %v36
  %868 = vmatprep.subr.mxu0 0.0
  %869 = vmatpush1.msra.mxu0 %v37
  %870 = vmatprep.subr.mxu0 0.0
  %871 = vmatpush1.msra.mxu0 %v38
  %872 = vmatprep.subr.mxu0 0.0
  %873 = vmatpush1.msra.mxu0 %v39
  %874 = vmatprep.subr.mxu0 0.0
  %875 = vmatpush1.msra.mxu0 %v40
  %876 = vmatprep.subr.mxu0 0.0
  %877 = vmatpush1.msra.mxu0 %v41
  %878 = vmatprep.subr.mxu0 0.0
  %879 = vmatpush1.msra.mxu0 %v42
  %880 = vmatprep.subr.mxu0 0.0
  %881 = vmatpush1.msra.mxu0 %v43
  %882 = vmatprep.subr.mxu0 0.0
  %883 = vmatpush1.msra.mxu0 %v44
  %884 = vmatprep.subr.mxu0 0.0
  %885 = vmatpush1.msra.mxu0 %v45
  %886 = vmatprep.subr.mxu0 0.0
  %887 = vmatpush1.msra.mxu0 %v46
  %888 = vmatprep.subr.mxu0 0.0
  %889 = vmatpush1.msra.mxu0 %v47
  %890 = vmatprep.subr.mxu0 0.0
  %891 = vmatpush1.msra.mxu0 %v48
  %892 = vmatprep.subr.mxu0 0.0
  %893 = vmatpush1.msra.mxu0 %v49
  %894 = vmatprep.subr.mxu0 0.0
  %895 = vmatpush1.msra.mxu0 %v50
  %896 = vmatprep.subr.mxu0 0.0
  %897 = vmatpush1.msra.mxu0 %v51
  %898 = vmatprep.subr.mxu0 0.0
  %899 = vmatpush1.msra.mxu0 0.0
  %900 = vmatprep.subr.mxu0 0.0
  %901 = vmatpush1.msra.mxu0 0.0
  %902 = vmatprep.subr.mxu0 0.0
  %903 = vmatpush1.msra.mxu0 0.0
  %904 = vmatprep.subr.mxu0 0.0
  %905 = vmatpush1.msra.mxu0 0.0
  %906 = vmatprep.subr.mxu0 0.0
  %907 = vmatpush1.msra.mxu0 0.0
  %908 = vmatprep.subr.mxu0 0.0
  %909 = vmatpush1.msra.mxu0 0.0
  %910 = vmatprep.subr.mxu0 0.0
  %911 = vmatpush1.msra.mxu0 0.0
  %912 = vmatprep.subr.mxu0 0.0
  %913 = vmatpush1.msra.mxu0 0.0
  %914 = vmatprep.subr.mxu0 0.0
  %915 = vmatpush1.msra.mxu0 0.0
  %916 = vmatprep.subr.mxu0 0.0
  %917 = vmatpush1.msra.mxu0 0.0
  %918 = vmatprep.subr.mxu0 0.0
  %919 = vmatpush1.msra.mxu0 0.0
  %920 = vmatprep.subr.mxu0 0.0
  %921 = vmatpush1.msra.mxu0 0.0
  %922 = vmatprep.subr.mxu0 0.0
  %923 = vmatpush1.msra.mxu0 0.0
  %924 = vmatprep.subr.mxu0 0.0
  %925 = vmatpush1.msra.mxu0 0.0
  %926 = vmatprep.subr.mxu0 0.0
  %927 = vmatpush1.msra.mxu0 0.0
  %928 = vmatprep.subr.mxu0 0.0
  %929 = vmatpush1.msra.mxu0 0.0
  %930 = vmatprep.mubr.f32.mxu0 0.0
  %931 = vmatmul.mubr.f32.gmra.mrb[0].mxu0 %v860
  %v932 = vpop.f32.mrb[0].mxu0
  %v933 = vadd.f32 %v865, %v932
  %v934 = vpop.f32.mrb[0].mxu0
  %935 = vmatprep.mubr.f32.mxu0 0.0
  %936 = vmatmul.mubr.f32.gmra.mrb[0].mxu0 %v861
  %v937 = vpop.f32.mrb[0].mxu0
  %v938 = vadd.f32 %v865, %v937
  %v939 = vpop.f32.mrb[0].mxu0
  %940 = vdwg.mxu0
  %v941 = vadd.f32 %v773, %v933
  %v942 = vadd.f32 %v774, %v938
  %v943 = vsel %vm65, %v941, 0.0
  %944 = vadd.xlane.f32.xlu0 %v943
  %v945 = vpop.xlane.xlu0 %944
  %v946 = vsel %vm65, %v942, 0.0
  %947 = vadd.xlane.f32.xlu0 %v946
  %v948 = vpop.xlane.xlu0 %947
  %v949 = vmul.f32 %v945, %v742
  %v950 = vmul.f32 %v948, %v742
  %v951 = vsub.f32 %v941, %v949
  %v952 = vsub.f32 %v942, %v950
  %v953 = vmul.f32 %v951, %v951
  %v954 = vmul.f32 %v952, %v952
  %v955 = vsel %vm65, %v953, 0.0
  %956 = vadd.xlane.f32.xlu0 %v955
  %v957 = vpop.xlane.xlu0 %956
  %v958 = vsel %vm65, %v954, 0.0
  %959 = vadd.xlane.f32.xlu0 %v958
  %v960 = vpop.xlane.xlu0 %959
  %v961 = vmul.f32 %v957, %v742
  %v962 = vmul.f32 %v960, %v742
  %v963 = vadd.f32 %v961, 1e-05
  %v964 = vadd.f32 %v962, 1e-05
  %v965 = vrsqrt.pop %v963
  %v966 = vrsqrt.pop %v964
  %v967 = vmul.f32 %v951, %v965
  %v968 = vmul.f32 %v952, %v966
  %969 = vrot.lane.b32.xlu0 %v766, 64
  %v970 = vpop.permute.xlu0 %969
  %v972 = vmul.f32 %v967, %v970
  %v973 = vmul.f32 %v968, %v970
  %974 = vrot.lane.b32.xlu0 %v766, 32
  %v975 = vpop.permute.xlu0 %974
  %v977 = vadd.f32 %v972, %v975
  %v978 = vadd.f32 %v973, %v975
  %s979 = scalar_lea.vmem %s2, 72
  %v980 = vld [vmem:[%s979] sm:$0xff]
  %v981 = vld [vmem:[%s979 + $0x8] sm:$0xff]
  %v982 = vld [vmem:[%s979 + $0x10] sm:$0xff]
  %v983 = vld [vmem:[%s979 + $0x18] sm:$0xff]
  %v984 = vld [vmem:[%s979 + $0x20] sm:$0xff]
  %v985 = vld [vmem:[%s979 + $0x28] sm:$0xff]
  %v986 = vld [vmem:[%s979 + $0x30] sm:$0xff]
  %v987 = vld [vmem:[%s979 + $0x38] sm:$0xff]
  %v988 = vld [vmem:[%s979 + $0x40] sm:$0xff]
  %v989 = vlaneseq
  %v990 = vshrl.u32 %v989, 7
  %v991 = vsub.s32 0, %v990
  %v992 = vrot.slane %v988, %v991
  %v994 = vsel %vm65, %v977, 0
  %v997 = vsel %vm65, %v978, 0
  %999 = vmatprep.subr.mxu0 0.0
  %1000 = vmatpush1.msra.mxu0 %v980
  %1001 = vmatprep.subr.mxu0 0.0
  %1002 = vmatpush1.msra.mxu0 %v981
  %1003 = vmatprep.subr.mxu0 0.0
  %1004 = vmatpush1.msra.mxu0 %v982
  %1005 = vmatprep.subr.mxu0 0.0
  %1006 = vmatpush1.msra.mxu0 %v983
  %1007 = vmatprep.subr.mxu0 0.0
  %1008 = vmatpush1.msra.mxu0 0.0
  %1009 = vmatprep.subr.mxu0 0.0
  %1010 = vmatpush1.msra.mxu0 0.0
  %1011 = vmatprep.subr.mxu0 0.0
  %1012 = vmatpush1.msra.mxu0 0.0
  %1013 = vmatprep.subr.mxu0 0.0
  %1014 = vmatpush1.msra.mxu0 0.0
  %1015 = vmatprep.subr.mxu0 0.0
  %1016 = vmatpush1.msra.mxu0 0.0
  %1017 = vmatprep.subr.mxu0 0.0
  %1018 = vmatpush1.msra.mxu0 0.0
  %1019 = vmatprep.subr.mxu0 0.0
  %1020 = vmatpush1.msra.mxu0 0.0
  %1021 = vmatprep.subr.mxu0 0.0
  %1022 = vmatpush1.msra.mxu0 0.0
  %1023 = vmatprep.subr.mxu0 0.0
  %1024 = vmatpush1.msra.mxu0 0.0
  %1025 = vmatprep.subr.mxu0 0.0
  %1026 = vmatpush1.msra.mxu0 0.0
  %1027 = vmatprep.subr.mxu0 0.0
  %1028 = vmatpush1.msra.mxu0 0.0
  %1029 = vmatprep.subr.mxu0 0.0
  %1030 = vmatpush1.msra.mxu0 0.0
  %1031 = vmatprep.subr.mxu0 0.0
  %1032 = vmatpush1.msra.mxu0 0.0
  %1033 = vmatprep.subr.mxu0 0.0
  %1034 = vmatpush1.msra.mxu0 0.0
  %1035 = vmatprep.subr.mxu0 0.0
  %1036 = vmatpush1.msra.mxu0 0.0
  %1037 = vmatprep.subr.mxu0 0.0
  %1038 = vmatpush1.msra.mxu0 0.0
  %1039 = vmatprep.subr.mxu0 0.0
  %1040 = vmatpush1.msra.mxu0 0.0
  %1041 = vmatprep.subr.mxu0 0.0
  %1042 = vmatpush1.msra.mxu0 0.0
  %1043 = vmatprep.subr.mxu0 0.0
  %1044 = vmatpush1.msra.mxu0 0.0
  %1045 = vmatprep.subr.mxu0 0.0
  %1046 = vmatpush1.msra.mxu0 0.0
  %1047 = vmatprep.subr.mxu0 0.0
  %1048 = vmatpush1.msra.mxu0 0.0
  %1049 = vmatprep.subr.mxu0 0.0
  %1050 = vmatpush1.msra.mxu0 0.0
  %1051 = vmatprep.subr.mxu0 0.0
  %1052 = vmatpush1.msra.mxu0 0.0
  %1053 = vmatprep.subr.mxu0 0.0
  %1054 = vmatpush1.msra.mxu0 0.0
  %1055 = vmatprep.subr.mxu0 0.0
  %1056 = vmatpush1.msra.mxu0 0.0
  %1057 = vmatprep.subr.mxu0 0.0
  %1058 = vmatpush1.msra.mxu0 0.0
  %1059 = vmatprep.subr.mxu0 0.0
  %1060 = vmatpush1.msra.mxu0 0.0
  %1061 = vmatprep.subr.mxu0 0.0
  %1062 = vmatpush1.msra.mxu0 0.0
  %1063 = vmatprep.mubr.f32.mxu0 0.0
  %1064 = vmatmul.mubr.f32.gmra.mrb[0].mxu0 %v994
  %v1065 = vpop.f32.mrb[0].mxu0
  %v1066 = vadd.f32 %v992, %v1065
  %v1067 = vpop.f32.mrb[0].mxu0
  %1068 = vmatprep.mubr.f32.mxu0 0.0
  %1069 = vmatmul.mubr.f32.gmra.mrb[0].mxu0 %v997
  %v1070 = vpop.f32.mrb[0].mxu0
  %v1071 = vadd.f32 %v992, %v1070
  %v1072 = vpop.f32.mrb[0].mxu0
  %1073 = vdwg.mxu0
  %1076 = vrot.lane.b32.xlu0 %v1066, 96
  %v1077 = vpop.permute.xlu0 %1076
  %1078 = vrot.lane.b32.xlu0 %v1071, 96
  %v1079 = vpop.permute.xlu0 %1078
  %v1080 = vsel %vm153, %v1066, 0
  %v1082 = vsel %vm153, %v1071, 0
  %v1084 = vsel %vm153, %v1077, 0
  %v1086 = vsel %vm153, %v1079, 0
  %1088 = vmatprep.subr.mxu0 0.0
  %1089 = vmatpush1.xpose.msra.mxu0 %v1084
  %1090 = vmatprep.subr.mxu0 0.0
  %1091 = vmatpush1.xpose.msra.mxu0 %v1086
  %1092 = vmatprep.subr.mxu0 0.0
  %1093 = vmatpush1.xpose.msra.mxu0 0.0
  %1094 = vmatprep.subr.mxu0 0.0
  %1095 = vmatpush1.xpose.msra.mxu0 0.0
  %1096 = vmatprep.subr.mxu0 0.0
  %1097 = vmatpush1.xpose.msra.mxu0 0.0
  %1098 = vmatprep.subr.mxu0 0.0
  %1099 = vmatpush1.xpose.msra.mxu0 0.0
  %1100 = vmatprep.subr.mxu0 0.0
  %1101 = vmatpush1.xpose.msra.mxu0 0.0
  %1102 = vmatprep.subr.mxu0 0.0
  %1103 = vmatpush1.xpose.msra.mxu0 0.0
  %1104 = vmatprep.subr.mxu0 0.0
  %1105 = vmatpush1.xpose.msra.mxu0 0.0
  %1106 = vmatprep.subr.mxu0 0.0
  %1107 = vmatpush1.xpose.msra.mxu0 0.0
  %1108 = vmatprep.subr.mxu0 0.0
  %1109 = vmatpush1.xpose.msra.mxu0 0.0
  %1110 = vmatprep.subr.mxu0 0.0
  %1111 = vmatpush1.xpose.msra.mxu0 0.0
  %1112 = vmatprep.subr.mxu0 0.0
  %1113 = vmatpush1.xpose.msra.mxu0 0.0
  %1114 = vmatprep.subr.mxu0 0.0
  %1115 = vmatpush1.xpose.msra.mxu0 0.0
  %1116 = vmatprep.subr.mxu0 0.0
  %1117 = vmatpush1.xpose.msra.mxu0 0.0
  %1118 = vmatprep.subr.mxu0 0.0
  %1119 = vmatpush1.xpose.msra.mxu0 0.0
  %1120 = vmatprep.subr.mxu0 0.0
  %1121 = vmatpush1.xpose.msra.mxu0 0.0
  %1122 = vmatprep.subr.mxu0 0.0
  %1123 = vmatpush1.xpose.msra.mxu0 0.0
  %1124 = vmatprep.subr.mxu0 0.0
  %1125 = vmatpush1.xpose.msra.mxu0 0.0
  %1126 = vmatprep.subr.mxu0 0.0
  %1127 = vmatpush1.xpose.msra.mxu0 0.0
  %1128 = vmatprep.subr.mxu0 0.0
  %1129 = vmatpush1.xpose.msra.mxu0 0.0
  %1130 = vmatprep.subr.mxu0 0.0
  %1131 = vmatpush1.xpose.msra.mxu0 0.0
  %1132 = vmatprep.subr.mxu0 0.0
  %1133 = vmatpush1.xpose.msra.mxu0 0.0
  %1134 = vmatprep.subr.mxu0 0.0
  %1135 = vmatpush1.xpose.msra.mxu0 0.0
  %1136 = vmatprep.subr.mxu0 0.0
  %1137 = vmatpush1.xpose.msra.mxu0 0.0
  %1138 = vmatprep.subr.mxu0 0.0
  %1139 = vmatpush1.xpose.msra.mxu0 0.0
  %1140 = vmatprep.subr.mxu0 0.0
  %1141 = vmatpush1.xpose.msra.mxu0 0.0
  %1142 = vmatprep.subr.mxu0 0.0
  %1143 = vmatpush1.xpose.msra.mxu0 0.0
  %1144 = vmatprep.subr.mxu0 0.0
  %1145 = vmatpush1.xpose.msra.mxu0 0.0
  %1146 = vmatprep.subr.mxu0 0.0
  %1147 = vmatpush1.xpose.msra.mxu0 0.0
  %1148 = vmatprep.subr.mxu0 0.0
  %1149 = vmatpush1.xpose.msra.mxu0 0.0
  %1150 = vmatprep.subr.mxu0 0.0
  %1151 = vmatpush1.xpose.msra.mxu0 0.0
  %1152 = vmatprep.mubr.f32.mxu0 0.0
  %1153 = vmatmul.mubr.f32.gmra.mrb[0].mxu0 %v1080
  %v1154 = vpop.f32.mrb[0].mxu0
  %v1155 = vadd.f32 0.0, %v1154
  %v1156 = vpop.f32.mrb[0].mxu0
  %1157 = vmatprep.mubr.f32.mxu0 0.0
  %1158 = vmatmul.mubr.f32.gmra.mrb[0].mxu0 %v1082
  %v1159 = vpop.f32.mrb[0].mxu0
  %v1160 = vadd.f32 0.0, %v1159
  %v1161 = vpop.f32.mrb[0].mxu0
  %1162 = vdwg.mxu0
  %v1163 = vsel %vm34, %v1155, -1e+30
  %v1164 = vsel %vm35, %v1160, -1e+30
  %v1165 = vsel %vm153, %v1163, -inf
  %1166 = vmax.xlane.f32.xlu0 %v1165
  %v1167 = vpop.xlane.xlu0 %1166
  %v1168 = vsel %vm153, %v1164, -inf
  %1169 = vmax.xlane.f32.xlu0 %v1168
  %v1170 = vpop.xlane.xlu0 %1169
  %v1171 = vsub.f32 %v1163, %v1167
  %v1172 = vsub.f32 %v1164, %v1170
  %v1173 = vmul.f32 %v1171, 1.442695
  %v1174 = vpow.pop %v1173
  %v1175 = vmul.f32 %v1172, 1.442695
  %v1176 = vpow.pop %v1175
  %v1177 = vsel %vm153, %v1174, 0.0
  %1178 = vadd.xlane.f32.xlu0 %v1177
  %v1179 = vpop.xlane.xlu0 %1178
  %v1180 = vsel %vm153, %v1176, 0.0
  %1181 = vadd.xlane.f32.xlu0 %v1180
  %v1182 = vpop.xlane.xlu0 %1181
  %v1183 = vrcp.pop %v1179
  %v1184 = vrcp.pop %v1182
  %v1185 = vmul.f32 %v1174, %v1183
  %v1186 = vmul.f32 %v1176, %v1184
  %1187 = vrot.lane.b32.xlu0 %v1066, 64
  %v1188 = vpop.permute.xlu0 %1187
  %1189 = vrot.lane.b32.xlu0 %v1071, 64
  %v1190 = vpop.permute.xlu0 %1189
  %v1194 = vsel %vm153, %v1185, 0
  %v1197 = vsel %vm153, %v1186, 0
  %1199 = vmatprep.subr.mxu0 0.0
  %1200 = vmatpush1.msra.mxu0 %v1188
  %1201 = vmatprep.subr.mxu0 0.0
  %1202 = vmatpush1.msra.mxu0 %v1190
  %1203 = vmatprep.subr.mxu0 0.0
  %1204 = vmatpush1.msra.mxu0 0.0
  %1205 = vmatprep.subr.mxu0 0.0
  %1206 = vmatpush1.msra.mxu0 0.0
  %1207 = vmatprep.subr.mxu0 0.0
  %1208 = vmatpush1.msra.mxu0 0.0
  %1209 = vmatprep.subr.mxu0 0.0
  %1210 = vmatpush1.msra.mxu0 0.0
  %1211 = vmatprep.subr.mxu0 0.0
  %1212 = vmatpush1.msra.mxu0 0.0
  %1213 = vmatprep.subr.mxu0 0.0
  %1214 = vmatpush1.msra.mxu0 0.0
  %1215 = vmatprep.subr.mxu0 0.0
  %1216 = vmatpush1.msra.mxu0 0.0
  %1217 = vmatprep.subr.mxu0 0.0
  %1218 = vmatpush1.msra.mxu0 0.0
  %1219 = vmatprep.subr.mxu0 0.0
  %1220 = vmatpush1.msra.mxu0 0.0
  %1221 = vmatprep.subr.mxu0 0.0
  %1222 = vmatpush1.msra.mxu0 0.0
  %1223 = vmatprep.subr.mxu0 0.0
  %1224 = vmatpush1.msra.mxu0 0.0
  %1225 = vmatprep.subr.mxu0 0.0
  %1226 = vmatpush1.msra.mxu0 0.0
  %1227 = vmatprep.subr.mxu0 0.0
  %1228 = vmatpush1.msra.mxu0 0.0
  %1229 = vmatprep.subr.mxu0 0.0
  %1230 = vmatpush1.msra.mxu0 0.0
  %1231 = vmatprep.subr.mxu0 0.0
  %1232 = vmatpush1.msra.mxu0 0.0
  %1233 = vmatprep.subr.mxu0 0.0
  %1234 = vmatpush1.msra.mxu0 0.0
  %1235 = vmatprep.subr.mxu0 0.0
  %1236 = vmatpush1.msra.mxu0 0.0
  %1237 = vmatprep.subr.mxu0 0.0
  %1238 = vmatpush1.msra.mxu0 0.0
  %1239 = vmatprep.subr.mxu0 0.0
  %1240 = vmatpush1.msra.mxu0 0.0
  %1241 = vmatprep.subr.mxu0 0.0
  %1242 = vmatpush1.msra.mxu0 0.0
  %1243 = vmatprep.subr.mxu0 0.0
  %1244 = vmatpush1.msra.mxu0 0.0
  %1245 = vmatprep.subr.mxu0 0.0
  %1246 = vmatpush1.msra.mxu0 0.0
  %1247 = vmatprep.subr.mxu0 0.0
  %1248 = vmatpush1.msra.mxu0 0.0
  %1249 = vmatprep.subr.mxu0 0.0
  %1250 = vmatpush1.msra.mxu0 0.0
  %1251 = vmatprep.subr.mxu0 0.0
  %1252 = vmatpush1.msra.mxu0 0.0
  %1253 = vmatprep.subr.mxu0 0.0
  %1254 = vmatpush1.msra.mxu0 0.0
  %1255 = vmatprep.subr.mxu0 0.0
  %1256 = vmatpush1.msra.mxu0 0.0
  %1257 = vmatprep.subr.mxu0 0.0
  %1258 = vmatpush1.msra.mxu0 0.0
  %1259 = vmatprep.subr.mxu0 0.0
  %1260 = vmatpush1.msra.mxu0 0.0
  %1261 = vmatprep.subr.mxu0 0.0
  %1262 = vmatpush1.msra.mxu0 0.0
  %1263 = vmatprep.mubr.f32.mxu0 0.0
  %1264 = vmatmul.mubr.f32.gmra.mrb[0].mxu0 %v1194
  %v1265 = vpop.f32.mrb[0].mxu0
  %v1266 = vadd.f32 0.0, %v1265
  %v1267 = vpop.f32.mrb[0].mxu0
  %1268 = vmatprep.mubr.f32.mxu0 0.0
  %1269 = vmatmul.mubr.f32.gmra.mrb[0].mxu0 %v1197
  %v1270 = vpop.f32.mrb[0].mxu0
  %v1271 = vadd.f32 0.0, %v1270
  %v1272 = vpop.f32.mrb[0].mxu0
  %1273 = vdwg.mxu0
  %1274 = vrot.lane.b32.xlu0 %v1066, 112
  %v1275 = vpop.permute.xlu0 %1274
  %1276 = vrot.lane.b32.xlu0 %v1071, 112
  %v1277 = vpop.permute.xlu0 %1276
  %1278 = vrot.lane.b32.xlu0 %v1066, 80
  %v1279 = vpop.permute.xlu0 %1278
  %1280 = vrot.lane.b32.xlu0 %v1071, 80
  %v1281 = vpop.permute.xlu0 %1280
  %v1282 = vsel %vm153, %v1275, 0
  %v1284 = vsel %vm153, %v1277, 0
  %v1286 = vsel %vm153, %v1279, 0
  %v1288 = vsel %vm153, %v1281, 0
  %1290 = vmatprep.subr.mxu0 0.0
  %1291 = vmatpush1.xpose.msra.mxu0 %v1286
  %1292 = vmatprep.subr.mxu0 0.0
  %1293 = vmatpush1.xpose.msra.mxu0 %v1288
  %1294 = vmatprep.subr.mxu0 0.0
  %1295 = vmatpush1.xpose.msra.mxu0 0.0
  %1296 = vmatprep.subr.mxu0 0.0
  %1297 = vmatpush1.xpose.msra.mxu0 0.0
  %1298 = vmatprep.subr.mxu0 0.0
  %1299 = vmatpush1.xpose.msra.mxu0 0.0
  %1300 = vmatprep.subr.mxu0 0.0
  %1301 = vmatpush1.xpose.msra.mxu0 0.0
  %1302 = vmatprep.subr.mxu0 0.0
  %1303 = vmatpush1.xpose.msra.mxu0 0.0
  %1304 = vmatprep.subr.mxu0 0.0
  %1305 = vmatpush1.xpose.msra.mxu0 0.0
  %1306 = vmatprep.subr.mxu0 0.0
  %1307 = vmatpush1.xpose.msra.mxu0 0.0
  %1308 = vmatprep.subr.mxu0 0.0
  %1309 = vmatpush1.xpose.msra.mxu0 0.0
  %1310 = vmatprep.subr.mxu0 0.0
  %1311 = vmatpush1.xpose.msra.mxu0 0.0
  %1312 = vmatprep.subr.mxu0 0.0
  %1313 = vmatpush1.xpose.msra.mxu0 0.0
  %1314 = vmatprep.subr.mxu0 0.0
  %1315 = vmatpush1.xpose.msra.mxu0 0.0
  %1316 = vmatprep.subr.mxu0 0.0
  %1317 = vmatpush1.xpose.msra.mxu0 0.0
  %1318 = vmatprep.subr.mxu0 0.0
  %1319 = vmatpush1.xpose.msra.mxu0 0.0
  %1320 = vmatprep.subr.mxu0 0.0
  %1321 = vmatpush1.xpose.msra.mxu0 0.0
  %1322 = vmatprep.subr.mxu0 0.0
  %1323 = vmatpush1.xpose.msra.mxu0 0.0
  %1324 = vmatprep.subr.mxu0 0.0
  %1325 = vmatpush1.xpose.msra.mxu0 0.0
  %1326 = vmatprep.subr.mxu0 0.0
  %1327 = vmatpush1.xpose.msra.mxu0 0.0
  %1328 = vmatprep.subr.mxu0 0.0
  %1329 = vmatpush1.xpose.msra.mxu0 0.0
  %1330 = vmatprep.subr.mxu0 0.0
  %1331 = vmatpush1.xpose.msra.mxu0 0.0
  %1332 = vmatprep.subr.mxu0 0.0
  %1333 = vmatpush1.xpose.msra.mxu0 0.0
  %1334 = vmatprep.subr.mxu0 0.0
  %1335 = vmatpush1.xpose.msra.mxu0 0.0
  %1336 = vmatprep.subr.mxu0 0.0
  %1337 = vmatpush1.xpose.msra.mxu0 0.0
  %1338 = vmatprep.subr.mxu0 0.0
  %1339 = vmatpush1.xpose.msra.mxu0 0.0
  %1340 = vmatprep.subr.mxu0 0.0
  %1341 = vmatpush1.xpose.msra.mxu0 0.0
  %1342 = vmatprep.subr.mxu0 0.0
  %1343 = vmatpush1.xpose.msra.mxu0 0.0
  %1344 = vmatprep.subr.mxu0 0.0
  %1345 = vmatpush1.xpose.msra.mxu0 0.0
  %1346 = vmatprep.subr.mxu0 0.0
  %1347 = vmatpush1.xpose.msra.mxu0 0.0
  %1348 = vmatprep.subr.mxu0 0.0
  %1349 = vmatpush1.xpose.msra.mxu0 0.0
  %1350 = vmatprep.subr.mxu0 0.0
  %1351 = vmatpush1.xpose.msra.mxu0 0.0
  %1352 = vmatprep.subr.mxu0 0.0
  %1353 = vmatpush1.xpose.msra.mxu0 0.0
  %1354 = vmatprep.mubr.f32.mxu0 0.0
  %1355 = vmatmul.mubr.f32.gmra.mrb[0].mxu0 %v1282
  %v1356 = vpop.f32.mrb[0].mxu0
  %v1357 = vadd.f32 0.0, %v1356
  %v1358 = vpop.f32.mrb[0].mxu0
  %1359 = vmatprep.mubr.f32.mxu0 0.0
  %1360 = vmatmul.mubr.f32.gmra.mrb[0].mxu0 %v1284
  %v1361 = vpop.f32.mrb[0].mxu0
  %v1362 = vadd.f32 0.0, %v1361
  %v1363 = vpop.f32.mrb[0].mxu0
  %1364 = vdwg.mxu0
  %v1365 = vsel %vm34, %v1357, -1e+30
  %v1366 = vsel %vm35, %v1362, -1e+30
  %v1367 = vsel %vm153, %v1365, -inf
  %1368 = vmax.xlane.f32.xlu0 %v1367
  %v1369 = vpop.xlane.xlu0 %1368
  %v1370 = vsel %vm153, %v1366, -inf
  %1371 = vmax.xlane.f32.xlu0 %v1370
  %v1372 = vpop.xlane.xlu0 %1371
  %v1373 = vsub.f32 %v1365, %v1369
  %v1374 = vsub.f32 %v1366, %v1372
  %v1375 = vmul.f32 %v1373, 1.442695
  %v1376 = vpow.pop %v1375
  %v1377 = vmul.f32 %v1374, 1.442695
  %v1378 = vpow.pop %v1377
  %v1379 = vsel %vm153, %v1376, 0.0
  %1380 = vadd.xlane.f32.xlu0 %v1379
  %v1381 = vpop.xlane.xlu0 %1380
  %v1382 = vsel %vm153, %v1378, 0.0
  %1383 = vadd.xlane.f32.xlu0 %v1382
  %v1384 = vpop.xlane.xlu0 %1383
  %v1385 = vrcp.pop %v1381
  %v1386 = vrcp.pop %v1384
  %v1387 = vmul.f32 %v1376, %v1385
  %v1388 = vmul.f32 %v1378, %v1386
  %1389 = vrot.lane.b32.xlu0 %v1066, 48
  %v1390 = vpop.permute.xlu0 %1389
  %1391 = vrot.lane.b32.xlu0 %v1071, 48
  %v1392 = vpop.permute.xlu0 %1391
  %v1396 = vsel %vm153, %v1387, 0
  %v1399 = vsel %vm153, %v1388, 0
  %1401 = vmatprep.subr.mxu0 0.0
  %1402 = vmatpush1.msra.mxu0 %v1390
  %1403 = vmatprep.subr.mxu0 0.0
  %1404 = vmatpush1.msra.mxu0 %v1392
  %1405 = vmatprep.subr.mxu0 0.0
  %1406 = vmatpush1.msra.mxu0 0.0
  %1407 = vmatprep.subr.mxu0 0.0
  %1408 = vmatpush1.msra.mxu0 0.0
  %1409 = vmatprep.subr.mxu0 0.0
  %1410 = vmatpush1.msra.mxu0 0.0
  %1411 = vmatprep.subr.mxu0 0.0
  %1412 = vmatpush1.msra.mxu0 0.0
  %1413 = vmatprep.subr.mxu0 0.0
  %1414 = vmatpush1.msra.mxu0 0.0
  %1415 = vmatprep.subr.mxu0 0.0
  %1416 = vmatpush1.msra.mxu0 0.0
  %1417 = vmatprep.subr.mxu0 0.0
  %1418 = vmatpush1.msra.mxu0 0.0
  %1419 = vmatprep.subr.mxu0 0.0
  %1420 = vmatpush1.msra.mxu0 0.0
  %1421 = vmatprep.subr.mxu0 0.0
  %1422 = vmatpush1.msra.mxu0 0.0
  %1423 = vmatprep.subr.mxu0 0.0
  %1424 = vmatpush1.msra.mxu0 0.0
  %1425 = vmatprep.subr.mxu0 0.0
  %1426 = vmatpush1.msra.mxu0 0.0
  %1427 = vmatprep.subr.mxu0 0.0
  %1428 = vmatpush1.msra.mxu0 0.0
  %1429 = vmatprep.subr.mxu0 0.0
  %1430 = vmatpush1.msra.mxu0 0.0
  %1431 = vmatprep.subr.mxu0 0.0
  %1432 = vmatpush1.msra.mxu0 0.0
  %1433 = vmatprep.subr.mxu0 0.0
  %1434 = vmatpush1.msra.mxu0 0.0
  %1435 = vmatprep.subr.mxu0 0.0
  %1436 = vmatpush1.msra.mxu0 0.0
  %1437 = vmatprep.subr.mxu0 0.0
  %1438 = vmatpush1.msra.mxu0 0.0
  %1439 = vmatprep.subr.mxu0 0.0
  %1440 = vmatpush1.msra.mxu0 0.0
  %1441 = vmatprep.subr.mxu0 0.0
  %1442 = vmatpush1.msra.mxu0 0.0
  %1443 = vmatprep.subr.mxu0 0.0
  %1444 = vmatpush1.msra.mxu0 0.0
  %1445 = vmatprep.subr.mxu0 0.0
  %1446 = vmatpush1.msra.mxu0 0.0
  %1447 = vmatprep.subr.mxu0 0.0
  %1448 = vmatpush1.msra.mxu0 0.0
  %1449 = vmatprep.subr.mxu0 0.0
  %1450 = vmatpush1.msra.mxu0 0.0
  %1451 = vmatprep.subr.mxu0 0.0
  %1452 = vmatpush1.msra.mxu0 0.0
  %1453 = vmatprep.subr.mxu0 0.0
  %1454 = vmatpush1.msra.mxu0 0.0
  %1455 = vmatprep.subr.mxu0 0.0
  %1456 = vmatpush1.msra.mxu0 0.0
  %1457 = vmatprep.subr.mxu0 0.0
  %1458 = vmatpush1.msra.mxu0 0.0
  %1459 = vmatprep.subr.mxu0 0.0
  %1460 = vmatpush1.msra.mxu0 0.0
  %1461 = vmatprep.subr.mxu0 0.0
  %1462 = vmatpush1.msra.mxu0 0.0
  %1463 = vmatprep.subr.mxu0 0.0
  %1464 = vmatpush1.msra.mxu0 0.0
  %1465 = vmatprep.mubr.f32.mxu0 0.0
  %1466 = vmatmul.mubr.f32.gmra.mrb[0].mxu0 %v1396
  %v1467 = vpop.f32.mrb[0].mxu0
  %v1468 = vadd.f32 0.0, %v1467
  %v1469 = vpop.f32.mrb[0].mxu0
  %1470 = vmatprep.mubr.f32.mxu0 0.0
  %1471 = vmatmul.mubr.f32.gmra.mrb[0].mxu0 %v1399
  %v1472 = vpop.f32.mrb[0].mxu0
  %v1473 = vadd.f32 0.0, %v1472
  %v1474 = vpop.f32.mrb[0].mxu0
  %1475 = vdwg.mxu0
  %1478 = vrot.lane.b32.xlu0 %v982, 32
  %v1479 = vpop.permute.xlu0 %1478
  %1480 = vrot.lane.b32.xlu0 %v983, 32
  %v1481 = vpop.permute.xlu0 %1480
  %v1485 = vsel %vm153, %v1468, 0
  %v1488 = vsel %vm153, %v1473, 0
  %1490 = vmatprep.subr.mxu0 0.0
  %1491 = vmatpush1.msra.mxu0 %v1479
  %1492 = vmatprep.subr.mxu0 0.0
  %1493 = vmatpush1.msra.mxu0 %v1481
  %1494 = vmatprep.subr.mxu0 0.0
  %1495 = vmatpush1.msra.mxu0 0.0
  %1496 = vmatprep.subr.mxu0 0.0
  %1497 = vmatpush1.msra.mxu0 0.0
  %1498 = vmatprep.subr.mxu0 0.0
  %1499 = vmatpush1.msra.mxu0 0.0
  %1500 = vmatprep.subr.mxu0 0.0
  %1501 = vmatpush1.msra.mxu0 0.0
  %1502 = vmatprep.subr.mxu0 0.0
  %1503 = vmatpush1.msra.mxu0 0.0
  %1504 = vmatprep.subr.mxu0 0.0
  %1505 = vmatpush1.msra.mxu0 0.0
  %1506 = vmatprep.subr.mxu0 0.0
  %1507 = vmatpush1.msra.mxu0 0.0
  %1508 = vmatprep.subr.mxu0 0.0
  %1509 = vmatpush1.msra.mxu0 0.0
  %1510 = vmatprep.subr.mxu0 0.0
  %1511 = vmatpush1.msra.mxu0 0.0
  %1512 = vmatprep.subr.mxu0 0.0
  %1513 = vmatpush1.msra.mxu0 0.0
  %1514 = vmatprep.subr.mxu0 0.0
  %1515 = vmatpush1.msra.mxu0 0.0
  %1516 = vmatprep.subr.mxu0 0.0
  %1517 = vmatpush1.msra.mxu0 0.0
  %1518 = vmatprep.subr.mxu0 0.0
  %1519 = vmatpush1.msra.mxu0 0.0
  %1520 = vmatprep.subr.mxu0 0.0
  %1521 = vmatpush1.msra.mxu0 0.0
  %1522 = vmatprep.subr.mxu0 0.0
  %1523 = vmatpush1.msra.mxu0 0.0
  %1524 = vmatprep.subr.mxu0 0.0
  %1525 = vmatpush1.msra.mxu0 0.0
  %1526 = vmatprep.subr.mxu0 0.0
  %1527 = vmatpush1.msra.mxu0 0.0
  %1528 = vmatprep.subr.mxu0 0.0
  %1529 = vmatpush1.msra.mxu0 0.0
  %1530 = vmatprep.subr.mxu0 0.0
  %1531 = vmatpush1.msra.mxu0 0.0
  %1532 = vmatprep.subr.mxu0 0.0
  %1533 = vmatpush1.msra.mxu0 0.0
  %1534 = vmatprep.subr.mxu0 0.0
  %1535 = vmatpush1.msra.mxu0 0.0
  %1536 = vmatprep.subr.mxu0 0.0
  %1537 = vmatpush1.msra.mxu0 0.0
  %1538 = vmatprep.subr.mxu0 0.0
  %1539 = vmatpush1.msra.mxu0 0.0
  %1540 = vmatprep.subr.mxu0 0.0
  %1541 = vmatpush1.msra.mxu0 0.0
  %1542 = vmatprep.subr.mxu0 0.0
  %1543 = vmatpush1.msra.mxu0 0.0
  %1544 = vmatprep.subr.mxu0 0.0
  %1545 = vmatpush1.msra.mxu0 0.0
  %1546 = vmatprep.subr.mxu0 0.0
  %1547 = vmatpush1.msra.mxu0 0.0
  %1548 = vmatprep.subr.mxu0 0.0
  %1549 = vmatpush1.msra.mxu0 0.0
  %1550 = vmatprep.subr.mxu0 0.0
  %1551 = vmatpush1.msra.mxu0 0.0
  %1552 = vmatprep.subr.mxu0 0.0
  %1553 = vmatpush1.msra.mxu0 0.0
  %1554 = vmatprep.mubr.f32.mxu0 0.0
  %1555 = vmatmul.mubr.f32.gmra.mrb[0].mxu0 %v1485
  %v1556 = vpop.f32.mrb[0].mxu0
  %v1557 = vadd.f32 0.0, %v1556
  %v1558 = vpop.f32.mrb[0].mxu0
  %1559 = vmatprep.mubr.f32.mxu0 0.0
  %1560 = vmatmul.mubr.f32.gmra.mrb[0].mxu0 %v1488
  %v1561 = vpop.f32.mrb[0].mxu0
  %v1562 = vadd.f32 0.0, %v1561
  %v1563 = vpop.f32.mrb[0].mxu0
  %1564 = vdwg.mxu0
  %1567 = vrot.lane.b32.xlu0 %v980, 32
  %v1568 = vpop.permute.xlu0 %1567
  %1569 = vrot.lane.b32.xlu0 %v981, 32
  %v1570 = vpop.permute.xlu0 %1569
  %v1574 = vsel %vm153, %v1266, 0
  %v1577 = vsel %vm153, %v1271, 0
  %1579 = vmatprep.subr.mxu0 0.0
  %1580 = vmatpush1.msra.mxu0 %v1568
  %1581 = vmatprep.subr.mxu0 0.0
  %1582 = vmatpush1.msra.mxu0 %v1570
  %1583 = vmatprep.subr.mxu0 0.0
  %1584 = vmatpush1.msra.mxu0 0.0
  %1585 = vmatprep.subr.mxu0 0.0
  %1586 = vmatpush1.msra.mxu0 0.0
  %1587 = vmatprep.subr.mxu0 0.0
  %1588 = vmatpush1.msra.mxu0 0.0
  %1589 = vmatprep.subr.mxu0 0.0
  %1590 = vmatpush1.msra.mxu0 0.0
  %1591 = vmatprep.subr.mxu0 0.0
  %1592 = vmatpush1.msra.mxu0 0.0
  %1593 = vmatprep.subr.mxu0 0.0
  %1594 = vmatpush1.msra.mxu0 0.0
  %1595 = vmatprep.subr.mxu0 0.0
  %1596 = vmatpush1.msra.mxu0 0.0
  %1597 = vmatprep.subr.mxu0 0.0
  %1598 = vmatpush1.msra.mxu0 0.0
  %1599 = vmatprep.subr.mxu0 0.0
  %1600 = vmatpush1.msra.mxu0 0.0
  %1601 = vmatprep.subr.mxu0 0.0
  %1602 = vmatpush1.msra.mxu0 0.0
  %1603 = vmatprep.subr.mxu0 0.0
  %1604 = vmatpush1.msra.mxu0 0.0
  %1605 = vmatprep.subr.mxu0 0.0
  %1606 = vmatpush1.msra.mxu0 0.0
  %1607 = vmatprep.subr.mxu0 0.0
  %1608 = vmatpush1.msra.mxu0 0.0
  %1609 = vmatprep.subr.mxu0 0.0
  %1610 = vmatpush1.msra.mxu0 0.0
  %1611 = vmatprep.subr.mxu0 0.0
  %1612 = vmatpush1.msra.mxu0 0.0
  %1613 = vmatprep.subr.mxu0 0.0
  %1614 = vmatpush1.msra.mxu0 0.0
  %1615 = vmatprep.subr.mxu0 0.0
  %1616 = vmatpush1.msra.mxu0 0.0
  %1617 = vmatprep.subr.mxu0 0.0
  %1618 = vmatpush1.msra.mxu0 0.0
  %1619 = vmatprep.subr.mxu0 0.0
  %1620 = vmatpush1.msra.mxu0 0.0
  %1621 = vmatprep.subr.mxu0 0.0
  %1622 = vmatpush1.msra.mxu0 0.0
  %1623 = vmatprep.subr.mxu0 0.0
  %1624 = vmatpush1.msra.mxu0 0.0
  %1625 = vmatprep.subr.mxu0 0.0
  %1626 = vmatpush1.msra.mxu0 0.0
  %1627 = vmatprep.subr.mxu0 0.0
  %1628 = vmatpush1.msra.mxu0 0.0
  %1629 = vmatprep.subr.mxu0 0.0
  %1630 = vmatpush1.msra.mxu0 0.0
  %1631 = vmatprep.subr.mxu0 0.0
  %1632 = vmatpush1.msra.mxu0 0.0
  %1633 = vmatprep.subr.mxu0 0.0
  %1634 = vmatpush1.msra.mxu0 0.0
  %1635 = vmatprep.subr.mxu0 0.0
  %1636 = vmatpush1.msra.mxu0 0.0
  %1637 = vmatprep.subr.mxu0 0.0
  %1638 = vmatpush1.msra.mxu0 0.0
  %1639 = vmatprep.subr.mxu0 0.0
  %1640 = vmatpush1.msra.mxu0 0.0
  %1641 = vmatprep.subr.mxu0 0.0
  %1642 = vmatpush1.msra.mxu0 0.0
  %1643 = vmatprep.mubr.f32.mxu0 0.0
  %1644 = vmatmul.mubr.f32.gmra.mrb[0].mxu0 %v1574
  %v1645 = vpop.f32.mrb[0].mxu0
  %v1646 = vadd.f32 %v1557, %v1645
  %v1647 = vpop.f32.mrb[0].mxu0
  %1648 = vmatprep.mubr.f32.mxu0 0.0
  %1649 = vmatmul.mubr.f32.gmra.mrb[0].mxu0 %v1577
  %v1650 = vpop.f32.mrb[0].mxu0
  %v1651 = vadd.f32 %v1562, %v1650
  %v1652 = vpop.f32.mrb[0].mxu0
  %1653 = vdwg.mxu0
  %1655 = vrot.lane.b32.xlu0 %v992, 32
  %v1656 = vpop.permute.xlu0 %1655
  %v1658 = vadd.f32 %v1646, %v1656
  %v1659 = vadd.f32 %v1651, %v1656
  %v1660 = vadd.f32 %v977, %v1658
  %v1661 = vadd.f32 %v978, %v1659
  %v1662 = vsel %vm65, %v1660, 0.0
  %1663 = vadd.xlane.f32.xlu0 %v1662
  %v1664 = vpop.xlane.xlu0 %1663
  %v1665 = vsel %vm65, %v1661, 0.0
  %1666 = vadd.xlane.f32.xlu0 %v1665
  %v1667 = vpop.xlane.xlu0 %1666
  %v1668 = vmul.f32 %v1664, %v742
  %v1669 = vmul.f32 %v1667, %v742
  %v1670 = vsub.f32 %v1660, %v1668
  %v1671 = vsub.f32 %v1661, %v1669
  %v1672 = vmul.f32 %v1670, %v1670
  %v1673 = vmul.f32 %v1671, %v1671
  %v1674 = vsel %vm65, %v1672, 0.0
  %1675 = vadd.xlane.f32.xlu0 %v1674
  %v1676 = vpop.xlane.xlu0 %1675
  %v1677 = vsel %vm65, %v1673, 0.0
  %1678 = vadd.xlane.f32.xlu0 %v1677
  %v1679 = vpop.xlane.xlu0 %1678
  %v1680 = vmul.f32 %v1676, %v742
  %v1681 = vmul.f32 %v1679, %v742
  %v1682 = vadd.f32 %v1680, 1e-05
  %v1683 = vadd.f32 %v1681, 1e-05
  %v1684 = vrsqrt.pop %v1682
  %v1685 = vrsqrt.pop %v1683
  %v1686 = vmul.f32 %v1670, %v1684
  %v1687 = vmul.f32 %v1671, %v1685
  %v1688 = vlaneseq
  %v1689 = vshrl.u32 %v1688, 7
  %v1690 = vsub.s32 1, %v1689
  %v1691 = vrot.slane %v988, %v1690
  %v1692 = vmul.f32 %v1686, %v1691
  %v1693 = vmul.f32 %v1687, %v1691
  %1695 = vrot.lane.b32.xlu0 %v1691, 96
  %v1696 = vpop.permute.xlu0 %1695
  %v1698 = vadd.f32 %v1692, %v1696
  %v1699 = vadd.f32 %v1693, %v1696
  %v1700 = vlaneseq
  %v1701 = vshrl.u32 %v1700, 7
  %v1702 = vsub.s32 2, %v1701
  %v1703 = vrot.slane %v988, %v1702
  %v1705 = vsel %vm65, %v1698, 0
  %v1708 = vsel %vm65, %v1699, 0
  %1710 = vmatprep.subr.mxu0 0.0
  %1711 = vmatpush1.msra.mxu0 %v984
  %1712 = vmatprep.subr.mxu0 0.0
  %1713 = vmatpush1.msra.mxu0 %v985
  %1714 = vmatprep.subr.mxu0 0.0
  %1715 = vmatpush1.msra.mxu0 %v986
  %1716 = vmatprep.subr.mxu0 0.0
  %1717 = vmatpush1.msra.mxu0 %v987
  %1718 = vmatprep.subr.mxu0 0.0
  %1719 = vmatpush1.msra.mxu0 0.0
  %1720 = vmatprep.subr.mxu0 0.0
  %1721 = vmatpush1.msra.mxu0 0.0
  %1722 = vmatprep.subr.mxu0 0.0
  %1723 = vmatpush1.msra.mxu0 0.0
  %1724 = vmatprep.subr.mxu0 0.0
  %1725 = vmatpush1.msra.mxu0 0.0
  %1726 = vmatprep.subr.mxu0 0.0
  %1727 = vmatpush1.msra.mxu0 0.0
  %1728 = vmatprep.subr.mxu0 0.0
  %1729 = vmatpush1.msra.mxu0 0.0
  %1730 = vmatprep.subr.mxu0 0.0
  %1731 = vmatpush1.msra.mxu0 0.0
  %1732 = vmatprep.subr.mxu0 0.0
  %1733 = vmatpush1.msra.mxu0 0.0
  %1734 = vmatprep.subr.mxu0 0.0
  %1735 = vmatpush1.msra.mxu0 0.0
  %1736 = vmatprep.subr.mxu0 0.0
  %1737 = vmatpush1.msra.mxu0 0.0
  %1738 = vmatprep.subr.mxu0 0.0
  %1739 = vmatpush1.msra.mxu0 0.0
  %1740 = vmatprep.subr.mxu0 0.0
  %1741 = vmatpush1.msra.mxu0 0.0
  %1742 = vmatprep.subr.mxu0 0.0
  %1743 = vmatpush1.msra.mxu0 0.0
  %1744 = vmatprep.subr.mxu0 0.0
  %1745 = vmatpush1.msra.mxu0 0.0
  %1746 = vmatprep.subr.mxu0 0.0
  %1747 = vmatpush1.msra.mxu0 0.0
  %1748 = vmatprep.subr.mxu0 0.0
  %1749 = vmatpush1.msra.mxu0 0.0
  %1750 = vmatprep.subr.mxu0 0.0
  %1751 = vmatpush1.msra.mxu0 0.0
  %1752 = vmatprep.subr.mxu0 0.0
  %1753 = vmatpush1.msra.mxu0 0.0
  %1754 = vmatprep.subr.mxu0 0.0
  %1755 = vmatpush1.msra.mxu0 0.0
  %1756 = vmatprep.subr.mxu0 0.0
  %1757 = vmatpush1.msra.mxu0 0.0
  %1758 = vmatprep.subr.mxu0 0.0
  %1759 = vmatpush1.msra.mxu0 0.0
  %1760 = vmatprep.subr.mxu0 0.0
  %1761 = vmatpush1.msra.mxu0 0.0
  %1762 = vmatprep.subr.mxu0 0.0
  %1763 = vmatpush1.msra.mxu0 0.0
  %1764 = vmatprep.subr.mxu0 0.0
  %1765 = vmatpush1.msra.mxu0 0.0
  %1766 = vmatprep.subr.mxu0 0.0
  %1767 = vmatpush1.msra.mxu0 0.0
  %1768 = vmatprep.subr.mxu0 0.0
  %1769 = vmatpush1.msra.mxu0 0.0
  %1770 = vmatprep.subr.mxu0 0.0
  %1771 = vmatpush1.msra.mxu0 0.0
  %1772 = vmatprep.subr.mxu0 0.0
  %1773 = vmatpush1.msra.mxu0 0.0
  %1774 = vmatprep.mubr.f32.mxu0 0.0
  %1775 = vmatmul.mubr.f32.gmra.mrb[0].mxu0 %v1705
  %v1776 = vpop.f32.mrb[0].mxu0
  %v1777 = vadd.f32 %v1703, %v1776
  %v1778 = vpop.f32.mrb[0].mxu0
  %1779 = vmatprep.mubr.f32.mxu0 0.0
  %1780 = vmatmul.mubr.f32.gmra.mrb[0].mxu0 %v1708
  %v1781 = vpop.f32.mrb[0].mxu0
  %v1782 = vadd.f32 %v1703, %v1781
  %v1783 = vpop.f32.mrb[0].mxu0
  %1784 = vdwg.mxu0
  %v1785 = vmax.f32 %v1777, 0.0
  %v1786 = vmax.f32 %v1782, 0.0
  %v1787 = vlaneseq
  %v1788 = vshrl.u32 %v1787, 7
  %v1789 = vsub.s32 3, %v1788
  %v1790 = vrot.slane %v988, %v1789
  %1807 = vrot.lane.b32.xlu0 %v36, 96
  %v1808 = vpop.permute.xlu0 %1807
  %1809 = vrot.lane.b32.xlu0 %v37, 96
  %v1810 = vpop.permute.xlu0 %1809
  %1811 = vrot.lane.b32.xlu0 %v38, 96
  %v1812 = vpop.permute.xlu0 %1811
  %1813 = vrot.lane.b32.xlu0 %v39, 96
  %v1814 = vpop.permute.xlu0 %1813
  %1815 = vrot.lane.b32.xlu0 %v40, 96
  %v1816 = vpop.permute.xlu0 %1815
  %1817 = vrot.lane.b32.xlu0 %v41, 96
  %v1818 = vpop.permute.xlu0 %1817
  %1819 = vrot.lane.b32.xlu0 %v42, 96
  %v1820 = vpop.permute.xlu0 %1819
  %1821 = vrot.lane.b32.xlu0 %v43, 96
  %v1822 = vpop.permute.xlu0 %1821
  %1823 = vrot.lane.b32.xlu0 %v44, 96
  %v1824 = vpop.permute.xlu0 %1823
  %1825 = vrot.lane.b32.xlu0 %v45, 96
  %v1826 = vpop.permute.xlu0 %1825
  %1827 = vrot.lane.b32.xlu0 %v46, 96
  %v1828 = vpop.permute.xlu0 %1827
  %1829 = vrot.lane.b32.xlu0 %v47, 96
  %v1830 = vpop.permute.xlu0 %1829
  %1831 = vrot.lane.b32.xlu0 %v48, 96
  %v1832 = vpop.permute.xlu0 %1831
  %1833 = vrot.lane.b32.xlu0 %v49, 96
  %v1834 = vpop.permute.xlu0 %1833
  %1835 = vrot.lane.b32.xlu0 %v50, 96
  %v1836 = vpop.permute.xlu0 %1835
  %1837 = vrot.lane.b32.xlu0 %v51, 96
  %v1838 = vpop.permute.xlu0 %1837
  %1855 = vmatprep.subr.mxu0 0.0
  %1856 = vmatpush1.msra.mxu0 %v1808
  %1857 = vmatprep.subr.mxu0 0.0
  %1858 = vmatpush1.msra.mxu0 %v1810
  %1859 = vmatprep.subr.mxu0 0.0
  %1860 = vmatpush1.msra.mxu0 %v1812
  %1861 = vmatprep.subr.mxu0 0.0
  %1862 = vmatpush1.msra.mxu0 %v1814
  %1863 = vmatprep.subr.mxu0 0.0
  %1864 = vmatpush1.msra.mxu0 %v1816
  %1865 = vmatprep.subr.mxu0 0.0
  %1866 = vmatpush1.msra.mxu0 %v1818
  %1867 = vmatprep.subr.mxu0 0.0
  %1868 = vmatpush1.msra.mxu0 %v1820
  %1869 = vmatprep.subr.mxu0 0.0
  %1870 = vmatpush1.msra.mxu0 %v1822
  %1871 = vmatprep.subr.mxu0 0.0
  %1872 = vmatpush1.msra.mxu0 %v1824
  %1873 = vmatprep.subr.mxu0 0.0
  %1874 = vmatpush1.msra.mxu0 %v1826
  %1875 = vmatprep.subr.mxu0 0.0
  %1876 = vmatpush1.msra.mxu0 %v1828
  %1877 = vmatprep.subr.mxu0 0.0
  %1878 = vmatpush1.msra.mxu0 %v1830
  %1879 = vmatprep.subr.mxu0 0.0
  %1880 = vmatpush1.msra.mxu0 %v1832
  %1881 = vmatprep.subr.mxu0 0.0
  %1882 = vmatpush1.msra.mxu0 %v1834
  %1883 = vmatprep.subr.mxu0 0.0
  %1884 = vmatpush1.msra.mxu0 %v1836
  %1885 = vmatprep.subr.mxu0 0.0
  %1886 = vmatpush1.msra.mxu0 %v1838
  %1887 = vmatprep.subr.mxu0 0.0
  %1888 = vmatpush1.msra.mxu0 0.0
  %1889 = vmatprep.subr.mxu0 0.0
  %1890 = vmatpush1.msra.mxu0 0.0
  %1891 = vmatprep.subr.mxu0 0.0
  %1892 = vmatpush1.msra.mxu0 0.0
  %1893 = vmatprep.subr.mxu0 0.0
  %1894 = vmatpush1.msra.mxu0 0.0
  %1895 = vmatprep.subr.mxu0 0.0
  %1896 = vmatpush1.msra.mxu0 0.0
  %1897 = vmatprep.subr.mxu0 0.0
  %1898 = vmatpush1.msra.mxu0 0.0
  %1899 = vmatprep.subr.mxu0 0.0
  %1900 = vmatpush1.msra.mxu0 0.0
  %1901 = vmatprep.subr.mxu0 0.0
  %1902 = vmatpush1.msra.mxu0 0.0
  %1903 = vmatprep.subr.mxu0 0.0
  %1904 = vmatpush1.msra.mxu0 0.0
  %1905 = vmatprep.subr.mxu0 0.0
  %1906 = vmatpush1.msra.mxu0 0.0
  %1907 = vmatprep.subr.mxu0 0.0
  %1908 = vmatpush1.msra.mxu0 0.0
  %1909 = vmatprep.subr.mxu0 0.0
  %1910 = vmatpush1.msra.mxu0 0.0
  %1911 = vmatprep.subr.mxu0 0.0
  %1912 = vmatpush1.msra.mxu0 0.0
  %1913 = vmatprep.subr.mxu0 0.0
  %1914 = vmatpush1.msra.mxu0 0.0
  %1915 = vmatprep.subr.mxu0 0.0
  %1916 = vmatpush1.msra.mxu0 0.0
  %1917 = vmatprep.subr.mxu0 0.0
  %1918 = vmatpush1.msra.mxu0 0.0
  %1919 = vmatprep.mubr.f32.mxu0 0.0
  %1920 = vmatmul.mubr.f32.gmra.mrb[0].mxu0 %v1785
  %v1921 = vpop.f32.mrb[0].mxu0
  %v1922 = vadd.f32 %v1790, %v1921
  %v1923 = vpop.f32.mrb[0].mxu0
  %1924 = vmatprep.mubr.f32.mxu0 0.0
  %1925 = vmatmul.mubr.f32.gmra.mrb[0].mxu0 %v1786
  %v1926 = vpop.f32.mrb[0].mxu0
  %v1927 = vadd.f32 %v1790, %v1926
  %v1928 = vpop.f32.mrb[0].mxu0
  %1929 = vdwg.mxu0
  %v1930 = vadd.f32 %v1698, %v1922
  %v1931 = vadd.f32 %v1699, %v1927
  %v1932 = vsel %vm65, %v1930, 0.0
  %1933 = vadd.xlane.f32.xlu0 %v1932
  %v1934 = vpop.xlane.xlu0 %1933
  %v1935 = vsel %vm65, %v1931, 0.0
  %1936 = vadd.xlane.f32.xlu0 %v1935
  %v1937 = vpop.xlane.xlu0 %1936
  %v1938 = vmul.f32 %v1934, %v742
  %v1939 = vmul.f32 %v1937, %v742
  %v1940 = vsub.f32 %v1930, %v1938
  %v1941 = vsub.f32 %v1931, %v1939
  %v1942 = vmul.f32 %v1940, %v1940
  %v1943 = vmul.f32 %v1941, %v1941
  %v1944 = vsel %vm65, %v1942, 0.0
  %1945 = vadd.xlane.f32.xlu0 %v1944
  %v1946 = vpop.xlane.xlu0 %1945
  %v1947 = vsel %vm65, %v1943, 0.0
  %1948 = vadd.xlane.f32.xlu0 %v1947
  %v1949 = vpop.xlane.xlu0 %1948
  %v1950 = vmul.f32 %v1946, %v742
  %v1951 = vmul.f32 %v1949, %v742
  %v1952 = vadd.f32 %v1950, 1e-05
  %v1953 = vadd.f32 %v1951, 1e-05
  %v1954 = vrsqrt.pop %v1952
  %v1955 = vrsqrt.pop %v1953
  %v1956 = vmul.f32 %v1940, %v1954
  %v1957 = vmul.f32 %v1941, %v1955
  %1958 = vrot.lane.b32.xlu0 %v1691, 64
  %v1959 = vpop.permute.xlu0 %1958
  %v1961 = vmul.f32 %v1956, %v1959
  %v1962 = vmul.f32 %v1957, %v1959
  %1963 = vrot.lane.b32.xlu0 %v1691, 32
  %v1964 = vpop.permute.xlu0 %1963
  %v1966 = vadd.f32 %v1961, %v1964
  %v1967 = vadd.f32 %v1962, %v1964
  %v1968 = vmul.f32 %v1966, %v1966
  %v1969 = vmul.f32 %v1967, %v1967
  %v1970 = vsel %vm65, %v1968, 0.0
  %1971 = vadd.xlane.f32.xlu0 %v1970
  %v1972 = vpop.xlane.xlu0 %1971
  %v1973 = vsel %vm65, %v1969, 0.0
  %1974 = vadd.xlane.f32.xlu0 %v1973
  %v1975 = vpop.xlane.xlu0 %1974
  %v1976 = vadd.f32 %v1972, 1e-12
  %v1977 = vadd.f32 %v1975, 1e-12
  %v1978 = vrsqrt.pop %v1976
  %v1979 = vrsqrt.pop %v1977
  %v1980 = vmul.f32 %v1966, %v1978
  %v1981 = vmul.f32 %v1967, %v1979
  %v1982 = vand.u32 %v27, 7
  %v1983 = vand.u32 %v28, 7
  %vm1984 = vcmp.eq.s32.totalorder %v29, 0
  %vm1985 = vcmp.eq.s32.totalorder %v30, 0
  %s1986 = sld [smem:[#allocation3]]
  %v1987 = vstv %s1986
  %v1988 = vsel %vm1984, %v1987, 0
  %v1989 = vsel %vm1985, %v1987, 0
  %vm1990 = vcmp.eq.s32.totalorder %v29, 1
  %vm1991 = vcmp.eq.s32.totalorder %v30, 1
  %s1992 = sld [smem:[#allocation3 + $0x1]]
  %v1993 = vstv %s1992
  %v1994 = vsel %vm1990, %v1993, %v1988
  %v1995 = vsel %vm1991, %v1993, %v1989
  %vm1996 = vcmp.lt.s32.totalorder %v1982, %v1994
  %vm1997 = vcmp.lt.s32.totalorder %v1983, %v1995
  %v1998 = vsel %vm1996, 1, 0
  %v1999 = vsel %vm1997, 1, 0
  %v2000 = vcvt.s32.f32 %v1998
  %v2001 = vcvt.s32.f32 %v1999
  %vm2002 = vcmp.gt.s32.totalorder %v1994, 0
  %vm2003 = vcmp.gt.s32.totalorder %v1995, 0
  %v2004 = vsub.s32 %v1994, 1
  %v2005 = vsub.s32 %v1995, 1
  %v2006 = vsel %vm2002, %v2004, 7
  %v2007 = vsel %vm2003, %v2005, 7
  %vm2008 = vcmp.eq.s32.totalorder %v1982, %v2006
  %vm2009 = vcmp.eq.s32.totalorder %v1983, %v2007
  %v2010 = vsel %vm2008, 1, 0
  %v2011 = vsel %vm2009, 1, 0
  %v2012 = vcvt.s32.f32 %v2010
  %v2013 = vcvt.s32.f32 %v2011
  %vm2014 = vcmp.eq.s32.totalorder %v27, %v33
  %v2015 = vsel %vm2014, 1, 0
  %v2016 = vcvt.s32.f32 %v2015
  %v2017 = vmul.f32 %v2012, %v1980
  %v2018 = vmul.f32 %v2013, %v1981
  %v2020 = vsel %vm153, %v2016, 0
  %2022 = vmatprep.subr.mxu0 0.0
  %2023 = vmatpush1.msra.mxu0 %v2017
  %2024 = vmatprep.subr.mxu0 0.0
  %2025 = vmatpush1.msra.mxu0 %v2018
  %2026 = vmatprep.subr.mxu0 0.0
  %2027 = vmatpush1.msra.mxu0 0.0
  %2028 = vmatprep.subr.mxu0 0.0
  %2029 = vmatpush1.msra.mxu0 0.0
  %2030 = vmatprep.subr.mxu0 0.0
  %2031 = vmatpush1.msra.mxu0 0.0
  %2032 = vmatprep.subr.mxu0 0.0
  %2033 = vmatpush1.msra.mxu0 0.0
  %2034 = vmatprep.subr.mxu0 0.0
  %2035 = vmatpush1.msra.mxu0 0.0
  %2036 = vmatprep.subr.mxu0 0.0
  %2037 = vmatpush1.msra.mxu0 0.0
  %2038 = vmatprep.subr.mxu0 0.0
  %2039 = vmatpush1.msra.mxu0 0.0
  %2040 = vmatprep.subr.mxu0 0.0
  %2041 = vmatpush1.msra.mxu0 0.0
  %2042 = vmatprep.subr.mxu0 0.0
  %2043 = vmatpush1.msra.mxu0 0.0
  %2044 = vmatprep.subr.mxu0 0.0
  %2045 = vmatpush1.msra.mxu0 0.0
  %2046 = vmatprep.subr.mxu0 0.0
  %2047 = vmatpush1.msra.mxu0 0.0
  %2048 = vmatprep.subr.mxu0 0.0
  %2049 = vmatpush1.msra.mxu0 0.0
  %2050 = vmatprep.subr.mxu0 0.0
  %2051 = vmatpush1.msra.mxu0 0.0
  %2052 = vmatprep.subr.mxu0 0.0
  %2053 = vmatpush1.msra.mxu0 0.0
  %2054 = vmatprep.subr.mxu0 0.0
  %2055 = vmatpush1.msra.mxu0 0.0
  %2056 = vmatprep.subr.mxu0 0.0
  %2057 = vmatpush1.msra.mxu0 0.0
  %2058 = vmatprep.subr.mxu0 0.0
  %2059 = vmatpush1.msra.mxu0 0.0
  %2060 = vmatprep.subr.mxu0 0.0
  %2061 = vmatpush1.msra.mxu0 0.0
  %2062 = vmatprep.subr.mxu0 0.0
  %2063 = vmatpush1.msra.mxu0 0.0
  %2064 = vmatprep.subr.mxu0 0.0
  %2065 = vmatpush1.msra.mxu0 0.0
  %2066 = vmatprep.subr.mxu0 0.0
  %2067 = vmatpush1.msra.mxu0 0.0
  %2068 = vmatprep.subr.mxu0 0.0
  %2069 = vmatpush1.msra.mxu0 0.0
  %2070 = vmatprep.subr.mxu0 0.0
  %2071 = vmatpush1.msra.mxu0 0.0
  %2072 = vmatprep.subr.mxu0 0.0
  %2073 = vmatpush1.msra.mxu0 0.0
  %2074 = vmatprep.subr.mxu0 0.0
  %2075 = vmatpush1.msra.mxu0 0.0
  %2076 = vmatprep.subr.mxu0 0.0
  %2077 = vmatpush1.msra.mxu0 0.0
  %2078 = vmatprep.subr.mxu0 0.0
  %2079 = vmatpush1.msra.mxu0 0.0
  %2080 = vmatprep.subr.mxu0 0.0
  %2081 = vmatpush1.msra.mxu0 0.0
  %2082 = vmatprep.subr.mxu0 0.0
  %2083 = vmatpush1.msra.mxu0 0.0
  %2084 = vmatprep.subr.mxu0 0.0
  %2085 = vmatpush1.msra.mxu0 0.0
  %2086 = vmatprep.mubr.f32.mxu0 0.0
  %2087 = vmatmul.mubr.f32.gmra.mrb[0].mxu0 %v2020
  %v2088 = vpop.f32.mrb[0].mxu0
  %v2089 = vadd.f32 0.0, %v2088
  %v2090 = vpop.f32.mrb[0].mxu0
  %2091 = vdwg.mxu0
  %v2092 = vld [vmem:[%s4] sm:$0xff]
  %v2093 = vld [vmem:[%s4 + $0x8] sm:$0xff]
  %v2094 = vld [vmem:[%s4 + $0x10] sm:$0xff]
  %v2095 = vld [vmem:[%s4 + $0x18] sm:$0xff]
  %v2096 = vld [vmem:[%s4 + $0x20] sm:$0xff]
  %v2097 = vld [vmem:[%s4 + $0x28] sm:$0xff]
  %v2098 = vld [vmem:[%s4 + $0x30] sm:$0xff]
  %v2099 = vld [vmem:[%s4 + $0x38] sm:$0xff]
  %v2100 = vld [vmem:[%s4 + $0x40] sm:$0xff]
  %v2101 = vld [vmem:[%s4 + $0x48] sm:$0xff]
  %v2102 = vld [vmem:[%s4 + $0x50] sm:$0xff]
  %v2103 = vld [vmem:[%s4 + $0x58] sm:$0xff]
  %v2104 = vld [vmem:[%s4 + $0x60] sm:$0xff]
  %v2105 = vld [vmem:[%s4 + $0x68] sm:$0xff]
  %v2106 = vld [vmem:[%s4 + $0x70] sm:$0xff]
  %v2107 = vld [vmem:[%s4 + $0x78] sm:$0xff]
  %v2108 = vld [vmem:[%s4 + $0x80] sm:$0xf]
  %v2109 = vlaneseq
  %v2110 = vshrl.u32 %v2109, 7
  %v2111 = vsub.s32 0, %v2110
  %v2112 = vrot.slane %v2108, %v2111
  %v2114 = vsel %vm65, %v2089, 0
  %2116 = vmatprep.subr.mxu0 0.0
  %2117 = vmatpush1.msra.mxu0 %v2092
  %2118 = vmatprep.subr.mxu0 0.0
  %2119 = vmatpush1.msra.mxu0 %v2093
  %2120 = vmatprep.subr.mxu0 0.0
  %2121 = vmatpush1.msra.mxu0 %v2094
  %2122 = vmatprep.subr.mxu0 0.0
  %2123 = vmatpush1.msra.mxu0 %v2095
  %2124 = vmatprep.subr.mxu0 0.0
  %2125 = vmatpush1.msra.mxu0 0.0
  %2126 = vmatprep.subr.mxu0 0.0
  %2127 = vmatpush1.msra.mxu0 0.0
  %2128 = vmatprep.subr.mxu0 0.0
  %2129 = vmatpush1.msra.mxu0 0.0
  %2130 = vmatprep.subr.mxu0 0.0
  %2131 = vmatpush1.msra.mxu0 0.0
  %2132 = vmatprep.subr.mxu0 0.0
  %2133 = vmatpush1.msra.mxu0 0.0
  %2134 = vmatprep.subr.mxu0 0.0
  %2135 = vmatpush1.msra.mxu0 0.0
  %2136 = vmatprep.subr.mxu0 0.0
  %2137 = vmatpush1.msra.mxu0 0.0
  %2138 = vmatprep.subr.mxu0 0.0
  %2139 = vmatpush1.msra.mxu0 0.0
  %2140 = vmatprep.subr.mxu0 0.0
  %2141 = vmatpush1.msra.mxu0 0.0
  %2142 = vmatprep.subr.mxu0 0.0
  %2143 = vmatpush1.msra.mxu0 0.0
  %2144 = vmatprep.subr.mxu0 0.0
  %2145 = vmatpush1.msra.mxu0 0.0
  %2146 = vmatprep.subr.mxu0 0.0
  %2147 = vmatpush1.msra.mxu0 0.0
  %2148 = vmatprep.subr.mxu0 0.0
  %2149 = vmatpush1.msra.mxu0 0.0
  %2150 = vmatprep.subr.mxu0 0.0
  %2151 = vmatpush1.msra.mxu0 0.0
  %2152 = vmatprep.subr.mxu0 0.0
  %2153 = vmatpush1.msra.mxu0 0.0
  %2154 = vmatprep.subr.mxu0 0.0
  %2155 = vmatpush1.msra.mxu0 0.0
  %2156 = vmatprep.subr.mxu0 0.0
  %2157 = vmatpush1.msra.mxu0 0.0
  %2158 = vmatprep.subr.mxu0 0.0
  %2159 = vmatpush1.msra.mxu0 0.0
  %2160 = vmatprep.subr.mxu0 0.0
  %2161 = vmatpush1.msra.mxu0 0.0
  %2162 = vmatprep.subr.mxu0 0.0
  %2163 = vmatpush1.msra.mxu0 0.0
  %2164 = vmatprep.subr.mxu0 0.0
  %2165 = vmatpush1.msra.mxu0 0.0
  %2166 = vmatprep.subr.mxu0 0.0
  %2167 = vmatpush1.msra.mxu0 0.0
  %2168 = vmatprep.subr.mxu0 0.0
  %2169 = vmatpush1.msra.mxu0 0.0
  %2170 = vmatprep.subr.mxu0 0.0
  %2171 = vmatpush1.msra.mxu0 0.0
  %2172 = vmatprep.subr.mxu0 0.0
  %2173 = vmatpush1.msra.mxu0 0.0
  %2174 = vmatprep.subr.mxu0 0.0
  %2175 = vmatpush1.msra.mxu0 0.0
  %2176 = vmatprep.subr.mxu0 0.0
  %2177 = vmatpush1.msra.mxu0 0.0
  %2178 = vmatprep.subr.mxu0 0.0
  %2179 = vmatpush1.msra.mxu0 0.0
  %2180 = vmatprep.mubr.f32.mxu0 0.0
  %2181 = vmatmul.mubr.f32.gmra.mrb[0].mxu0 %v2114
  %v2182 = vpop.f32.mrb[0].mxu0
  %v2183 = vadd.f32 %v2112, %v2182
  %v2184 = vpop.f32.mrb[0].mxu0
  %2185 = vdwg.mxu0
  %v2186 = vlaneseq
  %v2187 = vshrl.u32 %v2186, 7
  %v2188 = vsub.s32 1, %v2187
  %v2189 = vrot.slane %v2108, %v2188
  %v2191 = vsel %vm65, %v1980, 0
  %v2194 = vsel %vm65, %v1981, 0
  %2196 = vmatprep.subr.mxu0 0.0
  %2197 = vmatpush1.msra.mxu0 %v2096
  %2198 = vmatprep.subr.mxu0 0.0
  %2199 = vmatpush1.msra.mxu0 %v2097
  %2200 = vmatprep.subr.mxu0 0.0
  %2201 = vmatpush1.msra.mxu0 %v2098
  %2202 = vmatprep.subr.mxu0 0.0
  %2203 = vmatpush1.msra.mxu0 %v2099
  %2204 = vmatprep.subr.mxu0 0.0
  %2205 = vmatpush1.msra.mxu0 0.0
  %2206 = vmatprep.subr.mxu0 0.0
  %2207 = vmatpush1.msra.mxu0 0.0
  %2208 = vmatprep.subr.mxu0 0.0
  %2209 = vmatpush1.msra.mxu0 0.0
  %2210 = vmatprep.subr.mxu0 0.0
  %2211 = vmatpush1.msra.mxu0 0.0
  %2212 = vmatprep.subr.mxu0 0.0
  %2213 = vmatpush1.msra.mxu0 0.0
  %2214 = vmatprep.subr.mxu0 0.0
  %2215 = vmatpush1.msra.mxu0 0.0
  %2216 = vmatprep.subr.mxu0 0.0
  %2217 = vmatpush1.msra.mxu0 0.0
  %2218 = vmatprep.subr.mxu0 0.0
  %2219 = vmatpush1.msra.mxu0 0.0
  %2220 = vmatprep.subr.mxu0 0.0
  %2221 = vmatpush1.msra.mxu0 0.0
  %2222 = vmatprep.subr.mxu0 0.0
  %2223 = vmatpush1.msra.mxu0 0.0
  %2224 = vmatprep.subr.mxu0 0.0
  %2225 = vmatpush1.msra.mxu0 0.0
  %2226 = vmatprep.subr.mxu0 0.0
  %2227 = vmatpush1.msra.mxu0 0.0
  %2228 = vmatprep.subr.mxu0 0.0
  %2229 = vmatpush1.msra.mxu0 0.0
  %2230 = vmatprep.subr.mxu0 0.0
  %2231 = vmatpush1.msra.mxu0 0.0
  %2232 = vmatprep.subr.mxu0 0.0
  %2233 = vmatpush1.msra.mxu0 0.0
  %2234 = vmatprep.subr.mxu0 0.0
  %2235 = vmatpush1.msra.mxu0 0.0
  %2236 = vmatprep.subr.mxu0 0.0
  %2237 = vmatpush1.msra.mxu0 0.0
  %2238 = vmatprep.subr.mxu0 0.0
  %2239 = vmatpush1.msra.mxu0 0.0
  %2240 = vmatprep.subr.mxu0 0.0
  %2241 = vmatpush1.msra.mxu0 0.0
  %2242 = vmatprep.subr.mxu0 0.0
  %2243 = vmatpush1.msra.mxu0 0.0
  %2244 = vmatprep.subr.mxu0 0.0
  %2245 = vmatpush1.msra.mxu0 0.0
  %2246 = vmatprep.subr.mxu0 0.0
  %2247 = vmatpush1.msra.mxu0 0.0
  %2248 = vmatprep.subr.mxu0 0.0
  %2249 = vmatpush1.msra.mxu0 0.0
  %2250 = vmatprep.subr.mxu0 0.0
  %2251 = vmatpush1.msra.mxu0 0.0
  %2252 = vmatprep.subr.mxu0 0.0
  %2253 = vmatpush1.msra.mxu0 0.0
  %2254 = vmatprep.subr.mxu0 0.0
  %2255 = vmatpush1.msra.mxu0 0.0
  %2256 = vmatprep.subr.mxu0 0.0
  %2257 = vmatpush1.msra.mxu0 0.0
  %2258 = vmatprep.subr.mxu0 0.0
  %2259 = vmatpush1.msra.mxu0 0.0
  %2260 = vmatprep.mubr.f32.mxu0 0.0
  %2261 = vmatmul.mubr.f32.gmra.mrb[0].mxu0 %v2191
  %v2262 = vpop.f32.mrb[0].mxu0
  %v2263 = vadd.f32 %v2189, %v2262
  %v2264 = vpop.f32.mrb[0].mxu0
  %2265 = vmatprep.mubr.f32.mxu0 0.0
  %2266 = vmatmul.mubr.f32.gmra.mrb[0].mxu0 %v2194
  %v2267 = vpop.f32.mrb[0].mxu0
  %v2268 = vadd.f32 %v2189, %v2267
  %v2269 = vpop.f32.mrb[0].mxu0
  %2270 = vdwg.mxu0
  %2271 = vmatprep.subr.mxu0 0.0
  %2272 = vmatpush1.msra.mxu0 %v2104
  %2273 = vmatprep.subr.mxu0 0.0
  %2274 = vmatpush1.msra.mxu0 %v2105
  %2275 = vmatprep.subr.mxu0 0.0
  %2276 = vmatpush1.msra.mxu0 %v2106
  %2277 = vmatprep.subr.mxu0 0.0
  %2278 = vmatpush1.msra.mxu0 %v2107
  %2279 = vmatprep.subr.mxu0 0.0
  %2280 = vmatpush1.msra.mxu0 0.0
  %2281 = vmatprep.subr.mxu0 0.0
  %2282 = vmatpush1.msra.mxu0 0.0
  %2283 = vmatprep.subr.mxu0 0.0
  %2284 = vmatpush1.msra.mxu0 0.0
  %2285 = vmatprep.subr.mxu0 0.0
  %2286 = vmatpush1.msra.mxu0 0.0
  %2287 = vmatprep.subr.mxu0 0.0
  %2288 = vmatpush1.msra.mxu0 0.0
  %2289 = vmatprep.subr.mxu0 0.0
  %2290 = vmatpush1.msra.mxu0 0.0
  %2291 = vmatprep.subr.mxu0 0.0
  %2292 = vmatpush1.msra.mxu0 0.0
  %2293 = vmatprep.subr.mxu0 0.0
  %2294 = vmatpush1.msra.mxu0 0.0
  %2295 = vmatprep.subr.mxu0 0.0
  %2296 = vmatpush1.msra.mxu0 0.0
  %2297 = vmatprep.subr.mxu0 0.0
  %2298 = vmatpush1.msra.mxu0 0.0
  %2299 = vmatprep.subr.mxu0 0.0
  %2300 = vmatpush1.msra.mxu0 0.0
  %2301 = vmatprep.subr.mxu0 0.0
  %2302 = vmatpush1.msra.mxu0 0.0
  %2303 = vmatprep.subr.mxu0 0.0
  %2304 = vmatpush1.msra.mxu0 0.0
  %2305 = vmatprep.subr.mxu0 0.0
  %2306 = vmatpush1.msra.mxu0 0.0
  %2307 = vmatprep.subr.mxu0 0.0
  %2308 = vmatpush1.msra.mxu0 0.0
  %2309 = vmatprep.subr.mxu0 0.0
  %2310 = vmatpush1.msra.mxu0 0.0
  %2311 = vmatprep.subr.mxu0 0.0
  %2312 = vmatpush1.msra.mxu0 0.0
  %2313 = vmatprep.subr.mxu0 0.0
  %2314 = vmatpush1.msra.mxu0 0.0
  %2315 = vmatprep.subr.mxu0 0.0
  %2316 = vmatpush1.msra.mxu0 0.0
  %2317 = vmatprep.subr.mxu0 0.0
  %2318 = vmatpush1.msra.mxu0 0.0
  %2319 = vmatprep.subr.mxu0 0.0
  %2320 = vmatpush1.msra.mxu0 0.0
  %2321 = vmatprep.subr.mxu0 0.0
  %2322 = vmatpush1.msra.mxu0 0.0
  %2323 = vmatprep.subr.mxu0 0.0
  %2324 = vmatpush1.msra.mxu0 0.0
  %2325 = vmatprep.subr.mxu0 0.0
  %2326 = vmatpush1.msra.mxu0 0.0
  %2327 = vmatprep.subr.mxu0 0.0
  %2328 = vmatpush1.msra.mxu0 0.0
  %2329 = vmatprep.subr.mxu0 0.0
  %2330 = vmatpush1.msra.mxu0 0.0
  %2331 = vmatprep.subr.mxu0 0.0
  %2332 = vmatpush1.msra.mxu0 0.0
  %2333 = vmatprep.subr.mxu0 0.0
  %2334 = vmatpush1.msra.mxu0 0.0
  %2335 = vmatprep.mubr.f32.mxu0 0.0
  %2336 = vmatmul.mubr.f32.gmra.mrb[0].mxu0 %v2114
  %v2337 = vpop.f32.mrb[0].mxu0
  %v2338 = vadd.f32 0.0, %v2337
  %v2339 = vpop.f32.mrb[0].mxu0
  %2340 = vdwg.mxu0
  %v2341 = vlaneseq
  %v2342 = vshrl.u32 %v2341, 7
  %v2343 = vsub.s32 0, %v2342
  %v2344 = vrot.slane %v2183, %v2343
  %v2345 = vsel %vm1984, %v2344, 0.0
  %v2346 = vsel %vm1985, %v2344, 0.0
  %v2347 = vlaneseq
  %v2348 = vshrl.u32 %v2347, 7
  %v2349 = vsub.s32 1, %v2348
  %v2350 = vrot.slane %v2183, %v2349
  %v2351 = vsel %vm1990, %v2350, %v2345
  %v2352 = vsel %vm1991, %v2350, %v2346
  %v2353 = vadd.f32 %v2351, %v2263
  %v2354 = vadd.f32 %v2352, %v2268
  %v2355 = vxor.u32 %v2353, 2147483648
  %v2356 = vxor.u32 %v2354, 2147483648
  %v2357 = vmul.f32 %v2355, 1.442695
  %v2358 = vpow.pop %v2357
  %v2359 = vmul.f32 %v2356, 1.442695
  %v2360 = vpow.pop %v2359
  %v2361 = vadd.f32 %v2358, 1.0
  %v2362 = vadd.f32 %v2360, 1.0
  %v2363 = vrcp.pop %v2361
  %v2364 = vmul.f32 1.0, %v2363
  %v2365 = vrcp.pop %v2362
  %v2366 = vmul.f32 1.0, %v2365
  %v2367 = vlaneseq
  %v2368 = vshrl.u32 %v2367, 7
  %v2369 = vsub.s32 2, %v2368
  %v2370 = vrot.slane %v2108, %v2369
  %v2371 = vmul.f32 %v2364, %v2370
  %v2372 = vmul.f32 %v2366, %v2370
  %v2373 = vsel %vm65, %v2371, 0.0
  %2374 = vadd.xlane.f32.xlu0 %v2373
  %v2375 = vpop.xlane.xlu0 %2374
  %v2376 = vsel %vm65, %v2372, 0.0
  %2377 = vadd.xlane.f32.xlu0 %v2376
  %v2378 = vpop.xlane.xlu0 %2377
  %v2379 = vmul.f32 %v2375, %v2000
  %v2380 = vmul.f32 %v2378, %v2001
  %v2381 = vmul.f32 %v2379, %v1980
  %v2382 = vmul.f32 %v2380, %v1981
  %2383 = vmatprep.subr.mxu0 0.0
  %2384 = vmatpush1.msra.mxu0 %v2381
  %2385 = vmatprep.subr.mxu0 0.0
  %2386 = vmatpush1.msra.mxu0 %v2382
  %2387 = vmatprep.subr.mxu0 0.0
  %2388 = vmatpush1.msra.mxu0 0.0
  %2389 = vmatprep.subr.mxu0 0.0
  %2390 = vmatpush1.msra.mxu0 0.0
  %2391 = vmatprep.subr.mxu0 0.0
  %2392 = vmatpush1.msra.mxu0 0.0
  %2393 = vmatprep.subr.mxu0 0.0
  %2394 = vmatpush1.msra.mxu0 0.0
  %2395 = vmatprep.subr.mxu0 0.0
  %2396 = vmatpush1.msra.mxu0 0.0
  %2397 = vmatprep.subr.mxu0 0.0
  %2398 = vmatpush1.msra.mxu0 0.0
  %2399 = vmatprep.subr.mxu0 0.0
  %2400 = vmatpush1.msra.mxu0 0.0
  %2401 = vmatprep.subr.mxu0 0.0
  %2402 = vmatpush1.msra.mxu0 0.0
  %2403 = vmatprep.subr.mxu0 0.0
  %2404 = vmatpush1.msra.mxu0 0.0
  %2405 = vmatprep.subr.mxu0 0.0
  %2406 = vmatpush1.msra.mxu0 0.0
  %2407 = vmatprep.subr.mxu0 0.0
  %2408 = vmatpush1.msra.mxu0 0.0
  %2409 = vmatprep.subr.mxu0 0.0
  %2410 = vmatpush1.msra.mxu0 0.0
  %2411 = vmatprep.subr.mxu0 0.0
  %2412 = vmatpush1.msra.mxu0 0.0
  %2413 = vmatprep.subr.mxu0 0.0
  %2414 = vmatpush1.msra.mxu0 0.0
  %2415 = vmatprep.subr.mxu0 0.0
  %2416 = vmatpush1.msra.mxu0 0.0
  %2417 = vmatprep.subr.mxu0 0.0
  %2418 = vmatpush1.msra.mxu0 0.0
  %2419 = vmatprep.subr.mxu0 0.0
  %2420 = vmatpush1.msra.mxu0 0.0
  %2421 = vmatprep.subr.mxu0 0.0
  %2422 = vmatpush1.msra.mxu0 0.0
  %2423 = vmatprep.subr.mxu0 0.0
  %2424 = vmatpush1.msra.mxu0 0.0
  %2425 = vmatprep.subr.mxu0 0.0
  %2426 = vmatpush1.msra.mxu0 0.0
  %2427 = vmatprep.subr.mxu0 0.0
  %2428 = vmatpush1.msra.mxu0 0.0
  %2429 = vmatprep.subr.mxu0 0.0
  %2430 = vmatpush1.msra.mxu0 0.0
  %2431 = vmatprep.subr.mxu0 0.0
  %2432 = vmatpush1.msra.mxu0 0.0
  %2433 = vmatprep.subr.mxu0 0.0
  %2434 = vmatpush1.msra.mxu0 0.0
  %2435 = vmatprep.subr.mxu0 0.0
  %2436 = vmatpush1.msra.mxu0 0.0
  %2437 = vmatprep.subr.mxu0 0.0
  %2438 = vmatpush1.msra.mxu0 0.0
  %2439 = vmatprep.subr.mxu0 0.0
  %2440 = vmatpush1.msra.mxu0 0.0
  %2441 = vmatprep.subr.mxu0 0.0
  %2442 = vmatpush1.msra.mxu0 0.0
  %2443 = vmatprep.subr.mxu0 0.0
  %2444 = vmatpush1.msra.mxu0 0.0
  %2445 = vmatprep.subr.mxu0 0.0
  %2446 = vmatpush1.msra.mxu0 0.0
  %2447 = vmatprep.mubr.f32.mxu0 0.0
  %2448 = vmatmul.mubr.f32.gmra.mrb[0].mxu0 %v2020
  %v2449 = vpop.f32.mrb[0].mxu0
  %v2450 = vadd.f32 0.0, %v2449
  %v2451 = vpop.f32.mrb[0].mxu0
  %2452 = vdwg.mxu0
  %v2454 = vsel %vm65, %v2450, 0
  %2456 = vmatprep.subr.mxu0 0.0
  %2457 = vmatpush1.msra.mxu0 %v2100
  %2458 = vmatprep.subr.mxu0 0.0
  %2459 = vmatpush1.msra.mxu0 %v2101
  %2460 = vmatprep.subr.mxu0 0.0
  %2461 = vmatpush1.msra.mxu0 %v2102
  %2462 = vmatprep.subr.mxu0 0.0
  %2463 = vmatpush1.msra.mxu0 %v2103
  %2464 = vmatprep.subr.mxu0 0.0
  %2465 = vmatpush1.msra.mxu0 0.0
  %2466 = vmatprep.subr.mxu0 0.0
  %2467 = vmatpush1.msra.mxu0 0.0
  %2468 = vmatprep.subr.mxu0 0.0
  %2469 = vmatpush1.msra.mxu0 0.0
  %2470 = vmatprep.subr.mxu0 0.0
  %2471 = vmatpush1.msra.mxu0 0.0
  %2472 = vmatprep.subr.mxu0 0.0
  %2473 = vmatpush1.msra.mxu0 0.0
  %2474 = vmatprep.subr.mxu0 0.0
  %2475 = vmatpush1.msra.mxu0 0.0
  %2476 = vmatprep.subr.mxu0 0.0
  %2477 = vmatpush1.msra.mxu0 0.0
  %2478 = vmatprep.subr.mxu0 0.0
  %2479 = vmatpush1.msra.mxu0 0.0
  %2480 = vmatprep.subr.mxu0 0.0
  %2481 = vmatpush1.msra.mxu0 0.0
  %2482 = vmatprep.subr.mxu0 0.0
  %2483 = vmatpush1.msra.mxu0 0.0
  %2484 = vmatprep.subr.mxu0 0.0
  %2485 = vmatpush1.msra.mxu0 0.0
  %2486 = vmatprep.subr.mxu0 0.0
  %2487 = vmatpush1.msra.mxu0 0.0
  %2488 = vmatprep.subr.mxu0 0.0
  %2489 = vmatpush1.msra.mxu0 0.0
  %2490 = vmatprep.subr.mxu0 0.0
  %2491 = vmatpush1.msra.mxu0 0.0
  %2492 = vmatprep.subr.mxu0 0.0
  %2493 = vmatpush1.msra.mxu0 0.0
  %2494 = vmatprep.subr.mxu0 0.0
  %2495 = vmatpush1.msra.mxu0 0.0
  %2496 = vmatprep.subr.mxu0 0.0
  %2497 = vmatpush1.msra.mxu0 0.0
  %2498 = vmatprep.subr.mxu0 0.0
  %2499 = vmatpush1.msra.mxu0 0.0
  %2500 = vmatprep.subr.mxu0 0.0
  %2501 = vmatpush1.msra.mxu0 0.0
  %2502 = vmatprep.subr.mxu0 0.0
  %2503 = vmatpush1.msra.mxu0 0.0
  %2504 = vmatprep.subr.mxu0 0.0
  %2505 = vmatpush1.msra.mxu0 0.0
  %2506 = vmatprep.subr.mxu0 0.0
  %2507 = vmatpush1.msra.mxu0 0.0
  %2508 = vmatprep.subr.mxu0 0.0
  %2509 = vmatpush1.msra.mxu0 0.0
  %2510 = vmatprep.subr.mxu0 0.0
  %2511 = vmatpush1.msra.mxu0 0.0
  %2512 = vmatprep.subr.mxu0 0.0
  %2513 = vmatpush1.msra.mxu0 0.0
  %2514 = vmatprep.subr.mxu0 0.0
  %2515 = vmatpush1.msra.mxu0 0.0
  %2516 = vmatprep.subr.mxu0 0.0
  %2517 = vmatpush1.msra.mxu0 0.0
  %2518 = vmatprep.subr.mxu0 0.0
  %2519 = vmatpush1.msra.mxu0 0.0
  %2520 = vmatprep.mubr.f32.mxu0 0.0
  %2521 = vmatmul.mubr.f32.gmra.mrb[0].mxu0 %v2454
  %v2522 = vpop.f32.mrb[0].mxu0
  %v2523 = vadd.f32 %v2338, %v2522
  %v2524 = vpop.f32.mrb[0].mxu0
  %2525 = vdwg.mxu0
  %v2526 = vlaneseq
  %v2527 = vshrl.u32 %v2526, 7
  %v2528 = vsub.s32 3, %v2527
  %v2529 = vrot.slane %v2108, %v2528
  %v2530 = vadd.f32 %v2523, %v2529
  %2533 = vrot.lane.b32.xlu0 %v2371, 96
  %v2534 = vpop.permute.xlu0 %2533
  %2535 = vrot.lane.b32.xlu0 %v2372, 96
  %v2536 = vpop.permute.xlu0 %2535
  %v2539 = vsel %vm65, %v2534, 0.0
  %2540 = vadd.xlane.f32.xlu0 %v2539
  %v2541 = vpop.xlane.xlu0 %2540
  %v2542 = vsel %vm65, %v2536, 0.0
  %2543 = vadd.xlane.f32.xlu0 %v2542
  %v2544 = vpop.xlane.xlu0 %2543
  %v2545 = vmul.f32 %v2541, %v2000
  %v2546 = vmul.f32 %v2544, %v2001
  %v2547 = vmul.f32 %v2545, %v1980
  %v2548 = vmul.f32 %v2546, %v1981
  %2549 = vmatprep.subr.mxu0 0.0
  %2550 = vmatpush1.msra.mxu0 %v2547
  %2551 = vmatprep.subr.mxu0 0.0
  %2552 = vmatpush1.msra.mxu0 %v2548
  %2553 = vmatprep.subr.mxu0 0.0
  %2554 = vmatpush1.msra.mxu0 0.0
  %2555 = vmatprep.subr.mxu0 0.0
  %2556 = vmatpush1.msra.mxu0 0.0
  %2557 = vmatprep.subr.mxu0 0.0
  %2558 = vmatpush1.msra.mxu0 0.0
  %2559 = vmatprep.subr.mxu0 0.0
  %2560 = vmatpush1.msra.mxu0 0.0
  %2561 = vmatprep.subr.mxu0 0.0
  %2562 = vmatpush1.msra.mxu0 0.0
  %2563 = vmatprep.subr.mxu0 0.0
  %2564 = vmatpush1.msra.mxu0 0.0
  %2565 = vmatprep.subr.mxu0 0.0
  %2566 = vmatpush1.msra.mxu0 0.0
  %2567 = vmatprep.subr.mxu0 0.0
  %2568 = vmatpush1.msra.mxu0 0.0
  %2569 = vmatprep.subr.mxu0 0.0
  %2570 = vmatpush1.msra.mxu0 0.0
  %2571 = vmatprep.subr.mxu0 0.0
  %2572 = vmatpush1.msra.mxu0 0.0
  %2573 = vmatprep.subr.mxu0 0.0
  %2574 = vmatpush1.msra.mxu0 0.0
  %2575 = vmatprep.subr.mxu0 0.0
  %2576 = vmatpush1.msra.mxu0 0.0
  %2577 = vmatprep.subr.mxu0 0.0
  %2578 = vmatpush1.msra.mxu0 0.0
  %2579 = vmatprep.subr.mxu0 0.0
  %2580 = vmatpush1.msra.mxu0 0.0
  %2581 = vmatprep.subr.mxu0 0.0
  %2582 = vmatpush1.msra.mxu0 0.0
  %2583 = vmatprep.subr.mxu0 0.0
  %2584 = vmatpush1.msra.mxu0 0.0
  %2585 = vmatprep.subr.mxu0 0.0
  %2586 = vmatpush1.msra.mxu0 0.0
  %2587 = vmatprep.subr.mxu0 0.0
  %2588 = vmatpush1.msra.mxu0 0.0
  %2589 = vmatprep.subr.mxu0 0.0
  %2590 = vmatpush1.msra.mxu0 0.0
  %2591 = vmatprep.subr.mxu0 0.0
  %2592 = vmatpush1.msra.mxu0 0.0
  %2593 = vmatprep.subr.mxu0 0.0
  %2594 = vmatpush1.msra.mxu0 0.0
  %2595 = vmatprep.subr.mxu0 0.0
  %2596 = vmatpush1.msra.mxu0 0.0
  %2597 = vmatprep.subr.mxu0 0.0
  %2598 = vmatpush1.msra.mxu0 0.0
  %2599 = vmatprep.subr.mxu0 0.0
  %2600 = vmatpush1.msra.mxu0 0.0
  %2601 = vmatprep.subr.mxu0 0.0
  %2602 = vmatpush1.msra.mxu0 0.0
  %2603 = vmatprep.subr.mxu0 0.0
  %2604 = vmatpush1.msra.mxu0 0.0
  %2605 = vmatprep.subr.mxu0 0.0
  %2606 = vmatpush1.msra.mxu0 0.0
  %2607 = vmatprep.subr.mxu0 0.0
  %2608 = vmatpush1.msra.mxu0 0.0
  %2609 = vmatprep.subr.mxu0 0.0
  %2610 = vmatpush1.msra.mxu0 0.0
  %2611 = vmatprep.subr.mxu0 0.0
  %2612 = vmatpush1.msra.mxu0 0.0
  %2613 = vmatprep.mubr.f32.mxu0 0.0
  %2614 = vmatmul.mubr.f32.gmra.mrb[0].mxu0 %v2020
  %v2615 = vpop.f32.mrb[0].mxu0
  %v2616 = vadd.f32 0.0, %v2615
  %v2617 = vpop.f32.mrb[0].mxu0
  %2618 = vdwg.mxu0
  %2623 = vrot.lane.b32.xlu0 %v2100, 96
  %v2624 = vpop.permute.xlu0 %2623
  %2625 = vrot.lane.b32.xlu0 %v2101, 96
  %v2626 = vpop.permute.xlu0 %2625
  %2627 = vrot.lane.b32.xlu0 %v2102, 96
  %v2628 = vpop.permute.xlu0 %2627
  %2629 = vrot.lane.b32.xlu0 %v2103, 96
  %v2630 = vpop.permute.xlu0 %2629
  %2636 = vrot.lane.b32.xlu0 %v2338, 96
  %v2637 = vpop.permute.xlu0 %2636
  %v2640 = vsel %vm65, %v2616, 0
  %2642 = vmatprep.subr.mxu0 0.0
  %2643 = vmatpush1.msra.mxu0 %v2624
  %2644 = vmatprep.subr.mxu0 0.0
  %2645 = vmatpush1.msra.mxu0 %v2626
  %2646 = vmatprep.subr.mxu0 0.0
  %2647 = vmatpush1.msra.mxu0 %v2628
  %2648 = vmatprep.subr.mxu0 0.0
  %2649 = vmatpush1.msra.mxu0 %v2630
  %2650 = vmatprep.subr.mxu0 0.0
  %2651 = vmatpush1.msra.mxu0 0.0
  %2652 = vmatprep.subr.mxu0 0.0
  %2653 = vmatpush1.msra.mxu0 0.0
  %2654 = vmatprep.subr.mxu0 0.0
  %2655 = vmatpush1.msra.mxu0 0.0
  %2656 = vmatprep.subr.mxu0 0.0
  %2657 = vmatpush1.msra.mxu0 0.0
  %2658 = vmatprep.subr.mxu0 0.0
  %2659 = vmatpush1.msra.mxu0 0.0
  %2660 = vmatprep.subr.mxu0 0.0
  %2661 = vmatpush1.msra.mxu0 0.0
  %2662 = vmatprep.subr.mxu0 0.0
  %2663 = vmatpush1.msra.mxu0 0.0
  %2664 = vmatprep.subr.mxu0 0.0
  %2665 = vmatpush1.msra.mxu0 0.0
  %2666 = vmatprep.subr.mxu0 0.0
  %2667 = vmatpush1.msra.mxu0 0.0
  %2668 = vmatprep.subr.mxu0 0.0
  %2669 = vmatpush1.msra.mxu0 0.0
  %2670 = vmatprep.subr.mxu0 0.0
  %2671 = vmatpush1.msra.mxu0 0.0
  %2672 = vmatprep.subr.mxu0 0.0
  %2673 = vmatpush1.msra.mxu0 0.0
  %2674 = vmatprep.subr.mxu0 0.0
  %2675 = vmatpush1.msra.mxu0 0.0
  %2676 = vmatprep.subr.mxu0 0.0
  %2677 = vmatpush1.msra.mxu0 0.0
  %2678 = vmatprep.subr.mxu0 0.0
  %2679 = vmatpush1.msra.mxu0 0.0
  %2680 = vmatprep.subr.mxu0 0.0
  %2681 = vmatpush1.msra.mxu0 0.0
  %2682 = vmatprep.subr.mxu0 0.0
  %2683 = vmatpush1.msra.mxu0 0.0
  %2684 = vmatprep.subr.mxu0 0.0
  %2685 = vmatpush1.msra.mxu0 0.0
  %2686 = vmatprep.subr.mxu0 0.0
  %2687 = vmatpush1.msra.mxu0 0.0
  %2688 = vmatprep.subr.mxu0 0.0
  %2689 = vmatpush1.msra.mxu0 0.0
  %2690 = vmatprep.subr.mxu0 0.0
  %2691 = vmatpush1.msra.mxu0 0.0
  %2692 = vmatprep.subr.mxu0 0.0
  %2693 = vmatpush1.msra.mxu0 0.0
  %2694 = vmatprep.subr.mxu0 0.0
  %2695 = vmatpush1.msra.mxu0 0.0
  %2696 = vmatprep.subr.mxu0 0.0
  %2697 = vmatpush1.msra.mxu0 0.0
  %2698 = vmatprep.subr.mxu0 0.0
  %2699 = vmatpush1.msra.mxu0 0.0
  %2700 = vmatprep.subr.mxu0 0.0
  %2701 = vmatpush1.msra.mxu0 0.0
  %2702 = vmatprep.subr.mxu0 0.0
  %2703 = vmatpush1.msra.mxu0 0.0
  %2704 = vmatprep.subr.mxu0 0.0
  %2705 = vmatpush1.msra.mxu0 0.0
  %2706 = vmatprep.mubr.f32.mxu0 0.0
  %2707 = vmatmul.mubr.f32.gmra.mrb[0].mxu0 %v2640
  %v2708 = vpop.f32.mrb[0].mxu0
  %v2709 = vadd.f32 %v2637, %v2708
  %v2710 = vpop.f32.mrb[0].mxu0
  %2711 = vdwg.mxu0
  %2713 = vrot.lane.b32.xlu0 %v2529, 96
  %v2714 = vpop.permute.xlu0 %2713
  %v2716 = vadd.f32 %v2709, %v2714
  %2717 = vrot.lane.b32.xlu0 %v2371, 64
  %v2718 = vpop.permute.xlu0 %2717
  %2719 = vrot.lane.b32.xlu0 %v2372, 64
  %v2720 = vpop.permute.xlu0 %2719
  %v2723 = vsel %vm65, %v2718, 0.0
  %2724 = vadd.xlane.f32.xlu0 %v2723
  %v2725 = vpop.xlane.xlu0 %2724
  %v2726 = vsel %vm65, %v2720, 0.0
  %2727 = vadd.xlane.f32.xlu0 %v2726
  %v2728 = vpop.xlane.xlu0 %2727
  %v2729 = vmul.f32 %v2725, %v2000
  %v2730 = vmul.f32 %v2728, %v2001
  %v2731 = vmul.f32 %v2729, %v1980
  %v2732 = vmul.f32 %v2730, %v1981
  %2733 = vmatprep.subr.mxu0 0.0
  %2734 = vmatpush1.msra.mxu0 %v2731
  %2735 = vmatprep.subr.mxu0 0.0
  %2736 = vmatpush1.msra.mxu0 %v2732
  %2737 = vmatprep.subr.mxu0 0.0
  %2738 = vmatpush1.msra.mxu0 0.0
  %2739 = vmatprep.subr.mxu0 0.0
  %2740 = vmatpush1.msra.mxu0 0.0
  %2741 = vmatprep.subr.mxu0 0.0
  %2742 = vmatpush1.msra.mxu0 0.0
  %2743 = vmatprep.subr.mxu0 0.0
  %2744 = vmatpush1.msra.mxu0 0.0
  %2745 = vmatprep.subr.mxu0 0.0
  %2746 = vmatpush1.msra.mxu0 0.0
  %2747 = vmatprep.subr.mxu0 0.0
  %2748 = vmatpush1.msra.mxu0 0.0
  %2749 = vmatprep.subr.mxu0 0.0
  %2750 = vmatpush1.msra.mxu0 0.0
  %2751 = vmatprep.subr.mxu0 0.0
  %2752 = vmatpush1.msra.mxu0 0.0
  %2753 = vmatprep.subr.mxu0 0.0
  %2754 = vmatpush1.msra.mxu0 0.0
  %2755 = vmatprep.subr.mxu0 0.0
  %2756 = vmatpush1.msra.mxu0 0.0
  %2757 = vmatprep.subr.mxu0 0.0
  %2758 = vmatpush1.msra.mxu0 0.0
  %2759 = vmatprep.subr.mxu0 0.0
  %2760 = vmatpush1.msra.mxu0 0.0
  %2761 = vmatprep.subr.mxu0 0.0
  %2762 = vmatpush1.msra.mxu0 0.0
  %2763 = vmatprep.subr.mxu0 0.0
  %2764 = vmatpush1.msra.mxu0 0.0
  %2765 = vmatprep.subr.mxu0 0.0
  %2766 = vmatpush1.msra.mxu0 0.0
  %2767 = vmatprep.subr.mxu0 0.0
  %2768 = vmatpush1.msra.mxu0 0.0
  %2769 = vmatprep.subr.mxu0 0.0
  %2770 = vmatpush1.msra.mxu0 0.0
  %2771 = vmatprep.subr.mxu0 0.0
  %2772 = vmatpush1.msra.mxu0 0.0
  %2773 = vmatprep.subr.mxu0 0.0
  %2774 = vmatpush1.msra.mxu0 0.0
  %2775 = vmatprep.subr.mxu0 0.0
  %2776 = vmatpush1.msra.mxu0 0.0
  %2777 = vmatprep.subr.mxu0 0.0
  %2778 = vmatpush1.msra.mxu0 0.0
  %2779 = vmatprep.subr.mxu0 0.0
  %2780 = vmatpush1.msra.mxu0 0.0
  %2781 = vmatprep.subr.mxu0 0.0
  %2782 = vmatpush1.msra.mxu0 0.0
  %2783 = vmatprep.subr.mxu0 0.0
  %2784 = vmatpush1.msra.mxu0 0.0
  %2785 = vmatprep.subr.mxu0 0.0
  %2786 = vmatpush1.msra.mxu0 0.0
  %2787 = vmatprep.subr.mxu0 0.0
  %2788 = vmatpush1.msra.mxu0 0.0
  %2789 = vmatprep.subr.mxu0 0.0
  %2790 = vmatpush1.msra.mxu0 0.0
  %2791 = vmatprep.subr.mxu0 0.0
  %2792 = vmatpush1.msra.mxu0 0.0
  %2793 = vmatprep.subr.mxu0 0.0
  %2794 = vmatpush1.msra.mxu0 0.0
  %2795 = vmatprep.subr.mxu0 0.0
  %2796 = vmatpush1.msra.mxu0 0.0
  %2797 = vmatprep.mubr.f32.mxu0 0.0
  %2798 = vmatmul.mubr.f32.gmra.mrb[0].mxu0 %v2020
  %v2799 = vpop.f32.mrb[0].mxu0
  %v2800 = vadd.f32 0.0, %v2799
  %v2801 = vpop.f32.mrb[0].mxu0
  %2802 = vdwg.mxu0
  %2803 = vrot.lane.b32.xlu0 %v2100, 64
  %v2804 = vpop.permute.xlu0 %2803
  %2805 = vrot.lane.b32.xlu0 %v2101, 64
  %v2806 = vpop.permute.xlu0 %2805
  %2807 = vrot.lane.b32.xlu0 %v2102, 64
  %v2808 = vpop.permute.xlu0 %2807
  %2809 = vrot.lane.b32.xlu0 %v2103, 64
  %v2810 = vpop.permute.xlu0 %2809
  %2815 = vrot.lane.b32.xlu0 %v2338, 64
  %v2816 = vpop.permute.xlu0 %2815
  %v2819 = vsel %vm65, %v2800, 0
  %2821 = vmatprep.subr.mxu0 0.0
  %2822 = vmatpush1.msra.mxu0 %v2804
  %2823 = vmatprep.subr.mxu0 0.0
  %2824 = vmatpush1.msra.mxu0 %v2806
  %2825 = vmatprep.subr.mxu0 0.0
  %2826 = vmatpush1.msra.mxu0 %v2808
  %2827 = vmatprep.subr.mxu0 0.0
  %2828 = vmatpush1.msra.mxu0 %v2810
  %2829 = vmatprep.subr.mxu0 0.0
  %2830 = vmatpush1.msra.mxu0 0.0
  %2831 = vmatprep.subr.mxu0 0.0
  %2832 = vmatpush1.msra.mxu0 0.0
  %2833 = vmatprep.subr.mxu0 0.0
  %2834 = vmatpush1.msra.mxu0 0.0
  %2835 = vmatprep.subr.mxu0 0.0
  %2836 = vmatpush1.msra.mxu0 0.0
  %2837 = vmatprep.subr.mxu0 0.0
  %2838 = vmatpush1.msra.mxu0 0.0
  %2839 = vmatprep.subr.mxu0 0.0
  %2840 = vmatpush1.msra.mxu0 0.0
  %2841 = vmatprep.subr.mxu0 0.0
  %2842 = vmatpush1.msra.mxu0 0.0
  %2843 = vmatprep.subr.mxu0 0.0
  %2844 = vmatpush1.msra.mxu0 0.0
  %2845 = vmatprep.subr.mxu0 0.0
  %2846 = vmatpush1.msra.mxu0 0.0
  %2847 = vmatprep.subr.mxu0 0.0
  %2848 = vmatpush1.msra.mxu0 0.0
  %2849 = vmatprep.subr.mxu0 0.0
  %2850 = vmatpush1.msra.mxu0 0.0
  %2851 = vmatprep.subr.mxu0 0.0
  %2852 = vmatpush1.msra.mxu0 0.0
  %2853 = vmatprep.subr.mxu0 0.0
  %2854 = vmatpush1.msra.mxu0 0.0
  %2855 = vmatprep.subr.mxu0 0.0
  %2856 = vmatpush1.msra.mxu0 0.0
  %2857 = vmatprep.subr.mxu0 0.0
  %2858 = vmatpush1.msra.mxu0 0.0
  %2859 = vmatprep.subr.mxu0 0.0
  %2860 = vmatpush1.msra.mxu0 0.0
  %2861 = vmatprep.subr.mxu0 0.0
  %2862 = vmatpush1.msra.mxu0 0.0
  %2863 = vmatprep.subr.mxu0 0.0
  %2864 = vmatpush1.msra.mxu0 0.0
  %2865 = vmatprep.subr.mxu0 0.0
  %2866 = vmatpush1.msra.mxu0 0.0
  %2867 = vmatprep.subr.mxu0 0.0
  %2868 = vmatpush1.msra.mxu0 0.0
  %2869 = vmatprep.subr.mxu0 0.0
  %2870 = vmatpush1.msra.mxu0 0.0
  %2871 = vmatprep.subr.mxu0 0.0
  %2872 = vmatpush1.msra.mxu0 0.0
  %2873 = vmatprep.subr.mxu0 0.0
  %2874 = vmatpush1.msra.mxu0 0.0
  %2875 = vmatprep.subr.mxu0 0.0
  %2876 = vmatpush1.msra.mxu0 0.0
  %2877 = vmatprep.subr.mxu0 0.0
  %2878 = vmatpush1.msra.mxu0 0.0
  %2879 = vmatprep.subr.mxu0 0.0
  %2880 = vmatpush1.msra.mxu0 0.0
  %2881 = vmatprep.subr.mxu0 0.0
  %2882 = vmatpush1.msra.mxu0 0.0
  %2883 = vmatprep.subr.mxu0 0.0
  %2884 = vmatpush1.msra.mxu0 0.0
  %2885 = vmatprep.mubr.f32.mxu0 0.0
  %2886 = vmatmul.mubr.f32.gmra.mrb[0].mxu0 %v2819
  %v2887 = vpop.f32.mrb[0].mxu0
  %v2888 = vadd.f32 %v2816, %v2887
  %v2889 = vpop.f32.mrb[0].mxu0
  %2890 = vdwg.mxu0
  %2891 = vrot.lane.b32.xlu0 %v2529, 64
  %v2892 = vpop.permute.xlu0 %2891
  %v2894 = vadd.f32 %v2888, %v2892
  %2899 = vrot.lane.b32.xlu0 %v2092, 32
  %v2900 = vpop.permute.xlu0 %2899
  %2901 = vrot.lane.b32.xlu0 %v2093, 32
  %v2902 = vpop.permute.xlu0 %2901
  %2903 = vrot.lane.b32.xlu0 %v2094, 32
  %v2904 = vpop.permute.xlu0 %2903
  %2905 = vrot.lane.b32.xlu0 %v2095, 32
  %v2906 = vpop.permute.xlu0 %2905
  %v2912 = vsel %vm65, %v2530, 0
  %2914 = vmatprep.subr.mxu0 0.0
  %2915 = vmatpush1.msra.mxu0 %v2900
  %2916 = vmatprep.subr.mxu0 0.0
  %2917 = vmatpush1.msra.mxu0 %v2902
  %2918 = vmatprep.subr.mxu0 0.0
  %2919 = vmatpush1.msra.mxu0 %v2904
  %2920 = vmatprep.subr.mxu0 0.0
  %2921 = vmatpush1.msra.mxu0 %v2906
  %2922 = vmatprep.subr.mxu0 0.0
  %2923 = vmatpush1.msra.mxu0 0.0
  %2924 = vmatprep.subr.mxu0 0.0
  %2925 = vmatpush1.msra.mxu0 0.0
  %2926 = vmatprep.subr.mxu0 0.0
  %2927 = vmatpush1.msra.mxu0 0.0
  %2928 = vmatprep.subr.mxu0 0.0
  %2929 = vmatpush1.msra.mxu0 0.0
  %2930 = vmatprep.subr.mxu0 0.0
  %2931 = vmatpush1.msra.mxu0 0.0
  %2932 = vmatprep.subr.mxu0 0.0
  %2933 = vmatpush1.msra.mxu0 0.0
  %2934 = vmatprep.subr.mxu0 0.0
  %2935 = vmatpush1.msra.mxu0 0.0
  %2936 = vmatprep.subr.mxu0 0.0
  %2937 = vmatpush1.msra.mxu0 0.0
  %2938 = vmatprep.subr.mxu0 0.0
  %2939 = vmatpush1.msra.mxu0 0.0
  %2940 = vmatprep.subr.mxu0 0.0
  %2941 = vmatpush1.msra.mxu0 0.0
  %2942 = vmatprep.subr.mxu0 0.0
  %2943 = vmatpush1.msra.mxu0 0.0
  %2944 = vmatprep.subr.mxu0 0.0
  %2945 = vmatpush1.msra.mxu0 0.0
  %2946 = vmatprep.subr.mxu0 0.0
  %2947 = vmatpush1.msra.mxu0 0.0
  %2948 = vmatprep.subr.mxu0 0.0
  %2949 = vmatpush1.msra.mxu0 0.0
  %2950 = vmatprep.subr.mxu0 0.0
  %2951 = vmatpush1.msra.mxu0 0.0
  %2952 = vmatprep.subr.mxu0 0.0
  %2953 = vmatpush1.msra.mxu0 0.0
  %2954 = vmatprep.subr.mxu0 0.0
  %2955 = vmatpush1.msra.mxu0 0.0
  %2956 = vmatprep.subr.mxu0 0.0
  %2957 = vmatpush1.msra.mxu0 0.0
  %2958 = vmatprep.subr.mxu0 0.0
  %2959 = vmatpush1.msra.mxu0 0.0
  %2960 = vmatprep.subr.mxu0 0.0
  %2961 = vmatpush1.msra.mxu0 0.0
  %2962 = vmatprep.subr.mxu0 0.0
  %2963 = vmatpush1.msra.mxu0 0.0
  %2964 = vmatprep.subr.mxu0 0.0
  %2965 = vmatpush1.msra.mxu0 0.0
  %2966 = vmatprep.subr.mxu0 0.0
  %2967 = vmatpush1.msra.mxu0 0.0
  %2968 = vmatprep.subr.mxu0 0.0
  %2969 = vmatpush1.msra.mxu0 0.0
  %2970 = vmatprep.subr.mxu0 0.0
  %2971 = vmatpush1.msra.mxu0 0.0
  %2972 = vmatprep.subr.mxu0 0.0
  %2973 = vmatpush1.msra.mxu0 0.0
  %2974 = vmatprep.subr.mxu0 0.0
  %2975 = vmatpush1.msra.mxu0 0.0
  %2976 = vmatprep.subr.mxu0 0.0
  %2977 = vmatpush1.msra.mxu0 0.0
  %2978 = vmatprep.mubr.f32.mxu0 0.0
  %2979 = vmatmul.mubr.f32.gmra.mrb[0].mxu0 %v2912
  %v2980 = vpop.f32.mrb[0].mxu0
  %v2981 = vadd.f32 0.0, %v2980
  %v2982 = vpop.f32.mrb[0].mxu0
  %2983 = vdwg.mxu0
  %vm2984 = vcmask 9216
  %v2985 = vsel %vm2984, %v2981, -inf
  %2986 = vmax.xlane.f32.xlu0 %v2985
  %v2987 = vpop.xlane.xlu0 %2986
  %v2988 = vsub.f32 %v2981, %v2987
  %v2989 = vmul.f32 %v2988, 1.442695
  %v2990 = vpow.pop %v2989
  %v2991 = vsel %vm2984, %v2990, 0.0
  %2992 = vadd.xlane.f32.xlu0 %v2991
  %v2993 = vpop.xlane.xlu0 %2992
  %v2994 = vrcp.pop %v2993
  %v2995 = vmul.f32 %v2990, %v2994
  %vm2996 = vcmask 15360
  %v2997 = vsel %vm2996, %v2995, 0.0
  %2998 = vst.msk [vmem:[%s5] sm:$0xff] %vm65, %v1980
  %2999 = vst.msk [vmem:[%s5 + $0x8] sm:$0xff] %vm65, %v1981
  %vm3000 = vcmask 254976
  %3001 = vst.msk [vmem:[%s5 + $0x10] sm:$0x3] %vm3000, %v2716
  %3002 = vst.msk [vmem:[%s5 + $0x12] sm:$0x3] %vm3000, %v2894
  %3003 = vst.msk [vmem:[%s5 + $0x14] sm:$0x3] %vm3000, %v2997
  %3004 = vst.msk [vmem:[%s5 + $0x16] sm:$0x3] %vm3000, 0.0
  // Predicated region
  $region18: #{tar_gnn_forward.1} parent=0 // pred_check
    _
  $region19: #{tar_gnn_forward.1} parent=0 // pred_check_branch
    %3006 = sbr.rel (0) target = $region21
  $region20: #{tar_gnn_forward.1} parent=0 // pred_region
    _
  $region21: #{tar_gnn_forward.1} parent=0 // pred_fallthru
    _
  // Predicated region
  $region22: #{tar_gnn_forward.1} parent=0 // pred_check
    _
  $region23: #{tar_gnn_forward.1} parent=0 // pred_check_branch
    %3008 = sbr.rel (0) target = $region25
  $region24: #{tar_gnn_forward.1} parent=0 // pred_region
    _
  $region25: #{tar_gnn_forward.1} parent=0 // pred_fallthru
    _

</llo_original>
